<compile_context>
chip_gen: v5e
topology: v5e:2x2
jax: 0.10.0
libtpu: 0.0.40
codegen_flags: <defaults>
</compile_context>

<pallas_src>
import functools

import jax
import jax.numpy as jnp
import numpy as np
from jax.experimental import pallas as pl
from jax.experimental.pallas import tpu as pltpu

LN_EPS = 1e-5
NEG_MAX = float(-jnp.finfo(jnp.float32).max)   # masked_fill value (matches torch)


def _layernorm(t, g, b):
    mu = jnp.mean(t, axis=-1, keepdims=True)
    var = jnp.mean(jnp.square(t - mu), axis=-1, keepdims=True)
    return (t - mu) * jax.lax.rsqrt(var + LN_EPS) * g + b


def _softmax_lastdim(x):
    m = jnp.max(x, axis=-1, keepdims=True)
    e = jnp.exp(x - m)
    return e * pl.reciprocal(jnp.sum(e, axis=-1, keepdims=True), approx=True)


def _gelu_tanh(x):
    # tanh-approximate GELU (EUP tanh); |err| vs exact-erf GELU ~1.5e-3 worst case.
    c0 = 0.7978845608028654   # sqrt(2/pi)
    c1 = 0.044715
    return 0.5 * x * (1.0 + jnp.tanh(c0 * (x + c1 * x * x * x)))


def _joint_block_kernel(heads, dim_head,
                        x_ref, ctx_ref, mkn1_ref, cmk1m_ref, cmkm1_ref, mk1n_ref,
                        gx_ref, bx_ref, gc_ref, bc_ref,
                        wqk_ref, wv_ref, wcqk_ref, wcv_ref,
                        wout_ref, bout_ref, wcout_ref, bcout_ref,
                        ffg_ref, ffb_ref, ffw1_ref, ffb1_ref, ffw2_ref, ffb2_ref,
                        cffg_ref, cffb_ref, cffw1_ref, cffb1_ref, cffw2_ref, cffb2_ref,
                        xo_ref, co_ref,
                        out_buf, cout_buf):
    f32 = jnp.float32
    bf16 = jnp.bfloat16
    scale = dim_head ** -0.5
    Bt, N, D = x_ref.shape
    _, M, Dc = ctx_ref.shape
    inner = heads * dim_head
    rows_x = Bt * N
    rows_c = Bt * M

    # Flatten batch rows so every projection / FF matmul is one tall 2-D matmul.
    x = x_ref[...].reshape(rows_x, D)          # (Bt*N, D)  f32 residual stream
    ctx = ctx_ref[...].reshape(rows_c, Dc)     # (Bt*M, Dc) f32 residual stream

    # --- BidirectionalCrossAttention (prenorm=True, dropout=0, no talking heads)
    # LayerNorm in f32 (VPU); cast to bf16 only at MXU inputs.
    xn = _layernorm(x, gx_ref[...], bx_ref[...]).astype(bf16)
    cn = _layernorm(ctx, gc_ref[...], bc_ref[...]).astype(bf16)

    qk = jnp.dot(xn, wqk_ref[...], preferred_element_type=f32).astype(bf16).reshape(Bt, N, inner)
    v = jnp.dot(xn, wv_ref[...], preferred_element_type=f32).astype(bf16).reshape(Bt, N, inner)
    cqk = jnp.dot(cn, wcqk_ref[...], preferred_element_type=f32).astype(bf16).reshape(Bt, M, inner)
    cv = jnp.dot(cn, wcv_ref[...], preferred_element_type=f32).astype(bf16).reshape(Bt, M, inner)

    # Boolean keep masks in both score orientations (built by broadcast, no transpose).
    keep_nm = (mkn1_ref[...] * cmk1m_ref[...]) > 0.0     # (Bt, N, M)
    keep_mn = (cmkm1_ref[...] * mk1n_ref[...]) > 0.0     # (Bt, M, N)

    # TODO(synk): convert this static head loop into a grid axis / fori_loop to bound
    # live ranges at production head counts (v7x 64 MiB VMEM).
    for h in range(heads):
        lo = h * dim_head
        hi = lo + dim_head
        qk_h, v_h = qk[:, :, lo:hi], v[:, :, lo:hi]          # bf16 (Bt, N, dh)
        cqk_h, cv_h = cqk[:, :, lo:hi], cv[:, :, lo:hi]      # bf16 (Bt, M, dh)

        # x-side scores: softmax over context length (masked_fill, as in reference).
        sim_nm = jnp.einsum('bnd,bmd->bnm', qk_h, cqk_h,
                            preferred_element_type=f32) * scale
        sim_nm = jnp.where(keep_nm, sim_nm, NEG_MAX)
        attn = _softmax_lastdim(sim_nm)                       # (Bt, N, M)

        # ctx-side scores recomputed with swapped operands (no jnp.swapaxes).
        sim_mn = jnp.einsum('bmd,bnd->bmn', cqk_h, qk_h,
                            preferred_element_type=f32) * scale
        sim_mn = jnp.where(keep_mn, sim_mn, NEG_MAX)
        cattn = _softmax_lastdim(sim_mn)                      # (Bt, M, N)

        out_h = jnp.einsum('bnm,bmd->bnd', attn.astype(bf16), cv_h,
                           preferred_element_type=f32)        # (Bt, N, dh)
        cout_h = jnp.einsum('bmn,bnd->bmd', cattn.astype(bf16), v_h,
                            preferred_element_type=f32)       # (Bt, M, dh)

        # Gather per-head outputs at their lane offset; one full-K projection below.
        out_buf[:, lo:hi] = out_h.reshape(rows_x, dim_head)
        cout_buf[:, lo:hi] = cout_h.reshape(rows_c, dim_head)

    attn_out = jnp.dot(out_buf[...].astype(bf16), wout_ref[...],
                       preferred_element_type=f32)
    ctx_attn_out = jnp.dot(cout_buf[...].astype(bf16), wcout_ref[...],
                           preferred_element_type=f32)

    x = x + attn_out + bout_ref[...]
    ctx = ctx + ctx_attn_out + bcout_ref[...]

    # --- FeedForward (LN -> Linear -> GELU -> Linear) + residual  (dropout=0)
    h1 = jnp.dot(_layernorm(x, ffg_ref[...], ffb_ref[...]).astype(bf16), ffw1_ref[...],
                 preferred_element_type=f32) + ffb1_ref[...]
    x = jnp.dot(_gelu_tanh(h1).astype(bf16), ffw2_ref[...],
                preferred_element_type=f32) + ffb2_ref[...] + x

    h2 = jnp.dot(_layernorm(ctx, cffg_ref[...], cffb_ref[...]).astype(bf16), cffw1_ref[...],
                 preferred_element_type=f32) + cffb1_ref[...]
    ctx = jnp.dot(_gelu_tanh(h2).astype(bf16), cffw2_ref[...],
                  preferred_element_type=f32) + cffb2_ref[...] + ctx

    xo_ref[...] = x.reshape(Bt, N, D)
    co_ref[...] = ctx.reshape(Bt, M, Dc)


PARAM_ORDER = ('gx', 'bx', 'gc', 'bc',
               'wqk', 'wv', 'wcqk', 'wcv',
               'wout', 'bout', 'wcout', 'bcout',
               'ffg', 'ffb', 'ffw1', 'ffb1', 'ffw2', 'ffb2',
               'cffg', 'cffb', 'cffw1', 'cffb1', 'cffw2', 'cffb2')

# Pure MXU operands -> stored/fed as bf16.  LN params + biases stay f32 (VPU path).
BF16_WEIGHTS = ('wqk', 'wv', 'wcqk', 'wcv', 'wout', 'wcout',
                'ffw1', 'ffw2', 'cffw1', 'cffw2')


def joint_cross_attention_block(x, context, mask, context_mask, params, *,
                                heads, dim_head, block_b=None):
    B, N, D = x.shape
    _, M, Dc = context.shape
    inner = heads * dim_head
    f32 = jnp.float32

    # Default to >=2 grid steps so DMA pipelines behind compute and the "parallel"
    # batch axis can shard across v7x's two TensorCores.  For throughput, size
    # block_b so block_b*N >= ~256 rows while keeping nb >= 2 when B allows it.
    if block_b is None:
        block_b = B // 2 if (B >= 2 and B % 2 == 0) else B
    assert B % block_b == 0, "block_b must divide the batch size"
    nb = B // block_b

    # Masks in both orientations so the kernel never transposes them.
    mask_n1 = mask.astype(f32).reshape(B, N, 1)
    cmask_1m = context_mask.astype(f32).reshape(B, 1, M)
    cmask_m1 = context_mask.astype(f32).reshape(B, M, 1)
    mask_1n = mask.astype(f32).reshape(B, 1, N)

    params = dict(params)
    for k in BF16_WEIGHTS:
        params[k] = params[k].astype(jnp.bfloat16)
    param_list = [params[k] for k in PARAM_ORDER]

    seq_in_specs = [
        pl.BlockSpec((block_b, N, D), lambda b: (b, 0, 0)),
        pl.BlockSpec((block_b, M, Dc), lambda b: (b, 0, 0)),
        pl.BlockSpec((block_b, N, 1), lambda b: (b, 0, 0)),
        pl.BlockSpec((block_b, 1, M), lambda b: (b, 0, 0)),
        pl.BlockSpec((block_b, M, 1), lambda b: (b, 0, 0)),
        pl.BlockSpec((block_b, 1, N), lambda b: (b, 0, 0)),
    ]

    def param_specs(single_buffered):
        if single_buffered:
            # Grid-invariant params: single-buffer to halve their VMEM footprint.
            return [pl.BlockSpec(p.shape, lambda b: (0, 0),
                                 pipeline_mode=pl.Buffered(1)) for p in param_list]
        return [pl.BlockSpec(p.shape, lambda b: (0, 0)) for p in param_list]

    out_shape = (jax.ShapeDtypeStruct((B, N, D), f32),
                 jax.ShapeDtypeStruct((B, M, Dc), f32))
    out_specs = (pl.BlockSpec((block_b, N, D), lambda b: (b, 0, 0)),
                 pl.BlockSpec((block_b, M, Dc), lambda b: (b, 0, 0)))

    scratch_shapes = [pltpu.VMEM((block_b * N, inner), f32),
                      pltpu.VMEM((block_b * M, inner), f32)]

    # Advisory cost estimate for the whole call (multiply-adds * 2).
    hid = params['ffw1'].shape[1]
    chid = params['cffw1'].shape[1]
    macs = B * (N * D * inner * 2 + M * Dc * inner * 2
                + heads * N * M * dim_head * 4
                + N * inner * D + M * inner * Dc
                + 2 * N * D * hid + 2 * M * Dc * chid)
    cost = pl.CostEstimate(
        flops=int(2 * macs),
        transcendentals=int(B * (2 * heads * N * M + N * hid + M * chid)),
        bytes_accessed=int(8 * (x.size + context.size)
                           + 4 * (mask_n1.size + cmask_1m.size
                                  + cmask_m1.size + mask_1n.size)
                           + nb * sum(int(p.size) * p.dtype.itemsize
                                      for p in param_list)))

    compiler_params = pltpu.CompilerParams(
        dimension_semantics=("parallel",),            # batch tiles are independent
        vmem_limit_bytes=48 * 1024 * 1024)            # headroom under v7x 64 MiB

    kernel = functools.partial(_joint_block_kernel, heads, dim_head)

    def make_call(single_buffered):
        return pl.pallas_call(
            kernel,
            out_shape=out_shape,
            grid=(nb,),
            in_specs=seq_in_specs + param_specs(single_buffered),
            out_specs=out_specs,
            scratch_shapes=scratch_shapes,
            compiler_params=compiler_params,
            cost_estimate=cost,
        )

    args = (x, context, mask_n1, cmask_1m, cmask_m1, mask_1n, *param_list)
    try:
        return make_call(True)(*args)
    except Exception:
        # Fallback if this build rejects pl.Buffered(1) on pallas_call BlockSpecs.
        return make_call(False)(*args)


def init_params(key, dim, context_dim, heads, dim_head, ff_mult):
    inner = heads * dim_head
    hid, chid = dim * ff_mult, context_dim * ff_mult
    ks = iter(jax.random.split(key, 16))

    def w(shape, scale=0.05):
        return jax.random.normal(next(ks), shape, jnp.float32) * scale

    return dict(
        gx=jnp.ones((1, dim), jnp.float32), bx=jnp.zeros((1, dim), jnp.float32),
        gc=jnp.ones((1, context_dim), jnp.float32), bc=jnp.zeros((1, context_dim), jnp.float32),
        wqk=w((dim, inner)), wv=w((dim, inner)),
        wcqk=w((context_dim, inner)), wcv=w((context_dim, inner)),
        wout=w((inner, dim)), bout=w((1, dim), 0.01),
        wcout=w((inner, context_dim)), bcout=w((1, context_dim), 0.01),
        ffg=jnp.ones((1, dim), jnp.float32), ffb=jnp.zeros((1, dim), jnp.float32),
        ffw1=w((dim, hid)), ffb1=w((1, hid), 0.01),
        ffw2=w((hid, dim)), ffb2=w((1, dim), 0.01),
        cffg=jnp.ones((1, context_dim), jnp.float32), cffb=jnp.zeros((1, context_dim), jnp.float32),
        cffw1=w((context_dim, chid)), cffb1=w((1, chid), 0.01),
        cffw2=w((chid, context_dim)), cffb2=w((1, context_dim), 0.01),
    )


def reference_forward(x, context, mask, context_mask, p, *, heads, dim_head):
    """Pure-JAX replica of the PyTorch module (eval mode) for validation."""
    scale = dim_head ** -0.5

    def ln(t, g, b):
        mu = t.mean(-1, keepdims=True)
        var = ((t - mu) ** 2).mean(-1, keepdims=True)
        return (t - mu) / jnp.sqrt(var + LN_EPS) * g + b

    xn = ln(x, p['gx'][0], p['bx'][0])
    cn = ln(context, p['gc'][0], p['bc'][0])

    def split(t):
        b, n, _ = t.shape
        return t.reshape(b, n, heads, dim_head).transpose(0, 2, 1, 3)

    qk, v = split(xn @ p['wqk']), split(xn @ p['wv'])
    cqk, cv = split(cn @ p['wcqk']), split(cn @ p['wcv'])

    sim = jnp.einsum('bhid,bhjd->bhij', qk, cqk) * scale
    am = mask[:, None, :, None] & context_mask[:, None, None, :]
    sim = jnp.where(am, sim, NEG_MAX)

    attn = jax.nn.softmax(sim, axis=-1)
    cattn = jax.nn.softmax(sim, axis=-2)

    out = jnp.einsum('bhij,bhjd->bhid', attn, cv)
    cout = jnp.einsum('bhji,bhjd->bhid', cattn, v)

    def merge(t):
        return t.transpose(0, 2, 1, 3).reshape(t.shape[0], t.shape[2], heads * dim_head)

    x = x + merge(out) @ p['wout'] + p['bout'][0]
    context = context + merge(cout) @ p['wcout'] + p['bcout'][0]

    def ff(t, g, b, w1, b1, w2, b2):
        h = jax.nn.gelu(ln(t, g, b) @ w1 + b1, approximate=False)
        return h @ w2 + b2

    x = ff(x, p['ffg'][0], p['ffb'][0], p['ffw1'], p['ffb1'][0],
           p['ffw2'], p['ffb2'][0]) + x
    context = ff(context, p['cffg'][0], p['cffb'][0], p['cffw1'], p['cffb1'][0],
                 p['cffw2'], p['cffb2'][0]) + context
    return x, context


if __name__ == "__main__":
    B, N, M = 2, 8, 16
    dim, context_dim = 32, 48
    heads, dim_head, ff_mult = 2, 16, 4

    key = jax.random.PRNGKey(0)
    kx, kc, kp = jax.random.split(key, 3)
    x = jax.random.normal(kx, (B, N, dim), jnp.float32)
    context = jax.random.normal(kc, (B, M, context_dim), jnp.float32)

    mask = jnp.ones((B, N), bool).at[1, -2:].set(False)
    context_mask = jnp.ones((B, M), bool).at[0, -3:].set(False)

    params = init_params(kp, dim, context_dim, heads, dim_head, ff_mult)

    x_out, c_out = joint_cross_attention_block(
        x, context, mask, context_mask, params, heads=heads, dim_head=dim_head)
    jax.block_until_ready((x_out, c_out))

    x_ref, c_ref = reference_forward(x, context, mask, context_mask, params,
                                     heads=heads, dim_head=dim_head)
    assert np.allclose(np.asarray(x_out), np.asarray(x_ref), atol=2e-2, rtol=2e-2)
    assert np.allclose(np.asarray(c_out), np.asarray(c_ref), atol=2e-2, rtol=2e-2)
    print("KERNEL_OK")
</pallas_src>

<mosaic_0001>
module attributes {stable_mosaic.version = 11 : i64} {
  func.func @_joint_block_kernel(%arg0: i32, %arg1: memref<1x8x32xf32, #tpu.memory_space<vmem>>, %arg2: memref<1x16x48xf32, #tpu.memory_space<vmem>>, %arg3: memref<1x8x1xf32, #tpu.memory_space<vmem>>, %arg4: memref<1x1x16xf32, #tpu.memory_space<vmem>>, %arg5: memref<1x16x1xf32, #tpu.memory_space<vmem>>, %arg6: memref<1x1x8xf32, #tpu.memory_space<vmem>>, %arg7: memref<1x32xf32, #tpu.memory_space<vmem>>, %arg8: memref<1x32xf32, #tpu.memory_space<vmem>>, %arg9: memref<1x48xf32, #tpu.memory_space<vmem>>, %arg10: memref<1x48xf32, #tpu.memory_space<vmem>>, %arg11: memref<32x32xbf16, #tpu.memory_space<vmem>>, %arg12: memref<32x32xbf16, #tpu.memory_space<vmem>>, %arg13: memref<48x32xbf16, #tpu.memory_space<vmem>>, %arg14: memref<48x32xbf16, #tpu.memory_space<vmem>>, %arg15: memref<32x32xbf16, #tpu.memory_space<vmem>>, %arg16: memref<1x32xf32, #tpu.memory_space<vmem>>, %arg17: memref<32x48xbf16, #tpu.memory_space<vmem>>, %arg18: memref<1x48xf32, #tpu.memory_space<vmem>>, %arg19: memref<1x32xf32, #tpu.memory_space<vmem>>, %arg20: memref<1x32xf32, #tpu.memory_space<vmem>>, %arg21: memref<32x128xbf16, #tpu.memory_space<vmem>>, %arg22: memref<1x128xf32, #tpu.memory_space<vmem>>, %arg23: memref<128x32xbf16, #tpu.memory_space<vmem>>, %arg24: memref<1x32xf32, #tpu.memory_space<vmem>>, %arg25: memref<1x48xf32, #tpu.memory_space<vmem>>, %arg26: memref<1x48xf32, #tpu.memory_space<vmem>>, %arg27: memref<48x192xbf16, #tpu.memory_space<vmem>>, %arg28: memref<1x192xf32, #tpu.memory_space<vmem>>, %arg29: memref<192x48xbf16, #tpu.memory_space<vmem>>, %arg30: memref<1x48xf32, #tpu.memory_space<vmem>>, %arg31: memref<1x8x32xf32, #tpu.memory_space<vmem>>, %arg32: memref<1x16x48xf32, #tpu.memory_space<vmem>>, %arg33: memref<8x32xf32, #tpu.memory_space<vmem>>, %arg34: memref<16x32xf32, #tpu.memory_space<vmem>>) attributes {dimension_semantics = [#tpu.dimension_semantics<parallel>], iteration_bounds = array<i64: 2>, scalar_prefetch = 0 : i64, scratch_operands = 2 : i64, tpu.core_type = #tpu.core_type<tc>, window_params = [{transform_indices = @transform_0, window_bounds = array<i64: 1, 8, 32>}, {transform_indices = @transform_1, window_bounds = array<i64: 1, 16, 48>}, {transform_indices = @transform_2, window_bounds = array<i64: 1, 8, 1>}, {transform_indices = @transform_3, window_bounds = array<i64: 1, 1, 16>}, {transform_indices = @transform_4, window_bounds = array<i64: 1, 16, 1>}, {transform_indices = @transform_5, window_bounds = array<i64: 1, 1, 8>}, {pipeline_mode = #tpu.pipeline_mode<synchronous>, transform_indices = @transform_6, window_bounds = array<i64: 1, 32>}, {pipeline_mode = #tpu.pipeline_mode<synchronous>, transform_indices = @transform_7, window_bounds = array<i64: 1, 32>}, {pipeline_mode = #tpu.pipeline_mode<synchronous>, transform_indices = @transform_8, window_bounds = array<i64: 1, 48>}, {pipeline_mode = #tpu.pipeline_mode<synchronous>, transform_indices = @transform_9, window_bounds = array<i64: 1, 48>}, {pipeline_mode = #tpu.pipeline_mode<synchronous>, transform_indices = @transform_10, window_bounds = array<i64: 32, 32>}, {pipeline_mode = #tpu.pipeline_mode<synchronous>, transform_indices = @transform_11, window_bounds = array<i64: 32, 32>}, {pipeline_mode = #tpu.pipeline_mode<synchronous>, transform_indices = @transform_12, window_bounds = array<i64: 48, 32>}, {pipeline_mode = #tpu.pipeline_mode<synchronous>, transform_indices = @transform_13, window_bounds = array<i64: 48, 32>}, {pipeline_mode = #tpu.pipeline_mode<synchronous>, transform_indices = @transform_14, window_bounds = array<i64: 32, 32>}, {pipeline_mode = #tpu.pipeline_mode<synchronous>, transform_indices = @transform_15, window_bounds = array<i64: 1, 32>}, {pipeline_mode = #tpu.pipeline_mode<synchronous>, transform_indices = @transform_16, window_bounds = array<i64: 32, 48>}, {pipeline_mode = #tpu.pipeline_mode<synchronous>, transform_indices = @transform_17, window_bounds = array<i64: 1, 48>}, {pipeline_mode = #tpu.pipeline_mode<synchronous>, transform_indices = @transform_18, window_bounds = array<i64: 1, 32>}, {pipeline_mode = #tpu.pipeline_mode<synchronous>, transform_indices = @transform_19, window_bounds = array<i64: 1, 32>}, {pipeline_mode = #tpu.pipeline_mode<synchronous>, transform_indices = @transform_20, window_bounds = array<i64: 32, 128>}, {pipeline_mode = #tpu.pipeline_mode<synchronous>, transform_indices = @transform_21, window_bounds = array<i64: 1, 128>}, {pipeline_mode = #tpu.pipeline_mode<synchronous>, transform_indices = @transform_22, window_bounds = array<i64: 128, 32>}, {pipeline_mode = #tpu.pipeline_mode<synchronous>, transform_indices = @transform_23, window_bounds = array<i64: 1, 32>}, {pipeline_mode = #tpu.pipeline_mode<synchronous>, transform_indices = @transform_24, window_bounds = array<i64: 1, 48>}, {pipeline_mode = #tpu.pipeline_mode<synchronous>, transform_indices = @transform_25, window_bounds = array<i64: 1, 48>}, {pipeline_mode = #tpu.pipeline_mode<synchronous>, transform_indices = @transform_26, window_bounds = array<i64: 48, 192>}, {pipeline_mode = #tpu.pipeline_mode<synchronous>, transform_indices = @transform_27, window_bounds = array<i64: 1, 192>}, {pipeline_mode = #tpu.pipeline_mode<synchronous>, transform_indices = @transform_28, window_bounds = array<i64: 192, 48>}, {pipeline_mode = #tpu.pipeline_mode<synchronous>, transform_indices = @transform_29, window_bounds = array<i64: 1, 48>}, {transform_indices = @transform_30, window_bounds = array<i64: 1, 8, 32>}, {transform_indices = @transform_31, window_bounds = array<i64: 1, 16, 48>}]} {
    %c0 = arith.constant 0 : index
    %c0_0 = arith.constant 0 : index
    %c0_1 = arith.constant 0 : index
    %0 = vector.load %arg1[%c0, %c0_0, %c0_1] : memref<1x8x32xf32, #tpu.memory_space<vmem>>, vector<1x8x32xf32>
    %1 = vector.shape_cast %0 : vector<1x8x32xf32> to vector<8x32xf32>
    %c0_2 = arith.constant 0 : index
    %c0_3 = arith.constant 0 : index
    %c0_4 = arith.constant 0 : index
    %2 = vector.load %arg2[%c0_2, %c0_3, %c0_4] : memref<1x16x48xf32, #tpu.memory_space<vmem>>, vector<1x16x48xf32>
    %3 = vector.shape_cast %2 : vector<1x16x48xf32> to vector<16x48xf32>
    %c0_5 = arith.constant 0 : index
    %c0_6 = arith.constant 0 : index
    %4 = vector.load %arg7[%c0_5, %c0_6] : memref<1x32xf32, #tpu.memory_space<vmem>>, vector<1x32xf32>
    %c0_7 = arith.constant 0 : index
    %c0_8 = arith.constant 0 : index
    %5 = vector.load %arg8[%c0_7, %c0_8] : memref<1x32xf32, #tpu.memory_space<vmem>>, vector<1x32xf32>
    %cst = arith.constant dense<0.000000e+00> : vector<8xf32>
    %6 = vector.multi_reduction <add>, %1, %cst [1] : vector<8x32xf32> to vector<8xf32>
    %7 = vector.shape_cast %6 : vector<8xf32> to vector<8x1xf32>
    %cst_9 = arith.constant 3.200000e+01 : f32
    %8 = vector.broadcast %cst_9 : f32 to vector<8x1xf32>
    %9 = arith.divf %7, %8 : vector<8x1xf32>
    %10 = vector.broadcast %9 : vector<8x1xf32> to vector<8x32xf32>
    %11 = arith.subf %1, %10 : vector<8x32xf32>
    %12 = arith.mulf %11, %11 : vector<8x32xf32>
    %cst_10 = arith.constant dense<0.000000e+00> : vector<8xf32>
    %13 = vector.multi_reduction <add>, %12, %cst_10 [1] : vector<8x32xf32> to vector<8xf32>
    %14 = vector.shape_cast %13 : vector<8xf32> to vector<8x1xf32>
    %cst_11 = arith.constant 3.200000e+01 : f32
    %15 = vector.broadcast %cst_11 : f32 to vector<8x1xf32>
    %16 = arith.divf %14, %15 : vector<8x1xf32>
    %17 = vector.broadcast %9 : vector<8x1xf32> to vector<8x32xf32>
    %18 = arith.subf %1, %17 : vector<8x32xf32>
    %cst_12 = arith.constant 9.99999974E-6 : f32
    %19 = vector.broadcast %cst_12 : f32 to vector<8x1xf32>
    %20 = arith.addf %16, %19 : vector<8x1xf32>
    %21 = math.rsqrt %20 : vector<8x1xf32>
    %22 = vector.broadcast %21 : vector<8x1xf32> to vector<8x32xf32>
    %23 = arith.mulf %18, %22 : vector<8x32xf32>
    %24 = vector.broadcast %4 : vector<1x32xf32> to vector<8x32xf32>
    %25 = arith.mulf %23, %24 : vector<8x32xf32>
    %26 = vector.broadcast %5 : vector<1x32xf32> to vector<8x32xf32>
    %27 = arith.addf %25, %26 : vector<8x32xf32>
    %28 = arith.truncf %27 : vector<8x32xf32> to vector<8x32xbf16>
    %c0_13 = arith.constant 0 : index
    %c0_14 = arith.constant 0 : index
    %29 = vector.load %arg9[%c0_13, %c0_14] : memref<1x48xf32, #tpu.memory_space<vmem>>, vector<1x48xf32>
    %c0_15 = arith.constant 0 : index
    %c0_16 = arith.constant 0 : index
    %30 = vector.load %arg10[%c0_15, %c0_16] : memref<1x48xf32, #tpu.memory_space<vmem>>, vector<1x48xf32>
    %cst_17 = arith.constant dense<0.000000e+00> : vector<16xf32>
    %31 = vector.multi_reduction <add>, %3, %cst_17 [1] : vector<16x48xf32> to vector<16xf32>
    %32 = vector.shape_cast %31 : vector<16xf32> to vector<16x1xf32>
    %cst_18 = arith.constant 4.800000e+01 : f32
    %33 = vector.broadcast %cst_18 : f32 to vector<16x1xf32>
    %34 = arith.divf %32, %33 : vector<16x1xf32>
    %35 = vector.broadcast %34 : vector<16x1xf32> to vector<16x48xf32>
    %36 = arith.subf %3, %35 : vector<16x48xf32>
    %37 = arith.mulf %36, %36 : vector<16x48xf32>
    %cst_19 = arith.constant dense<0.000000e+00> : vector<16xf32>
    %38 = vector.multi_reduction <add>, %37, %cst_19 [1] : vector<16x48xf32> to vector<16xf32>
    %39 = vector.shape_cast %38 : vector<16xf32> to vector<16x1xf32>
    %cst_20 = arith.constant 4.800000e+01 : f32
    %40 = vector.broadcast %cst_20 : f32 to vector<16x1xf32>
    %41 = arith.divf %39, %40 : vector<16x1xf32>
    %42 = vector.broadcast %34 : vector<16x1xf32> to vector<16x48xf32>
    %43 = arith.subf %3, %42 : vector<16x48xf32>
    %cst_21 = arith.constant 9.99999974E-6 : f32
    %44 = vector.broadcast %cst_21 : f32 to vector<16x1xf32>
    %45 = arith.addf %41, %44 : vector<16x1xf32>
    %46 = math.rsqrt %45 : vector<16x1xf32>
    %47 = vector.broadcast %46 : vector<16x1xf32> to vector<16x48xf32>
    %48 = arith.mulf %43, %47 : vector<16x48xf32>
    %49 = vector.broadcast %29 : vector<1x48xf32> to vector<16x48xf32>
    %50 = arith.mulf %48, %49 : vector<16x48xf32>
    %51 = vector.broadcast %30 : vector<1x48xf32> to vector<16x48xf32>
    %52 = arith.addf %50, %51 : vector<16x48xf32>
    %53 = arith.truncf %52 : vector<16x48xf32> to vector<16x48xbf16>
    %c0_22 = arith.constant 0 : index
    %c0_23 = arith.constant 0 : index
    %54 = vector.load %arg11[%c0_22, %c0_23] : memref<32x32xbf16, #tpu.memory_space<vmem>>, vector<32x32xbf16>
    %cst_24 = arith.constant dense<0.000000e+00> : vector<8x32xf32>
    %55 = tpu.matmul %28, %54, %cst_24 {dimension_numbers = #tpu.dot_dimension_numbers<[1], [0], [0], [1], [0, 0, 1, 1], [], []>} : vector<8x32xbf16>, vector<32x32xbf16>, vector<8x32xf32> -> vector<8x32xf32>
    %56 = arith.truncf %55 : vector<8x32xf32> to vector<8x32xbf16>
    %57 = vector.shape_cast %56 : vector<8x32xbf16> to vector<1x8x32xbf16>
    %c0_25 = arith.constant 0 : index
    %c0_26 = arith.constant 0 : index
    %58 = vector.load %arg12[%c0_25, %c0_26] : memref<32x32xbf16, #tpu.memory_space<vmem>>, vector<32x32xbf16>
    %cst_27 = arith.constant dense<0.000000e+00> : vector<8x32xf32>
    %59 = tpu.matmul %28, %58, %cst_27 {dimension_numbers = #tpu.dot_dimension_numbers<[1], [0], [0], [1], [0, 0, 1, 1], [], []>} : vector<8x32xbf16>, vector<32x32xbf16>, vector<8x32xf32> -> vector<8x32xf32>
    %60 = arith.truncf %59 : vector<8x32xf32> to vector<8x32xbf16>
    %61 = vector.shape_cast %60 : vector<8x32xbf16> to vector<1x8x32xbf16>
    %c0_28 = arith.constant 0 : index
    %c0_29 = arith.constant 0 : index
    %62 = vector.load %arg13[%c0_28, %c0_29] : memref<48x32xbf16, #tpu.memory_space<vmem>>, vector<48x32xbf16>
    %cst_30 = arith.constant dense<0.000000e+00> : vector<16x32xf32>
    %63 = tpu.matmul %53, %62, %cst_30 {dimension_numbers = #tpu.dot_dimension_numbers<[1], [0], [0], [1], [0, 0, 1, 1], [], []>} : vector<16x48xbf16>, vector<48x32xbf16>, vector<16x32xf32> -> vector<16x32xf32>
    %64 = arith.truncf %63 : vector<16x32xf32> to vector<16x32xbf16>
    %65 = vector.shape_cast %64 : vector<16x32xbf16> to vector<1x16x32xbf16>
    %c0_31 = arith.constant 0 : index
    %c0_32 = arith.constant 0 : index
    %66 = vector.load %arg14[%c0_31, %c0_32] : memref<48x32xbf16, #tpu.memory_space<vmem>>, vector<48x32xbf16>
    %cst_33 = arith.constant dense<0.000000e+00> : vector<16x32xf32>
    %67 = tpu.matmul %53, %66, %cst_33 {dimension_numbers = #tpu.dot_dimension_numbers<[1], [0], [0], [1], [0, 0, 1, 1], [], []>} : vector<16x48xbf16>, vector<48x32xbf16>, vector<16x32xf32> -> vector<16x32xf32>
    %68 = arith.truncf %67 : vector<16x32xf32> to vector<16x32xbf16>
    %69 = vector.shape_cast %68 : vector<16x32xbf16> to vector<1x16x32xbf16>
    %c0_34 = arith.constant 0 : index
    %c0_35 = arith.constant 0 : index
    %c0_36 = arith.constant 0 : index
    %70 = vector.load %arg3[%c0_34, %c0_35, %c0_36] : memref<1x8x1xf32, #tpu.memory_space<vmem>>, vector<1x8x1xf32>
    %c0_37 = arith.constant 0 : index
    %c0_38 = arith.constant 0 : index
    %c0_39 = arith.constant 0 : index
    %71 = vector.load %arg4[%c0_37, %c0_38, %c0_39] : memref<1x1x16xf32, #tpu.memory_space<vmem>>, vector<1x1x16xf32>
    %72 = vector.broadcast %70 : vector<1x8x1xf32> to vector<1x8x16xf32>
    %73 = vector.broadcast %71 : vector<1x1x16xf32> to vector<1x8x16xf32>
    %74 = arith.mulf %72, %73 : vector<1x8x16xf32>
    %cst_40 = arith.constant 0.000000e+00 : f32
    %75 = vector.broadcast %cst_40 : f32 to vector<1x8x16xf32>
    %76 = arith.cmpf ogt, %74, %75 : vector<1x8x16xf32>
    %c0_41 = arith.constant 0 : index
    %c0_42 = arith.constant 0 : index
    %c0_43 = arith.constant 0 : index
    %77 = vector.load %arg5[%c0_41, %c0_42, %c0_43] : memref<1x16x1xf32, #tpu.memory_space<vmem>>, vector<1x16x1xf32>
    %c0_44 = arith.constant 0 : index
    %c0_45 = arith.constant 0 : index
    %c0_46 = arith.constant 0 : index
    %78 = vector.load %arg6[%c0_44, %c0_45, %c0_46] : memref<1x1x8xf32, #tpu.memory_space<vmem>>, vector<1x1x8xf32>
    %79 = vector.broadcast %77 : vector<1x16x1xf32> to vector<1x16x8xf32>
    %80 = vector.broadcast %78 : vector<1x1x8xf32> to vector<1x16x8xf32>
    %81 = arith.mulf %79, %80 : vector<1x16x8xf32>
    %cst_47 = arith.constant 0.000000e+00 : f32
    %82 = vector.broadcast %cst_47 : f32 to vector<1x16x8xf32>
    %83 = arith.cmpf ogt, %81, %82 : vector<1x16x8xf32>
    %84 = vector.extract_strided_slice %57 {offsets = [0, 0, 0], sizes = [1, 8, 16], strides = [1, 1, 1]} : vector<1x8x32xbf16> to vector<1x8x16xbf16>
    %85 = vector.extract_strided_slice %61 {offsets = [0, 0, 0], sizes = [1, 8, 16], strides = [1, 1, 1]} : vector<1x8x32xbf16> to vector<1x8x16xbf16>
    %86 = vector.extract_strided_slice %65 {offsets = [0, 0, 0], sizes = [1, 16, 16], strides = [1, 1, 1]} : vector<1x16x32xbf16> to vector<1x16x16xbf16>
    %87 = vector.extract_strided_slice %69 {offsets = [0, 0, 0], sizes = [1, 16, 16], strides = [1, 1, 1]} : vector<1x16x32xbf16> to vector<1x16x16xbf16>
    "tpu.trace_start"() <{level = 10 : i32, message = "bnd,bmd->bnm"}> : () -> ()
    %cst_48 = arith.constant dense<0.000000e+00> : vector<1x8x16xf32>
    %88 = tpu.matmul %84, %86, %cst_48 {dimension_numbers = #tpu.dot_dimension_numbers<[2], [2], [1], [1], [0, 0, 0, 1, 1, 1], [0], [0]>} : vector<1x8x16xbf16>, vector<1x16x16xbf16>, vector<1x8x16xf32> -> vector<1x8x16xf32>
    "tpu.trace_stop"() : () -> ()
    %cst_49 = arith.constant 2.500000e-01 : f32
    %89 = vector.broadcast %cst_49 : f32 to vector<1x8x16xf32>
    %90 = arith.mulf %88, %89 : vector<1x8x16xf32>
    %cst_50 = arith.constant -3.40282347E+38 : f32
    %91 = vector.broadcast %cst_50 : f32 to vector<1x8x16xf32>
    %92 = arith.select %76, %90, %91 : vector<1x8x16xi1>, vector<1x8x16xf32>
    %cst_51 = arith.constant dense<0xFF800000> : vector<1x8xf32>
    %93 = vector.multi_reduction <maximumf>, %92, %cst_51 [2] : vector<1x8x16xf32> to vector<1x8xf32>
    %94 = vector.shape_cast %93 : vector<1x8xf32> to vector<1x8x1xf32>
    %95 = vector.broadcast %94 : vector<1x8x1xf32> to vector<1x8x16xf32>
    %96 = arith.subf %92, %95 : vector<1x8x16xf32>
    %97 = math.exp %96 : vector<1x8x16xf32>
    %cst_52 = arith.constant dense<0.000000e+00> : vector<1x8xf32>
    %98 = vector.multi_reduction <add>, %97, %cst_52 [2] : vector<1x8x16xf32> to vector<1x8xf32>
    %99 = vector.shape_cast %98 : vector<1x8xf32> to vector<1x8x1xf32>
    %100 = tpu.reciprocal %99 {approx = true} : vector<1x8x1xf32> -> vector<1x8x1xf32>
    %101 = vector.broadcast %100 : vector<1x8x1xf32> to vector<1x8x16xf32>
    %102 = arith.mulf %97, %101 : vector<1x8x16xf32>
    "tpu.trace_start"() <{level = 10 : i32, message = "bmd,bnd->bmn"}> : () -> ()
    %cst_53 = arith.constant dense<0.000000e+00> : vector<1x16x8xf32>
    %103 = tpu.matmul %86, %84, %cst_53 {dimension_numbers = #tpu.dot_dimension_numbers<[2], [2], [1], [1], [0, 0, 0, 1, 1, 1], [0], [0]>} : vector<1x16x16xbf16>, vector<1x8x16xbf16>, vector<1x16x8xf32> -> vector<1x16x8xf32>
    "tpu.trace_stop"() : () -> ()
    %cst_54 = arith.constant 2.500000e-01 : f32
    %104 = vector.broadcast %cst_54 : f32 to vector<1x16x8xf32>
    %105 = arith.mulf %103, %104 : vector<1x16x8xf32>
    %cst_55 = arith.constant -3.40282347E+38 : f32
    %106 = vector.broadcast %cst_55 : f32 to vector<1x16x8xf32>
    %107 = arith.select %83, %105, %106 : vector<1x16x8xi1>, vector<1x16x8xf32>
    %cst_56 = arith.constant dense<0xFF800000> : vector<1x16xf32>
    %108 = vector.multi_reduction <maximumf>, %107, %cst_56 [2] : vector<1x16x8xf32> to vector<1x16xf32>
    %109 = vector.shape_cast %108 : vector<1x16xf32> to vector<1x16x1xf32>
    %110 = vector.broadcast %109 : vector<1x16x1xf32> to vector<1x16x8xf32>
    %111 = arith.subf %107, %110 : vector<1x16x8xf32>
    %112 = math.exp %111 : vector<1x16x8xf32>
    %cst_57 = arith.constant dense<0.000000e+00> : vector<1x16xf32>
    %113 = vector.multi_reduction <add>, %112, %cst_57 [2] : vector<1x16x8xf32> to vector<1x16xf32>
    %114 = vector.shape_cast %113 : vector<1x16xf32> to vector<1x16x1xf32>
    %115 = tpu.reciprocal %114 {approx = true} : vector<1x16x1xf32> -> vector<1x16x1xf32>
    %116 = vector.broadcast %115 : vector<1x16x1xf32> to vector<1x16x8xf32>
    %117 = arith.mulf %112, %116 : vector<1x16x8xf32>
    %118 = arith.truncf %102 : vector<1x8x16xf32> to vector<1x8x16xbf16>
    "tpu.trace_start"() <{level = 10 : i32, message = "bnm,bmd->bnd"}> : () -> ()
    %cst_58 = arith.constant dense<0.000000e+00> : vector<1x8x16xf32>
    %119 = tpu.matmul %118, %87, %cst_58 {dimension_numbers = #tpu.dot_dimension_numbers<[2], [1], [1], [2], [0, 0, 0, 1, 1, 2], [0], [0]>} : vector<1x8x16xbf16>, vector<1x16x16xbf16>, vector<1x8x16xf32> -> vector<1x8x16xf32>
    "tpu.trace_stop"() : () -> ()
    %120 = arith.truncf %117 : vector<1x16x8xf32> to vector<1x16x8xbf16>
    "tpu.trace_start"() <{level = 10 : i32, message = "bmn,bnd->bmd"}> : () -> ()
    %cst_59 = arith.constant dense<0.000000e+00> : vector<1x16x16xf32>
    %121 = tpu.matmul %120, %85, %cst_59 {dimension_numbers = #tpu.dot_dimension_numbers<[2], [1], [1], [2], [0, 0, 0, 1, 1, 2], [0], [0]>} : vector<1x16x8xbf16>, vector<1x8x16xbf16>, vector<1x16x16xf32> -> vector<1x16x16xf32>
    "tpu.trace_stop"() : () -> ()
    %122 = vector.shape_cast %119 : vector<1x8x16xf32> to vector<8x16xf32>
    %c0_60 = arith.constant 0 : index
    %c0_61 = arith.constant 0 : index
    %123 = vector.load %arg33[%c0_60, %c0_61] : memref<8x32xf32, #tpu.memory_space<vmem>>, vector<8x16xf32>
    tpu.vector_store %arg33[%c0_60, %c0_61], %122 {strides = array<i32>} : memref<8x32xf32, #tpu.memory_space<vmem>>, vector<8x16xf32>,
    %124 = vector.shape_cast %121 : vector<1x16x16xf32> to vector<16x16xf32>
    %c0_62 = arith.constant 0 : index
    %c0_63 = arith.constant 0 : index
    %125 = vector.load %arg34[%c0_62, %c0_63] : memref<16x32xf32, #tpu.memory_space<vmem>>, vector<16x16xf32>
    tpu.vector_store %arg34[%c0_62, %c0_63], %124 {strides = array<i32>} : memref<16x32xf32, #tpu.memory_space<vmem>>, vector<16x16xf32>,
    %126 = vector.extract_strided_slice %57 {offsets = [0, 0, 16], sizes = [1, 8, 16], strides = [1, 1, 1]} : vector<1x8x32xbf16> to vector<1x8x16xbf16>
    %127 = vector.extract_strided_slice %61 {offsets = [0, 0, 16], sizes = [1, 8, 16], strides = [1, 1, 1]} : vector<1x8x32xbf16> to vector<1x8x16xbf16>
    %128 = vector.extract_strided_slice %65 {offsets = [0, 0, 16], sizes = [1, 16, 16], strides = [1, 1, 1]} : vector<1x16x32xbf16> to vector<1x16x16xbf16>
    %129 = vector.extract_strided_slice %69 {offsets = [0, 0, 16], sizes = [1, 16, 16], strides = [1, 1, 1]} : vector<1x16x32xbf16> to vector<1x16x16xbf16>
    "tpu.trace_start"() <{level = 10 : i32, message = "bnd,bmd->bnm"}> : () -> ()
    %cst_64 = arith.constant dense<0.000000e+00> : vector<1x8x16xf32>
    %130 = tpu.matmul %126, %128, %cst_64 {dimension_numbers = #tpu.dot_dimension_numbers<[2], [2], [1], [1], [0, 0, 0, 1, 1, 1], [0], [0]>} : vector<1x8x16xbf16>, vector<1x16x16xbf16>, vector<1x8x16xf32> -> vector<1x8x16xf32>
    "tpu.trace_stop"() : () -> ()
    %cst_65 = arith.constant 2.500000e-01 : f32
    %131 = vector.broadcast %cst_65 : f32 to vector<1x8x16xf32>
    %132 = arith.mulf %130, %131 : vector<1x8x16xf32>
    %cst_66 = arith.constant -3.40282347E+38 : f32
    %133 = vector.broadcast %cst_66 : f32 to vector<1x8x16xf32>
    %134 = arith.select %76, %132, %133 : vector<1x8x16xi1>, vector<1x8x16xf32>
    %cst_67 = arith.constant dense<0xFF800000> : vector<1x8xf32>
    %135 = vector.multi_reduction <maximumf>, %134, %cst_67 [2] : vector<1x8x16xf32> to vector<1x8xf32>
    %136 = vector.shape_cast %135 : vector<1x8xf32> to vector<1x8x1xf32>
    %137 = vector.broadcast %136 : vector<1x8x1xf32> to vector<1x8x16xf32>
    %138 = arith.subf %134, %137 : vector<1x8x16xf32>
    %139 = math.exp %138 : vector<1x8x16xf32>
    %cst_68 = arith.constant dense<0.000000e+00> : vector<1x8xf32>
    %140 = vector.multi_reduction <add>, %139, %cst_68 [2] : vector<1x8x16xf32> to vector<1x8xf32>
    %141 = vector.shape_cast %140 : vector<1x8xf32> to vector<1x8x1xf32>
    %142 = tpu.reciprocal %141 {approx = true} : vector<1x8x1xf32> -> vector<1x8x1xf32>
    %143 = vector.broadcast %142 : vector<1x8x1xf32> to vector<1x8x16xf32>
    %144 = arith.mulf %139, %143 : vector<1x8x16xf32>
    "tpu.trace_start"() <{level = 10 : i32, message = "bmd,bnd->bmn"}> : () -> ()
    %cst_69 = arith.constant dense<0.000000e+00> : vector<1x16x8xf32>
    %145 = tpu.matmul %128, %126, %cst_69 {dimension_numbers = #tpu.dot_dimension_numbers<[2], [2], [1], [1], [0, 0, 0, 1, 1, 1], [0], [0]>} : vector<1x16x16xbf16>, vector<1x8x16xbf16>, vector<1x16x8xf32> -> vector<1x16x8xf32>
    "tpu.trace_stop"() : () -> ()
    %cst_70 = arith.constant 2.500000e-01 : f32
    %146 = vector.broadcast %cst_70 : f32 to vector<1x16x8xf32>
    %147 = arith.mulf %145, %146 : vector<1x16x8xf32>
    %cst_71 = arith.constant -3.40282347E+38 : f32
    %148 = vector.broadcast %cst_71 : f32 to vector<1x16x8xf32>
    %149 = arith.select %83, %147, %148 : vector<1x16x8xi1>, vector<1x16x8xf32>
    %cst_72 = arith.constant dense<0xFF800000> : vector<1x16xf32>
    %150 = vector.multi_reduction <maximumf>, %149, %cst_72 [2] : vector<1x16x8xf32> to vector<1x16xf32>
    %151 = vector.shape_cast %150 : vector<1x16xf32> to vector<1x16x1xf32>
    %152 = vector.broadcast %151 : vector<1x16x1xf32> to vector<1x16x8xf32>
    %153 = arith.subf %149, %152 : vector<1x16x8xf32>
    %154 = math.exp %153 : vector<1x16x8xf32>
    %cst_73 = arith.constant dense<0.000000e+00> : vector<1x16xf32>
    %155 = vector.multi_reduction <add>, %154, %cst_73 [2] : vector<1x16x8xf32> to vector<1x16xf32>
    %156 = vector.shape_cast %155 : vector<1x16xf32> to vector<1x16x1xf32>
    %157 = tpu.reciprocal %156 {approx = true} : vector<1x16x1xf32> -> vector<1x16x1xf32>
    %158 = vector.broadcast %157 : vector<1x16x1xf32> to vector<1x16x8xf32>
    %159 = arith.mulf %154, %158 : vector<1x16x8xf32>
    %160 = arith.truncf %144 : vector<1x8x16xf32> to vector<1x8x16xbf16>
    "tpu.trace_start"() <{level = 10 : i32, message = "bnm,bmd->bnd"}> : () -> ()
    %cst_74 = arith.constant dense<0.000000e+00> : vector<1x8x16xf32>
    %161 = tpu.matmul %160, %129, %cst_74 {dimension_numbers = #tpu.dot_dimension_numbers<[2], [1], [1], [2], [0, 0, 0, 1, 1, 2], [0], [0]>} : vector<1x8x16xbf16>, vector<1x16x16xbf16>, vector<1x8x16xf32> -> vector<1x8x16xf32>
    "tpu.trace_stop"() : () -> ()
    %162 = arith.truncf %159 : vector<1x16x8xf32> to vector<1x16x8xbf16>
    "tpu.trace_start"() <{level = 10 : i32, message = "bmn,bnd->bmd"}> : () -> ()
    %cst_75 = arith.constant dense<0.000000e+00> : vector<1x16x16xf32>
    %163 = tpu.matmul %162, %127, %cst_75 {dimension_numbers = #tpu.dot_dimension_numbers<[2], [1], [1], [2], [0, 0, 0, 1, 1, 2], [0], [0]>} : vector<1x16x8xbf16>, vector<1x8x16xbf16>, vector<1x16x16xf32> -> vector<1x16x16xf32>
    "tpu.trace_stop"() : () -> ()
    %164 = vector.shape_cast %161 : vector<1x8x16xf32> to vector<8x16xf32>
    %c0_76 = arith.constant 0 : index
    %c16 = arith.constant 16 : index
    %165 = vector.load %arg33[%c0_76, %c16] : memref<8x32xf32, #tpu.memory_space<vmem>>, vector<8x16xf32>
    tpu.vector_store %arg33[%c0_76, %c16], %164 {strides = array<i32>} : memref<8x32xf32, #tpu.memory_space<vmem>>, vector<8x16xf32>,
    %166 = vector.shape_cast %163 : vector<1x16x16xf32> to vector<16x16xf32>
    %c0_77 = arith.constant 0 : index
    %c16_78 = arith.constant 16 : index
    %167 = vector.load %arg34[%c0_77, %c16_78] : memref<16x32xf32, #tpu.memory_space<vmem>>, vector<16x16xf32>
    tpu.vector_store %arg34[%c0_77, %c16_78], %166 {strides = array<i32>} : memref<16x32xf32, #tpu.memory_space<vmem>>, vector<16x16xf32>,
    %c0_79 = arith.constant 0 : index
    %c0_80 = arith.constant 0 : index
    %168 = vector.load %arg33[%c0_79, %c0_80] : memref<8x32xf32, #tpu.memory_space<vmem>>, vector<8x32xf32>
    %169 = arith.truncf %168 : vector<8x32xf32> to vector<8x32xbf16>
    %c0_81 = arith.constant 0 : index
    %c0_82 = arith.constant 0 : index
    %170 = vector.load %arg15[%c0_81, %c0_82] : memref<32x32xbf16, #tpu.memory_space<vmem>>, vector<32x32xbf16>
    %cst_83 = arith.constant dense<0.000000e+00> : vector<8x32xf32>
    %171 = tpu.matmul %169, %170, %cst_83 {dimension_numbers = #tpu.dot_dimension_numbers<[1], [0], [0], [1], [0, 0, 1, 1], [], []>} : vector<8x32xbf16>, vector<32x32xbf16>, vector<8x32xf32> -> vector<8x32xf32>
    %c0_84 = arith.constant 0 : index
    %c0_85 = arith.constant 0 : index
    %172 = vector.load %arg34[%c0_84, %c0_85] : memref<16x32xf32, #tpu.memory_space<vmem>>, vector<16x32xf32>
    %173 = arith.truncf %172 : vector<16x32xf32> to vector<16x32xbf16>
    %c0_86 = arith.constant 0 : index
    %c0_87 = arith.constant 0 : index
    %174 = vector.load %arg17[%c0_86, %c0_87] : memref<32x48xbf16, #tpu.memory_space<vmem>>, vector<32x48xbf16>
    %cst_88 = arith.constant dense<0.000000e+00> : vector<16x48xf32>
    %175 = tpu.matmul %173, %174, %cst_88 {dimension_numbers = #tpu.dot_dimension_numbers<[1], [0], [0], [1], [0, 0, 1, 1], [], []>} : vector<16x32xbf16>, vector<32x48xbf16>, vector<16x48xf32> -> vector<16x48xf32>
    %176 = arith.addf %1, %171 : vector<8x32xf32>
    %c0_89 = arith.constant 0 : index
    %c0_90 = arith.constant 0 : index
    %177 = vector.load %arg16[%c0_89, %c0_90] : memref<1x32xf32, #tpu.memory_space<vmem>>, vector<1x32xf32>
    %178 = vector.broadcast %177 : vector<1x32xf32> to vector<8x32xf32>
    %179 = arith.addf %176, %178 : vector<8x32xf32>
    %180 = arith.addf %3, %175 : vector<16x48xf32>
    %c0_91 = arith.constant 0 : index
    %c0_92 = arith.constant 0 : index
    %181 = vector.load %arg18[%c0_91, %c0_92] : memref<1x48xf32, #tpu.memory_space<vmem>>, vector<1x48xf32>
    %182 = vector.broadcast %181 : vector<1x48xf32> to vector<16x48xf32>
    %183 = arith.addf %180, %182 : vector<16x48xf32>
    %c0_93 = arith.constant 0 : index
    %c0_94 = arith.constant 0 : index
    %184 = vector.load %arg19[%c0_93, %c0_94] : memref<1x32xf32, #tpu.memory_space<vmem>>, vector<1x32xf32>
    %c0_95 = arith.constant 0 : index
    %c0_96 = arith.constant 0 : index
    %185 = vector.load %arg20[%c0_95, %c0_96] : memref<1x32xf32, #tpu.memory_space<vmem>>, vector<1x32xf32>
    %cst_97 = arith.constant dense<0.000000e+00> : vector<8xf32>
    %186 = vector.multi_reduction <add>, %179, %cst_97 [1] : vector<8x32xf32> to vector<8xf32>
    %187 = vector.shape_cast %186 : vector<8xf32> to vector<8x1xf32>
    %cst_98 = arith.constant 3.200000e+01 : f32
    %188 = vector.broadcast %cst_98 : f32 to vector<8x1xf32>
    %189 = arith.divf %187, %188 : vector<8x1xf32>
    %190 = vector.broadcast %189 : vector<8x1xf32> to vector<8x32xf32>
    %191 = arith.subf %179, %190 : vector<8x32xf32>
    %192 = arith.mulf %191, %191 : vector<8x32xf32>
    %cst_99 = arith.constant dense<0.000000e+00> : vector<8xf32>
    %193 = vector.multi_reduction <add>, %192, %cst_99 [1] : vector<8x32xf32> to vector<8xf32>
    %194 = vector.shape_cast %193 : vector<8xf32> to vector<8x1xf32>
    %cst_100 = arith.constant 3.200000e+01 : f32
    %195 = vector.broadcast %cst_100 : f32 to vector<8x1xf32>
    %196 = arith.divf %194, %195 : vector<8x1xf32>
    %197 = vector.broadcast %189 : vector<8x1xf32> to vector<8x32xf32>
    %198 = arith.subf %179, %197 : vector<8x32xf32>
    %cst_101 = arith.constant 9.99999974E-6 : f32
    %199 = vector.broadcast %cst_101 : f32 to vector<8x1xf32>
    %200 = arith.addf %196, %199 : vector<8x1xf32>
    %201 = math.rsqrt %200 : vector<8x1xf32>
    %202 = vector.broadcast %201 : vector<8x1xf32> to vector<8x32xf32>
    %203 = arith.mulf %198, %202 : vector<8x32xf32>
    %204 = vector.broadcast %184 : vector<1x32xf32> to vector<8x32xf32>
    %205 = arith.mulf %203, %204 : vector<8x32xf32>
    %206 = vector.broadcast %185 : vector<1x32xf32> to vector<8x32xf32>
    %207 = arith.addf %205, %206 : vector<8x32xf32>
    %208 = arith.truncf %207 : vector<8x32xf32> to vector<8x32xbf16>
    %c0_102 = arith.constant 0 : index
    %c0_103 = arith.constant 0 : index
    %209 = vector.load %arg21[%c0_102, %c0_103] : memref<32x128xbf16, #tpu.memory_space<vmem>>, vector<32x128xbf16>
    %cst_104 = arith.constant dense<0.000000e+00> : vector<8x128xf32>
    %210 = tpu.matmul %208, %209, %cst_104 {dimension_numbers = #tpu.dot_dimension_numbers<[1], [0], [0], [1], [0, 0, 1, 1], [], []>} : vector<8x32xbf16>, vector<32x128xbf16>, vector<8x128xf32> -> vector<8x128xf32>
    %c0_105 = arith.constant 0 : index
    %c0_106 = arith.constant 0 : index
    %211 = vector.load %arg22[%c0_105, %c0_106] : memref<1x128xf32, #tpu.memory_space<vmem>>, vector<1x128xf32>
    %212 = vector.broadcast %211 : vector<1x128xf32> to vector<8x128xf32>
    %213 = arith.addf %210, %212 : vector<8x128xf32>
    %cst_107 = arith.constant 5.000000e-01 : f32
    %214 = vector.broadcast %cst_107 : f32 to vector<8x128xf32>
    %215 = arith.mulf %214, %213 : vector<8x128xf32>
    %cst_108 = arith.constant 4.471500e-02 : f32
    %216 = vector.broadcast %cst_108 : f32 to vector<8x128xf32>
    %217 = arith.mulf %216, %213 : vector<8x128xf32>
    %218 = arith.mulf %217, %213 : vector<8x128xf32>
    %219 = arith.mulf %218, %213 : vector<8x128xf32>
    %220 = arith.addf %213, %219 : vector<8x128xf32>
    %cst_109 = arith.constant 0.797884583 : f32
    %221 = vector.broadcast %cst_109 : f32 to vector<8x128xf32>
    %222 = arith.mulf %221, %220 : vector<8x128xf32>
    %223 = math.tanh %222 : vector<8x128xf32>
    %cst_110 = arith.constant 1.000000e+00 : f32
    %224 = vector.broadcast %cst_110 : f32 to vector<8x128xf32>
    %225 = arith.addf %224, %223 : vector<8x128xf32>
    %226 = arith.mulf %215, %225 : vector<8x128xf32>
    %227 = arith.truncf %226 : vector<8x128xf32> to vector<8x128xbf16>
    %c0_111 = arith.constant 0 : index
    %c0_112 = arith.constant 0 : index
    %228 = vector.load %arg23[%c0_111, %c0_112] : memref<128x32xbf16, #tpu.memory_space<vmem>>, vector<128x32xbf16>
    %cst_113 = arith.constant dense<0.000000e+00> : vector<8x32xf32>
    %229 = tpu.matmul %227, %228, %cst_113 {dimension_numbers = #tpu.dot_dimension_numbers<[1], [0], [0], [1], [0, 0, 1, 1], [], []>} : vector<8x128xbf16>, vector<128x32xbf16>, vector<8x32xf32> -> vector<8x32xf32>
    %c0_114 = arith.constant 0 : index
    %c0_115 = arith.constant 0 : index
    %230 = vector.load %arg24[%c0_114, %c0_115] : memref<1x32xf32, #tpu.memory_space<vmem>>, vector<1x32xf32>
    %231 = vector.broadcast %230 : vector<1x32xf32> to vector<8x32xf32>
    %232 = arith.addf %229, %231 : vector<8x32xf32>
    %233 = arith.addf %232, %179 : vector<8x32xf32>
    %c0_116 = arith.constant 0 : index
    %c0_117 = arith.constant 0 : index
    %234 = vector.load %arg25[%c0_116, %c0_117] : memref<1x48xf32, #tpu.memory_space<vmem>>, vector<1x48xf32>
    %c0_118 = arith.constant 0 : index
    %c0_119 = arith.constant 0 : index
    %235 = vector.load %arg26[%c0_118, %c0_119] : memref<1x48xf32, #tpu.memory_space<vmem>>, vector<1x48xf32>
    %cst_120 = arith.constant dense<0.000000e+00> : vector<16xf32>
    %236 = vector.multi_reduction <add>, %183, %cst_120 [1] : vector<16x48xf32> to vector<16xf32>
    %237 = vector.shape_cast %236 : vector<16xf32> to vector<16x1xf32>
    %cst_121 = arith.constant 4.800000e+01 : f32
    %238 = vector.broadcast %cst_121 : f32 to vector<16x1xf32>
    %239 = arith.divf %237, %238 : vector<16x1xf32>
    %240 = vector.broadcast %239 : vector<16x1xf32> to vector<16x48xf32>
    %241 = arith.subf %183, %240 : vector<16x48xf32>
    %242 = arith.mulf %241, %241 : vector<16x48xf32>
    %cst_122 = arith.constant dense<0.000000e+00> : vector<16xf32>
    %243 = vector.multi_reduction <add>, %242, %cst_122 [1] : vector<16x48xf32> to vector<16xf32>
    %244 = vector.shape_cast %243 : vector<16xf32> to vector<16x1xf32>
    %cst_123 = arith.constant 4.800000e+01 : f32
    %245 = vector.broadcast %cst_123 : f32 to vector<16x1xf32>
    %246 = arith.divf %244, %245 : vector<16x1xf32>
    %247 = vector.broadcast %239 : vector<16x1xf32> to vector<16x48xf32>
    %248 = arith.subf %183, %247 : vector<16x48xf32>
    %cst_124 = arith.constant 9.99999974E-6 : f32
    %249 = vector.broadcast %cst_124 : f32 to vector<16x1xf32>
    %250 = arith.addf %246, %249 : vector<16x1xf32>
    %251 = math.rsqrt %250 : vector<16x1xf32>
    %252 = vector.broadcast %251 : vector<16x1xf32> to vector<16x48xf32>
    %253 = arith.mulf %248, %252 : vector<16x48xf32>
    %254 = vector.broadcast %234 : vector<1x48xf32> to vector<16x48xf32>
    %255 = arith.mulf %253, %254 : vector<16x48xf32>
    %256 = vector.broadcast %235 : vector<1x48xf32> to vector<16x48xf32>
    %257 = arith.addf %255, %256 : vector<16x48xf32>
    %258 = arith.truncf %257 : vector<16x48xf32> to vector<16x48xbf16>
    %c0_125 = arith.constant 0 : index
    %c0_126 = arith.constant 0 : index
    %259 = vector.load %arg27[%c0_125, %c0_126] : memref<48x192xbf16, #tpu.memory_space<vmem>>, vector<48x192xbf16>
    %cst_127 = arith.constant dense<0.000000e+00> : vector<16x192xf32>
    %260 = tpu.matmul %258, %259, %cst_127 {dimension_numbers = #tpu.dot_dimension_numbers<[1], [0], [0], [1], [0, 0, 1, 1], [], []>} : vector<16x48xbf16>, vector<48x192xbf16>, vector<16x192xf32> -> vector<16x192xf32>
    %c0_128 = arith.constant 0 : index
    %c0_129 = arith.constant 0 : index
    %261 = vector.load %arg28[%c0_128, %c0_129] : memref<1x192xf32, #tpu.memory_space<vmem>>, vector<1x192xf32>
    %262 = vector.broadcast %261 : vector<1x192xf32> to vector<16x192xf32>
    %263 = arith.addf %260, %262 : vector<16x192xf32>
    %cst_130 = arith.constant 5.000000e-01 : f32
    %264 = vector.broadcast %cst_130 : f32 to vector<16x192xf32>
    %265 = arith.mulf %264, %263 : vector<16x192xf32>
    %cst_131 = arith.constant 4.471500e-02 : f32
    %266 = vector.broadcast %cst_131 : f32 to vector<16x192xf32>
    %267 = arith.mulf %266, %263 : vector<16x192xf32>
    %268 = arith.mulf %267, %263 : vector<16x192xf32>
    %269 = arith.mulf %268, %263 : vector<16x192xf32>
    %270 = arith.addf %263, %269 : vector<16x192xf32>
    %cst_132 = arith.constant 0.797884583 : f32
    %271 = vector.broadcast %cst_132 : f32 to vector<16x192xf32>
    %272 = arith.mulf %271, %270 : vector<16x192xf32>
    %273 = math.tanh %272 : vector<16x192xf32>
    %cst_133 = arith.constant 1.000000e+00 : f32
    %274 = vector.broadcast %cst_133 : f32 to vector<16x192xf32>
    %275 = arith.addf %274, %273 : vector<16x192xf32>
    %276 = arith.mulf %265, %275 : vector<16x192xf32>
    %277 = arith.truncf %276 : vector<16x192xf32> to vector<16x192xbf16>
    %c0_134 = arith.constant 0 : index
    %c0_135 = arith.constant 0 : index
    %278 = vector.load %arg29[%c0_134, %c0_135] : memref<192x48xbf16, #tpu.memory_space<vmem>>, vector<192x48xbf16>
    %cst_136 = arith.constant dense<0.000000e+00> : vector<16x48xf32>
    %279 = tpu.matmul %277, %278, %cst_136 {dimension_numbers = #tpu.dot_dimension_numbers<[1], [0], [0], [1], [0, 0, 1, 1], [], []>} : vector<16x192xbf16>, vector<192x48xbf16>, vector<16x48xf32> -> vector<16x48xf32>
    %c0_137 = arith.constant 0 : index
    %c0_138 = arith.constant 0 : index
    %280 = vector.load %arg30[%c0_137, %c0_138] : memref<1x48xf32, #tpu.memory_space<vmem>>, vector<1x48xf32>
    %281 = vector.broadcast %280 : vector<1x48xf32> to vector<16x48xf32>
    %282 = arith.addf %279, %281 : vector<16x48xf32>
    %283 = arith.addf %282, %183 : vector<16x48xf32>
    %284 = vector.shape_cast %233 : vector<8x32xf32> to vector<1x8x32xf32>
    %c0_139 = arith.constant 0 : index
    %c0_140 = arith.constant 0 : index
    %c0_141 = arith.constant 0 : index
    %285 = vector.load %arg31[%c0_139, %c0_140, %c0_141] : memref<1x8x32xf32, #tpu.memory_space<vmem>>, vector<1x8x32xf32>
    tpu.vector_store %arg31[%c0_139, %c0_140, %c0_141], %284 {strides = array<i32>} : memref<1x8x32xf32, #tpu.memory_space<vmem>>, vector<1x8x32xf32>,
    %286 = vector.shape_cast %283 : vector<16x48xf32> to vector<1x16x48xf32>
    %c0_142 = arith.constant 0 : index
    %c0_143 = arith.constant 0 : index
    %c0_144 = arith.constant 0 : index
    %287 = vector.load %arg32[%c0_142, %c0_143, %c0_144] : memref<1x16x48xf32, #tpu.memory_space<vmem>>, vector<1x16x48xf32>
    tpu.vector_store %arg32[%c0_142, %c0_143, %c0_144], %286 {strides = array<i32>} : memref<1x16x48xf32, #tpu.memory_space<vmem>>, vector<1x16x48xf32>,
    return
  }
  func.func @transform_0(%arg0: i32) -> (i32, i32, i32) {
    %c0_i32 = arith.constant 0 : i32
    %c0_i32_0 = arith.constant 0 : i32
    %c0_i32_1 = arith.constant 0 : i32
    return %arg0, %c0_i32, %c0_i32_0 : i32, i32, i32
  }
  func.func @transform_1(%arg0: i32) -> (i32, i32, i32) {
    %c0_i32 = arith.constant 0 : i32
    %c0_i32_0 = arith.constant 0 : i32
    %c0_i32_1 = arith.constant 0 : i32
    return %arg0, %c0_i32, %c0_i32_0 : i32, i32, i32
  }
  func.func @transform_2(%arg0: i32) -> (i32, i32, i32) {
    %c0_i32 = arith.constant 0 : i32
    %c0_i32_0 = arith.constant 0 : i32
    %c0_i32_1 = arith.constant 0 : i32
    return %arg0, %c0_i32, %c0_i32_0 : i32, i32, i32
  }
  func.func @transform_3(%arg0: i32) -> (i32, i32, i32) {
    %c0_i32 = arith.constant 0 : i32
    %c0_i32_0 = arith.constant 0 : i32
    %c0_i32_1 = arith.constant 0 : i32
    return %arg0, %c0_i32, %c0_i32_0 : i32, i32, i32
  }
  func.func @transform_4(%arg0: i32) -> (i32, i32, i32) {
    %c0_i32 = arith.constant 0 : i32
    %c0_i32_0 = arith.constant 0 : i32
    %c0_i32_1 = arith.constant 0 : i32
    return %arg0, %c0_i32, %c0_i32_0 : i32, i32, i32
  }
  func.func @transform_5(%arg0: i32) -> (i32, i32, i32) {
    %c0_i32 = arith.constant 0 : i32
    %c0_i32_0 = arith.constant 0 : i32
    %c0_i32_1 = arith.constant 0 : i32
    return %arg0, %c0_i32, %c0_i32_0 : i32, i32, i32
  }
  func.func @transform_6(%arg0: i32) -> (i32, i32) {
    %c0_i32 = arith.constant 0 : i32
    %c0_i32_0 = arith.constant 0 : i32
    %c0_i32_1 = arith.constant 0 : i32
    return %c0_i32, %c0_i32_0 : i32, i32
  }
  func.func @transform_7(%arg0: i32) -> (i32, i32) {
    %c0_i32 = arith.constant 0 : i32
    %c0_i32_0 = arith.constant 0 : i32
    %c0_i32_1 = arith.constant 0 : i32
    return %c0_i32, %c0_i32_0 : i32, i32
  }
  func.func @transform_8(%arg0: i32) -> (i32, i32) {
    %c0_i32 = arith.constant 0 : i32
    %c0_i32_0 = arith.constant 0 : i32
    %c0_i32_1 = arith.constant 0 : i32
    return %c0_i32, %c0_i32_0 : i32, i32
  }
  func.func @transform_9(%arg0: i32) -> (i32, i32) {
    %c0_i32 = arith.constant 0 : i32
    %c0_i32_0 = arith.constant 0 : i32
    %c0_i32_1 = arith.constant 0 : i32
    return %c0_i32, %c0_i32_0 : i32, i32
  }
  func.func @transform_10(%arg0: i32) -> (i32, i32) {
    %c0_i32 = arith.constant 0 : i32
    %c0_i32_0 = arith.constant 0 : i32
    %c0_i32_1 = arith.constant 0 : i32
    return %c0_i32, %c0_i32_0 : i32, i32
  }
  func.func @transform_11(%arg0: i32) -> (i32, i32) {
    %c0_i32 = arith.constant 0 : i32
    %c0_i32_0 = arith.constant 0 : i32
    %c0_i32_1 = arith.constant 0 : i32
    return %c0_i32, %c0_i32_0 : i32, i32
  }
  func.func @transform_12(%arg0: i32) -> (i32, i32) {
    %c0_i32 = arith.constant 0 : i32
    %c0_i32_0 = arith.constant 0 : i32
    %c0_i32_1 = arith.constant 0 : i32
    return %c0_i32, %c0_i32_0 : i32, i32
  }
  func.func @transform_13(%arg0: i32) -> (i32, i32) {
    %c0_i32 = arith.constant 0 : i32
    %c0_i32_0 = arith.constant 0 : i32
    %c0_i32_1 = arith.constant 0 : i32
    return %c0_i32, %c0_i32_0 : i32, i32
  }
  func.func @transform_14(%arg0: i32) -> (i32, i32) {
    %c0_i32 = arith.constant 0 : i32
    %c0_i32_0 = arith.constant 0 : i32
    %c0_i32_1 = arith.constant 0 : i32
    return %c0_i32, %c0_i32_0 : i32, i32
  }
  func.func @transform_15(%arg0: i32) -> (i32, i32) {
    %c0_i32 = arith.constant 0 : i32
    %c0_i32_0 = arith.constant 0 : i32
    %c0_i32_1 = arith.constant 0 : i32
    return %c0_i32, %c0_i32_0 : i32, i32
  }
  func.func @transform_16(%arg0: i32) -> (i32, i32) {
    %c0_i32 = arith.constant 0 : i32
    %c0_i32_0 = arith.constant 0 : i32
    %c0_i32_1 = arith.constant 0 : i32
    return %c0_i32, %c0_i32_0 : i32, i32
  }
  func.func @transform_17(%arg0: i32) -> (i32, i32) {
    %c0_i32 = arith.constant 0 : i32
    %c0_i32_0 = arith.constant 0 : i32
    %c0_i32_1 = arith.constant 0 : i32
    return %c0_i32, %c0_i32_0 : i32, i32
  }
  func.func @transform_18(%arg0: i32) -> (i32, i32) {
    %c0_i32 = arith.constant 0 : i32
    %c0_i32_0 = arith.constant 0 : i32
    %c0_i32_1 = arith.constant 0 : i32
    return %c0_i32, %c0_i32_0 : i32, i32
  }
  func.func @transform_19(%arg0: i32) -> (i32, i32) {
    %c0_i32 = arith.constant 0 : i32
    %c0_i32_0 = arith.constant 0 : i32
    %c0_i32_1 = arith.constant 0 : i32
    return %c0_i32, %c0_i32_0 : i32, i32
  }
  func.func @transform_20(%arg0: i32) -> (i32, i32) {
    %c0_i32 = arith.constant 0 : i32
    %c0_i32_0 = arith.constant 0 : i32
    %c0_i32_1 = arith.constant 0 : i32
    return %c0_i32, %c0_i32_0 : i32, i32
  }
  func.func @transform_21(%arg0: i32) -> (i32, i32) {
    %c0_i32 = arith.constant 0 : i32
    %c0_i32_0 = arith.constant 0 : i32
    %c0_i32_1 = arith.constant 0 : i32
    return %c0_i32, %c0_i32_0 : i32, i32
  }
  func.func @transform_22(%arg0: i32) -> (i32, i32) {
    %c0_i32 = arith.constant 0 : i32
    %c0_i32_0 = arith.constant 0 : i32
    %c0_i32_1 = arith.constant 0 : i32
    return %c0_i32, %c0_i32_0 : i32, i32
  }
  func.func @transform_23(%arg0: i32) -> (i32, i32) {
    %c0_i32 = arith.constant 0 : i32
    %c0_i32_0 = arith.constant 0 : i32
    %c0_i32_1 = arith.constant 0 : i32
    return %c0_i32, %c0_i32_0 : i32, i32
  }
  func.func @transform_24(%arg0: i32) -> (i32, i32) {
    %c0_i32 = arith.constant 0 : i32
    %c0_i32_0 = arith.constant 0 : i32
    %c0_i32_1 = arith.constant 0 : i32
    return %c0_i32, %c0_i32_0 : i32, i32
  }
  func.func @transform_25(%arg0: i32) -> (i32, i32) {
    %c0_i32 = arith.constant 0 : i32
    %c0_i32_0 = arith.constant 0 : i32
    %c0_i32_1 = arith.constant 0 : i32
    return %c0_i32, %c0_i32_0 : i32, i32
  }
  func.func @transform_26(%arg0: i32) -> (i32, i32) {
    %c0_i32 = arith.constant 0 : i32
    %c0_i32_0 = arith.constant 0 : i32
    %c0_i32_1 = arith.constant 0 : i32
    return %c0_i32, %c0_i32_0 : i32, i32
  }
  func.func @transform_27(%arg0: i32) -> (i32, i32) {
    %c0_i32 = arith.constant 0 : i32
    %c0_i32_0 = arith.constant 0 : i32
    %c0_i32_1 = arith.constant 0 : i32
    return %c0_i32, %c0_i32_0 : i32, i32
  }
  func.func @transform_28(%arg0: i32) -> (i32, i32) {
    %c0_i32 = arith.constant 0 : i32
    %c0_i32_0 = arith.constant 0 : i32
    %c0_i32_1 = arith.constant 0 : i32
    return %c0_i32, %c0_i32_0 : i32, i32
  }
  func.func @transform_29(%arg0: i32) -> (i32, i32) {
    %c0_i32 = arith.constant 0 : i32
    %c0_i32_0 = arith.constant 0 : i32
    %c0_i32_1 = arith.constant 0 : i32
    return %c0_i32, %c0_i32_0 : i32, i32
  }
  func.func @transform_30(%arg0: i32) -> (i32, i32, i32) {
    %c0_i32 = arith.constant 0 : i32
    %c0_i32_0 = arith.constant 0 : i32
    %c0_i32_1 = arith.constant 0 : i32
    return %arg0, %c0_i32, %c0_i32_0 : i32, i32, i32
  }
  func.func @transform_31(%arg0: i32) -> (i32, i32, i32) {
    %c0_i32 = arith.constant 0 : i32
    %c0_i32_0 = arith.constant 0 : i32
    %c0_i32_1 = arith.constant 0 : i32
    return %arg0, %c0_i32, %c0_i32_0 : i32, i32, i32
  }
}

module attributes {stable_mosaic.version = 11 : i64} {
  func.func @_joint_block_kernel(%arg0: i32, %arg1: memref<1x8x32xf32, #tpu.memory_space<vmem>>, %arg2: memref<1x16x48xf32, #tpu.memory_space<vmem>>, %arg3: memref<1x8x1xf32, #tpu.memory_space<vmem>>, %arg4: memref<1x1x16xf32, #tpu.memory_space<vmem>>, %arg5: memref<1x16x1xf32, #tpu.memory_space<vmem>>, %arg6: memref<1x1x8xf32, #tpu.memory_space<vmem>>, %arg7: memref<1x32xf32, #tpu.memory_space<vmem>>, %arg8: memref<1x32xf32, #tpu.memory_space<vmem>>, %arg9: memref<1x48xf32, #tpu.memory_space<vmem>>, %arg10: memref<1x48xf32, #tpu.memory_space<vmem>>, %arg11: memref<32x32xbf16, #tpu.memory_space<vmem>>, %arg12: memref<32x32xbf16, #tpu.memory_space<vmem>>, %arg13: memref<48x32xbf16, #tpu.memory_space<vmem>>, %arg14: memref<48x32xbf16, #tpu.memory_space<vmem>>, %arg15: memref<32x32xbf16, #tpu.memory_space<vmem>>, %arg16: memref<1x32xf32, #tpu.memory_space<vmem>>, %arg17: memref<32x48xbf16, #tpu.memory_space<vmem>>, %arg18: memref<1x48xf32, #tpu.memory_space<vmem>>, %arg19: memref<1x32xf32, #tpu.memory_space<vmem>>, %arg20: memref<1x32xf32, #tpu.memory_space<vmem>>, %arg21: memref<32x128xbf16, #tpu.memory_space<vmem>>, %arg22: memref<1x128xf32, #tpu.memory_space<vmem>>, %arg23: memref<128x32xbf16, #tpu.memory_space<vmem>>, %arg24: memref<1x32xf32, #tpu.memory_space<vmem>>, %arg25: memref<1x48xf32, #tpu.memory_space<vmem>>, %arg26: memref<1x48xf32, #tpu.memory_space<vmem>>, %arg27: memref<48x192xbf16, #tpu.memory_space<vmem>>, %arg28: memref<1x192xf32, #tpu.memory_space<vmem>>, %arg29: memref<192x48xbf16, #tpu.memory_space<vmem>>, %arg30: memref<1x48xf32, #tpu.memory_space<vmem>>, %arg31: memref<1x8x32xf32, #tpu.memory_space<vmem>>, %arg32: memref<1x16x48xf32, #tpu.memory_space<vmem>>, %arg33: memref<8x32xf32, #tpu.memory_space<vmem>>, %arg34: memref<16x32xf32, #tpu.memory_space<vmem>>) attributes {dimension_semantics = [#tpu.dimension_semantics<parallel>], iteration_bounds = array<i64: 2>, scalar_prefetch = 0 : i64, scratch_operands = 2 : i64, tpu.core_type = #tpu.core_type<tc>, window_params = [{transform_indices = @transform_0, window_bounds = array<i64: 1, 8, 32>}, {transform_indices = @transform_1, window_bounds = array<i64: 1, 16, 48>}, {transform_indices = @transform_2, window_bounds = array<i64: 1, 8, 1>}, {transform_indices = @transform_3, window_bounds = array<i64: 1, 1, 16>}, {transform_indices = @transform_4, window_bounds = array<i64: 1, 16, 1>}, {transform_indices = @transform_5, window_bounds = array<i64: 1, 1, 8>}, {pipeline_mode = #tpu.pipeline_mode<synchronous>, transform_indices = @transform_6, window_bounds = array<i64: 1, 32>}, {pipeline_mode = #tpu.pipeline_mode<synchronous>, transform_indices = @transform_7, window_bounds = array<i64: 1, 32>}, {pipeline_mode = #tpu.pipeline_mode<synchronous>, transform_indices = @transform_8, window_bounds = array<i64: 1, 48>}, {pipeline_mode = #tpu.pipeline_mode<synchronous>, transform_indices = @transform_9, window_bounds = array<i64: 1, 48>}, {pipeline_mode = #tpu.pipeline_mode<synchronous>, transform_indices = @transform_10, window_bounds = array<i64: 32, 32>}, {pipeline_mode = #tpu.pipeline_mode<synchronous>, transform_indices = @transform_11, window_bounds = array<i64: 32, 32>}, {pipeline_mode = #tpu.pipeline_mode<synchronous>, transform_indices = @transform_12, window_bounds = array<i64: 48, 32>}, {pipeline_mode = #tpu.pipeline_mode<synchronous>, transform_indices = @transform_13, window_bounds = array<i64: 48, 32>}, {pipeline_mode = #tpu.pipeline_mode<synchronous>, transform_indices = @transform_14, window_bounds = array<i64: 32, 32>}, {pipeline_mode = #tpu.pipeline_mode<synchronous>, transform_indices = @transform_15, window_bounds = array<i64: 1, 32>}, {pipeline_mode = #tpu.pipeline_mode<synchronous>, transform_indices = @transform_16, window_bounds = array<i64: 32, 48>}, {pipeline_mode = #tpu.pipeline_mode<synchronous>, transform_indices = @transform_17, window_bounds = array<i64: 1, 48>}, {pipeline_mode = #tpu.pipeline_mode<synchronous>, transform_indices = @transform_18, window_bounds = array<i64: 1, 32>}, {pipeline_mode = #tpu.pipeline_mode<synchronous>, transform_indices = @transform_19, window_bounds = array<i64: 1, 32>}, {pipeline_mode = #tpu.pipeline_mode<synchronous>, transform_indices = @transform_20, window_bounds = array<i64: 32, 128>}, {pipeline_mode = #tpu.pipeline_mode<synchronous>, transform_indices = @transform_21, window_bounds = array<i64: 1, 128>}, {pipeline_mode = #tpu.pipeline_mode<synchronous>, transform_indices = @transform_22, window_bounds = array<i64: 128, 32>}, {pipeline_mode = #tpu.pipeline_mode<synchronous>, transform_indices = @transform_23, window_bounds = array<i64: 1, 32>}, {pipeline_mode = #tpu.pipeline_mode<synchronous>, transform_indices = @transform_24, window_bounds = array<i64: 1, 48>}, {pipeline_mode = #tpu.pipeline_mode<synchronous>, transform_indices = @transform_25, window_bounds = array<i64: 1, 48>}, {pipeline_mode = #tpu.pipeline_mode<synchronous>, transform_indices = @transform_26, window_bounds = array<i64: 48, 192>}, {pipeline_mode = #tpu.pipeline_mode<synchronous>, transform_indices = @transform_27, window_bounds = array<i64: 1, 192>}, {pipeline_mode = #tpu.pipeline_mode<synchronous>, transform_indices = @transform_28, window_bounds = array<i64: 192, 48>}, {pipeline_mode = #tpu.pipeline_mode<synchronous>, transform_indices = @transform_29, window_bounds = array<i64: 1, 48>}, {transform_indices = @transform_30, window_bounds = array<i64: 1, 8, 32>}, {transform_indices = @transform_31, window_bounds = array<i64: 1, 16, 48>}]} {
    %c0 = arith.constant 0 : index
    %c0_0 = arith.constant 0 : index
    %c0_1 = arith.constant 0 : index
    %0 = vector.load %arg1[%c0, %c0_0, %c0_1] : memref<1x8x32xf32, #tpu.memory_space<vmem>>, vector<1x8x32xf32>
    %1 = vector.shape_cast %0 : vector<1x8x32xf32> to vector<8x32xf32>
    %c0_2 = arith.constant 0 : index
    %c0_3 = arith.constant 0 : index
    %c0_4 = arith.constant 0 : index
    %2 = vector.load %arg2[%c0_2, %c0_3, %c0_4] : memref<1x16x48xf32, #tpu.memory_space<vmem>>, vector<1x16x48xf32>
    %3 = vector.shape_cast %2 : vector<1x16x48xf32> to vector<16x48xf32>
    %c0_5 = arith.constant 0 : index
    %c0_6 = arith.constant 0 : index
    %4 = vector.load %arg7[%c0_5, %c0_6] : memref<1x32xf32, #tpu.memory_space<vmem>>, vector<1x32xf32>
    %c0_7 = arith.constant 0 : index
    %c0_8 = arith.constant 0 : index
    %5 = vector.load %arg8[%c0_7, %c0_8] : memref<1x32xf32, #tpu.memory_space<vmem>>, vector<1x32xf32>
    %cst = arith.constant dense<0.000000e+00> : vector<8xf32>
    %6 = vector.multi_reduction <add>, %1, %cst [1] : vector<8x32xf32> to vector<8xf32>
    %7 = vector.shape_cast %6 : vector<8xf32> to vector<8x1xf32>
    %cst_9 = arith.constant 3.200000e+01 : f32
    %8 = vector.broadcast %cst_9 : f32 to vector<8x1xf32>
    %9 = arith.divf %7, %8 : vector<8x1xf32>
    %10 = vector.broadcast %9 : vector<8x1xf32> to vector<8x32xf32>
    %11 = arith.subf %1, %10 : vector<8x32xf32>
    %12 = arith.mulf %11, %11 : vector<8x32xf32>
    %cst_10 = arith.constant dense<0.000000e+00> : vector<8xf32>
    %13 = vector.multi_reduction <add>, %12, %cst_10 [1] : vector<8x32xf32> to vector<8xf32>
    %14 = vector.shape_cast %13 : vector<8xf32> to vector<8x1xf32>
    %cst_11 = arith.constant 3.200000e+01 : f32
    %15 = vector.broadcast %cst_11 : f32 to vector<8x1xf32>
    %16 = arith.divf %14, %15 : vector<8x1xf32>
    %17 = vector.broadcast %9 : vector<8x1xf32> to vector<8x32xf32>
    %18 = arith.subf %1, %17 : vector<8x32xf32>
    %cst_12 = arith.constant 9.99999974E-6 : f32
    %19 = vector.broadcast %cst_12 : f32 to vector<8x1xf32>
    %20 = arith.addf %16, %19 : vector<8x1xf32>
    %21 = math.rsqrt %20 : vector<8x1xf32>
    %22 = vector.broadcast %21 : vector<8x1xf32> to vector<8x32xf32>
    %23 = arith.mulf %18, %22 : vector<8x32xf32>
    %24 = vector.broadcast %4 : vector<1x32xf32> to vector<8x32xf32>
    %25 = arith.mulf %23, %24 : vector<8x32xf32>
    %26 = vector.broadcast %5 : vector<1x32xf32> to vector<8x32xf32>
    %27 = arith.addf %25, %26 : vector<8x32xf32>
    %28 = arith.truncf %27 : vector<8x32xf32> to vector<8x32xbf16>
    %c0_13 = arith.constant 0 : index
    %c0_14 = arith.constant 0 : index
    %29 = vector.load %arg9[%c0_13, %c0_14] : memref<1x48xf32, #tpu.memory_space<vmem>>, vector<1x48xf32>
    %c0_15 = arith.constant 0 : index
    %c0_16 = arith.constant 0 : index
    %30 = vector.load %arg10[%c0_15, %c0_16] : memref<1x48xf32, #tpu.memory_space<vmem>>, vector<1x48xf32>
    %cst_17 = arith.constant dense<0.000000e+00> : vector<16xf32>
    %31 = vector.multi_reduction <add>, %3, %cst_17 [1] : vector<16x48xf32> to vector<16xf32>
    %32 = vector.shape_cast %31 : vector<16xf32> to vector<16x1xf32>
    %cst_18 = arith.constant 4.800000e+01 : f32
    %33 = vector.broadcast %cst_18 : f32 to vector<16x1xf32>
    %34 = arith.divf %32, %33 : vector<16x1xf32>
    %35 = vector.broadcast %34 : vector<16x1xf32> to vector<16x48xf32>
    %36 = arith.subf %3, %35 : vector<16x48xf32>
    %37 = arith.mulf %36, %36 : vector<16x48xf32>
    %cst_19 = arith.constant dense<0.000000e+00> : vector<16xf32>
    %38 = vector.multi_reduction <add>, %37, %cst_19 [1] : vector<16x48xf32> to vector<16xf32>
    %39 = vector.shape_cast %38 : vector<16xf32> to vector<16x1xf32>
    %cst_20 = arith.constant 4.800000e+01 : f32
    %40 = vector.broadcast %cst_20 : f32 to vector<16x1xf32>
    %41 = arith.divf %39, %40 : vector<16x1xf32>
    %42 = vector.broadcast %34 : vector<16x1xf32> to vector<16x48xf32>
    %43 = arith.subf %3, %42 : vector<16x48xf32>
    %cst_21 = arith.constant 9.99999974E-6 : f32
    %44 = vector.broadcast %cst_21 : f32 to vector<16x1xf32>
    %45 = arith.addf %41, %44 : vector<16x1xf32>
    %46 = math.rsqrt %45 : vector<16x1xf32>
    %47 = vector.broadcast %46 : vector<16x1xf32> to vector<16x48xf32>
    %48 = arith.mulf %43, %47 : vector<16x48xf32>
    %49 = vector.broadcast %29 : vector<1x48xf32> to vector<16x48xf32>
    %50 = arith.mulf %48, %49 : vector<16x48xf32>
    %51 = vector.broadcast %30 : vector<1x48xf32> to vector<16x48xf32>
    %52 = arith.addf %50, %51 : vector<16x48xf32>
    %53 = arith.truncf %52 : vector<16x48xf32> to vector<16x48xbf16>
    %c0_22 = arith.constant 0 : index
    %c0_23 = arith.constant 0 : index
    %54 = vector.load %arg11[%c0_22, %c0_23] : memref<32x32xbf16, #tpu.memory_space<vmem>>, vector<32x32xbf16>
    %cst_24 = arith.constant dense<0.000000e+00> : vector<8x32xf32>
    %55 = tpu.matmul %28, %54, %cst_24 {dimension_numbers = #tpu.dot_dimension_numbers<[1], [0], [0], [1], [0, 0, 1, 1], [], []>} : vector<8x32xbf16>, vector<32x32xbf16>, vector<8x32xf32> -> vector<8x32xf32>
    %56 = arith.truncf %55 : vector<8x32xf32> to vector<8x32xbf16>
    %57 = vector.shape_cast %56 : vector<8x32xbf16> to vector<1x8x32xbf16>
    %c0_25 = arith.constant 0 : index
    %c0_26 = arith.constant 0 : index
    %58 = vector.load %arg12[%c0_25, %c0_26] : memref<32x32xbf16, #tpu.memory_space<vmem>>, vector<32x32xbf16>
    %cst_27 = arith.constant dense<0.000000e+00> : vector<8x32xf32>
    %59 = tpu.matmul %28, %58, %cst_27 {dimension_numbers = #tpu.dot_dimension_numbers<[1], [0], [0], [1], [0, 0, 1, 1], [], []>} : vector<8x32xbf16>, vector<32x32xbf16>, vector<8x32xf32> -> vector<8x32xf32>
    %60 = arith.truncf %59 : vector<8x32xf32> to vector<8x32xbf16>
    %61 = vector.shape_cast %60 : vector<8x32xbf16> to vector<1x8x32xbf16>
    %c0_28 = arith.constant 0 : index
    %c0_29 = arith.constant 0 : index
    %62 = vector.load %arg13[%c0_28, %c0_29] : memref<48x32xbf16, #tpu.memory_space<vmem>>, vector<48x32xbf16>
    %cst_30 = arith.constant dense<0.000000e+00> : vector<16x32xf32>
    %63 = tpu.matmul %53, %62, %cst_30 {dimension_numbers = #tpu.dot_dimension_numbers<[1], [0], [0], [1], [0, 0, 1, 1], [], []>} : vector<16x48xbf16>, vector<48x32xbf16>, vector<16x32xf32> -> vector<16x32xf32>
    %64 = arith.truncf %63 : vector<16x32xf32> to vector<16x32xbf16>
    %65 = vector.shape_cast %64 : vector<16x32xbf16> to vector<1x16x32xbf16>
    %c0_31 = arith.constant 0 : index
    %c0_32 = arith.constant 0 : index
    %66 = vector.load %arg14[%c0_31, %c0_32] : memref<48x32xbf16, #tpu.memory_space<vmem>>, vector<48x32xbf16>
    %cst_33 = arith.constant dense<0.000000e+00> : vector<16x32xf32>
    %67 = tpu.matmul %53, %66, %cst_33 {dimension_numbers = #tpu.dot_dimension_numbers<[1], [0], [0], [1], [0, 0, 1, 1], [], []>} : vector<16x48xbf16>, vector<48x32xbf16>, vector<16x32xf32> -> vector<16x32xf32>
    %68 = arith.truncf %67 : vector<16x32xf32> to vector<16x32xbf16>
    %69 = vector.shape_cast %68 : vector<16x32xbf16> to vector<1x16x32xbf16>
    %c0_34 = arith.constant 0 : index
    %c0_35 = arith.constant 0 : index
    %c0_36 = arith.constant 0 : index
    %70 = vector.load %arg3[%c0_34, %c0_35, %c0_36] : memref<1x8x1xf32, #tpu.memory_space<vmem>>, vector<1x8x1xf32>
    %c0_37 = arith.constant 0 : index
    %c0_38 = arith.constant 0 : index
    %c0_39 = arith.constant 0 : index
    %71 = vector.load %arg4[%c0_37, %c0_38, %c0_39] : memref<1x1x16xf32, #tpu.memory_space<vmem>>, vector<1x1x16xf32>
    %72 = vector.broadcast %70 : vector<1x8x1xf32> to vector<1x8x16xf32>
    %73 = vector.broadcast %71 : vector<1x1x16xf32> to vector<1x8x16xf32>
    %74 = arith.mulf %72, %73 : vector<1x8x16xf32>
    %cst_40 = arith.constant 0.000000e+00 : f32
    %75 = vector.broadcast %cst_40 : f32 to vector<1x8x16xf32>
    %76 = arith.cmpf ogt, %74, %75 : vector<1x8x16xf32>
    %c0_41 = arith.constant 0 : index
    %c0_42 = arith.constant 0 : index
    %c0_43 = arith.constant 0 : index
    %77 = vector.load %arg5[%c0_41, %c0_42, %c0_43] : memref<1x16x1xf32, #tpu.memory_space<vmem>>, vector<1x16x1xf32>
    %c0_44 = arith.constant 0 : index
    %c0_45 = arith.constant 0 : index
    %c0_46 = arith.constant 0 : index
    %78 = vector.load %arg6[%c0_44, %c0_45, %c0_46] : memref<1x1x8xf32, #tpu.memory_space<vmem>>, vector<1x1x8xf32>
    %79 = vector.broadcast %77 : vector<1x16x1xf32> to vector<1x16x8xf32>
    %80 = vector.broadcast %78 : vector<1x1x8xf32> to vector<1x16x8xf32>
    %81 = arith.mulf %79, %80 : vector<1x16x8xf32>
    %cst_47 = arith.constant 0.000000e+00 : f32
    %82 = vector.broadcast %cst_47 : f32 to vector<1x16x8xf32>
    %83 = arith.cmpf ogt, %81, %82 : vector<1x16x8xf32>
    %84 = vector.extract_strided_slice %57 {offsets = [0, 0, 0], sizes = [1, 8, 16], strides = [1, 1, 1]} : vector<1x8x32xbf16> to vector<1x8x16xbf16>
    %85 = vector.extract_strided_slice %61 {offsets = [0, 0, 0], sizes = [1, 8, 16], strides = [1, 1, 1]} : vector<1x8x32xbf16> to vector<1x8x16xbf16>
    %86 = vector.extract_strided_slice %65 {offsets = [0, 0, 0], sizes = [1, 16, 16], strides = [1, 1, 1]} : vector<1x16x32xbf16> to vector<1x16x16xbf16>
    %87 = vector.extract_strided_slice %69 {offsets = [0, 0, 0], sizes = [1, 16, 16], strides = [1, 1, 1]} : vector<1x16x32xbf16> to vector<1x16x16xbf16>
    "tpu.trace_start"() <{level = 10 : i32, message = "bnd,bmd->bnm"}> : () -> ()
    %cst_48 = arith.constant dense<0.000000e+00> : vector<1x8x16xf32>
    %88 = tpu.matmul %84, %86, %cst_48 {dimension_numbers = #tpu.dot_dimension_numbers<[2], [2], [1], [1], [0, 0, 0, 1, 1, 1], [0], [0]>} : vector<1x8x16xbf16>, vector<1x16x16xbf16>, vector<1x8x16xf32> -> vector<1x8x16xf32>
    "tpu.trace_stop"() : () -> ()
    %cst_49 = arith.constant 2.500000e-01 : f32
    %89 = vector.broadcast %cst_49 : f32 to vector<1x8x16xf32>
    %90 = arith.mulf %88, %89 : vector<1x8x16xf32>
    %cst_50 = arith.constant -3.40282347E+38 : f32
    %91 = vector.broadcast %cst_50 : f32 to vector<1x8x16xf32>
    %92 = arith.select %76, %90, %91 : vector<1x8x16xi1>, vector<1x8x16xf32>
    %cst_51 = arith.constant dense<0xFF800000> : vector<1x8xf32>
    %93 = vector.multi_reduction <maximumf>, %92, %cst_51 [2] : vector<1x8x16xf32> to vector<1x8xf32>
    %94 = vector.shape_cast %93 : vector<1x8xf32> to vector<1x8x1xf32>
    %95 = vector.broadcast %94 : vector<1x8x1xf32> to vector<1x8x16xf32>
    %96 = arith.subf %92, %95 : vector<1x8x16xf32>
    %97 = math.exp %96 : vector<1x8x16xf32>
    %cst_52 = arith.constant dense<0.000000e+00> : vector<1x8xf32>
    %98 = vector.multi_reduction <add>, %97, %cst_52 [2] : vector<1x8x16xf32> to vector<1x8xf32>
    %99 = vector.shape_cast %98 : vector<1x8xf32> to vector<1x8x1xf32>
    %100 = tpu.reciprocal %99 {approx = true} : vector<1x8x1xf32> -> vector<1x8x1xf32>
    %101 = vector.broadcast %100 : vector<1x8x1xf32> to vector<1x8x16xf32>
    %102 = arith.mulf %97, %101 : vector<1x8x16xf32>
    "tpu.trace_start"() <{level = 10 : i32, message = "bmd,bnd->bmn"}> : () -> ()
    %cst_53 = arith.constant dense<0.000000e+00> : vector<1x16x8xf32>
    %103 = tpu.matmul %86, %84, %cst_53 {dimension_numbers = #tpu.dot_dimension_numbers<[2], [2], [1], [1], [0, 0, 0, 1, 1, 1], [0], [0]>} : vector<1x16x16xbf16>, vector<1x8x16xbf16>, vector<1x16x8xf32> -> vector<1x16x8xf32>
    "tpu.trace_stop"() : () -> ()
    %cst_54 = arith.constant 2.500000e-01 : f32
    %104 = vector.broadcast %cst_54 : f32 to vector<1x16x8xf32>
    %105 = arith.mulf %103, %104 : vector<1x16x8xf32>
    %cst_55 = arith.constant -3.40282347E+38 : f32
    %106 = vector.broadcast %cst_55 : f32 to vector<1x16x8xf32>
    %107 = arith.select %83, %105, %106 : vector<1x16x8xi1>, vector<1x16x8xf32>
    %cst_56 = arith.constant dense<0xFF800000> : vector<1x16xf32>
    %108 = vector.multi_reduction <maximumf>, %107, %cst_56 [2] : vector<1x16x8xf32> to vector<1x16xf32>
    %109 = vector.shape_cast %108 : vector<1x16xf32> to vector<1x16x1xf32>
    %110 = vector.broadcast %109 : vector<1x16x1xf32> to vector<1x16x8xf32>
    %111 = arith.subf %107, %110 : vector<1x16x8xf32>
    %112 = math.exp %111 : vector<1x16x8xf32>
    %cst_57 = arith.constant dense<0.000000e+00> : vector<1x16xf32>
    %113 = vector.multi_reduction <add>, %112, %cst_57 [2] : vector<1x16x8xf32> to vector<1x16xf32>
    %114 = vector.shape_cast %113 : vector<1x16xf32> to vector<1x16x1xf32>
    %115 = tpu.reciprocal %114 {approx = true} : vector<1x16x1xf32> -> vector<1x16x1xf32>
    %116 = vector.broadcast %115 : vector<1x16x1xf32> to vector<1x16x8xf32>
    %117 = arith.mulf %112, %116 : vector<1x16x8xf32>
    %118 = arith.truncf %102 : vector<1x8x16xf32> to vector<1x8x16xbf16>
    "tpu.trace_start"() <{level = 10 : i32, message = "bnm,bmd->bnd"}> : () -> ()
    %cst_58 = arith.constant dense<0.000000e+00> : vector<1x8x16xf32>
    %119 = tpu.matmul %118, %87, %cst_58 {dimension_numbers = #tpu.dot_dimension_numbers<[2], [1], [1], [2], [0, 0, 0, 1, 1, 2], [0], [0]>} : vector<1x8x16xbf16>, vector<1x16x16xbf16>, vector<1x8x16xf32> -> vector<1x8x16xf32>
    "tpu.trace_stop"() : () -> ()
    %120 = arith.truncf %117 : vector<1x16x8xf32> to vector<1x16x8xbf16>
    "tpu.trace_start"() <{level = 10 : i32, message = "bmn,bnd->bmd"}> : () -> ()
    %cst_59 = arith.constant dense<0.000000e+00> : vector<1x16x16xf32>
    %121 = tpu.matmul %120, %85, %cst_59 {dimension_numbers = #tpu.dot_dimension_numbers<[2], [1], [1], [2], [0, 0, 0, 1, 1, 2], [0], [0]>} : vector<1x16x8xbf16>, vector<1x8x16xbf16>, vector<1x16x16xf32> -> vector<1x16x16xf32>
    "tpu.trace_stop"() : () -> ()
    %122 = vector.shape_cast %119 : vector<1x8x16xf32> to vector<8x16xf32>
    %c0_60 = arith.constant 0 : index
    %c0_61 = arith.constant 0 : index
    %123 = vector.load %arg33[%c0_60, %c0_61] : memref<8x32xf32, #tpu.memory_space<vmem>>, vector<8x16xf32>
    tpu.vector_store %arg33[%c0_60, %c0_61], %122 {strides = array<i32>} : memref<8x32xf32, #tpu.memory_space<vmem>>, vector<8x16xf32>,
    %124 = vector.shape_cast %121 : vector<1x16x16xf32> to vector<16x16xf32>
    %c0_62 = arith.constant 0 : index
    %c0_63 = arith.constant 0 : index
    %125 = vector.load %arg34[%c0_62, %c0_63] : memref<16x32xf32, #tpu.memory_space<vmem>>, vector<16x16xf32>
    tpu.vector_store %arg34[%c0_62, %c0_63], %124 {strides = array<i32>} : memref<16x32xf32, #tpu.memory_space<vmem>>, vector<16x16xf32>,
    %126 = vector.extract_strided_slice %57 {offsets = [0, 0, 16], sizes = [1, 8, 16], strides = [1, 1, 1]} : vector<1x8x32xbf16> to vector<1x8x16xbf16>
    %127 = vector.extract_strided_slice %61 {offsets = [0, 0, 16], sizes = [1, 8, 16], strides = [1, 1, 1]} : vector<1x8x32xbf16> to vector<1x8x16xbf16>
    %128 = vector.extract_strided_slice %65 {offsets = [0, 0, 16], sizes = [1, 16, 16], strides = [1, 1, 1]} : vector<1x16x32xbf16> to vector<1x16x16xbf16>
    %129 = vector.extract_strided_slice %69 {offsets = [0, 0, 16], sizes = [1, 16, 16], strides = [1, 1, 1]} : vector<1x16x32xbf16> to vector<1x16x16xbf16>
    "tpu.trace_start"() <{level = 10 : i32, message = "bnd,bmd->bnm"}> : () -> ()
    %cst_64 = arith.constant dense<0.000000e+00> : vector<1x8x16xf32>
    %130 = tpu.matmul %126, %128, %cst_64 {dimension_numbers = #tpu.dot_dimension_numbers<[2], [2], [1], [1], [0, 0, 0, 1, 1, 1], [0], [0]>} : vector<1x8x16xbf16>, vector<1x16x16xbf16>, vector<1x8x16xf32> -> vector<1x8x16xf32>
    "tpu.trace_stop"() : () -> ()
    %cst_65 = arith.constant 2.500000e-01 : f32
    %131 = vector.broadcast %cst_65 : f32 to vector<1x8x16xf32>
    %132 = arith.mulf %130, %131 : vector<1x8x16xf32>
    %cst_66 = arith.constant -3.40282347E+38 : f32
    %133 = vector.broadcast %cst_66 : f32 to vector<1x8x16xf32>
    %134 = arith.select %76, %132, %133 : vector<1x8x16xi1>, vector<1x8x16xf32>
    %cst_67 = arith.constant dense<0xFF800000> : vector<1x8xf32>
    %135 = vector.multi_reduction <maximumf>, %134, %cst_67 [2] : vector<1x8x16xf32> to vector<1x8xf32>
    %136 = vector.shape_cast %135 : vector<1x8xf32> to vector<1x8x1xf32>
    %137 = vector.broadcast %136 : vector<1x8x1xf32> to vector<1x8x16xf32>
    %138 = arith.subf %134, %137 : vector<1x8x16xf32>
    %139 = math.exp %138 : vector<1x8x16xf32>
    %cst_68 = arith.constant dense<0.000000e+00> : vector<1x8xf32>
    %140 = vector.multi_reduction <add>, %139, %cst_68 [2] : vector<1x8x16xf32> to vector<1x8xf32>
    %141 = vector.shape_cast %140 : vector<1x8xf32> to vector<1x8x1xf32>
    %142 = tpu.reciprocal %141 {approx = true} : vector<1x8x1xf32> -> vector<1x8x1xf32>
    %143 = vector.broadcast %142 : vector<1x8x1xf32> to vector<1x8x16xf32>
    %144 = arith.mulf %139, %143 : vector<1x8x16xf32>
    "tpu.trace_start"() <{level = 10 : i32, message = "bmd,bnd->bmn"}> : () -> ()
    %cst_69 = arith.constant dense<0.000000e+00> : vector<1x16x8xf32>
    %145 = tpu.matmul %128, %126, %cst_69 {dimension_numbers = #tpu.dot_dimension_numbers<[2], [2], [1], [1], [0, 0, 0, 1, 1, 1], [0], [0]>} : vector<1x16x16xbf16>, vector<1x8x16xbf16>, vector<1x16x8xf32> -> vector<1x16x8xf32>
    "tpu.trace_stop"() : () -> ()
    %cst_70 = arith.constant 2.500000e-01 : f32
    %146 = vector.broadcast %cst_70 : f32 to vector<1x16x8xf32>
    %147 = arith.mulf %145, %146 : vector<1x16x8xf32>
    %cst_71 = arith.constant -3.40282347E+38 : f32
    %148 = vector.broadcast %cst_71 : f32 to vector<1x16x8xf32>
    %149 = arith.select %83, %147, %148 : vector<1x16x8xi1>, vector<1x16x8xf32>
    %cst_72 = arith.constant dense<0xFF800000> : vector<1x16xf32>
    %150 = vector.multi_reduction <maximumf>, %149, %cst_72 [2] : vector<1x16x8xf32> to vector<1x16xf32>
    %151 = vector.shape_cast %150 : vector<1x16xf32> to vector<1x16x1xf32>
    %152 = vector.broadcast %151 : vector<1x16x1xf32> to vector<1x16x8xf32>
    %153 = arith.subf %149, %152 : vector<1x16x8xf32>
    %154 = math.exp %153 : vector<1x16x8xf32>
    %cst_73 = arith.constant dense<0.000000e+00> : vector<1x16xf32>
    %155 = vector.multi_reduction <add>, %154, %cst_73 [2] : vector<1x16x8xf32> to vector<1x16xf32>
    %156 = vector.shape_cast %155 : vector<1x16xf32> to vector<1x16x1xf32>
    %157 = tpu.reciprocal %156 {approx = true} : vector<1x16x1xf32> -> vector<1x16x1xf32>
    %158 = vector.broadcast %157 : vector<1x16x1xf32> to vector<1x16x8xf32>
    %159 = arith.mulf %154, %158 : vector<1x16x8xf32>
    %160 = arith.truncf %144 : vector<1x8x16xf32> to vector<1x8x16xbf16>
    "tpu.trace_start"() <{level = 10 : i32, message = "bnm,bmd->bnd"}> : () -> ()
    %cst_74 = arith.constant dense<0.000000e+00> : vector<1x8x16xf32>
    %161 = tpu.matmul %160, %129, %cst_74 {dimension_numbers = #tpu.dot_dimension_numbers<[2], [1], [1], [2], [0, 0, 0, 1, 1, 2], [0], [0]>} : vector<1x8x16xbf16>, vector<1x16x16xbf16>, vector<1x8x16xf32> -> vector<1x8x16xf32>
    "tpu.trace_stop"() : () -> ()
    %162 = arith.truncf %159 : vector<1x16x8xf32> to vector<1x16x8xbf16>
    "tpu.trace_start"() <{level = 10 : i32, message = "bmn,bnd->bmd"}> : () -> ()
    %cst_75 = arith.constant dense<0.000000e+00> : vector<1x16x16xf32>
    %163 = tpu.matmul %162, %127, %cst_75 {dimension_numbers = #tpu.dot_dimension_numbers<[2], [1], [1], [2], [0, 0, 0, 1, 1, 2], [0], [0]>} : vector<1x16x8xbf16>, vector<1x8x16xbf16>, vector<1x16x16xf32> -> vector<1x16x16xf32>
    "tpu.trace_stop"() : () -> ()
    %164 = vector.shape_cast %161 : vector<1x8x16xf32> to vector<8x16xf32>
    %c0_76 = arith.constant 0 : index
    %c16 = arith.constant 16 : index
    %165 = vector.load %arg33[%c0_76, %c16] : memref<8x32xf32, #tpu.memory_space<vmem>>, vector<8x16xf32>
    tpu.vector_store %arg33[%c0_76, %c16], %164 {strides = array<i32>} : memref<8x32xf32, #tpu.memory_space<vmem>>, vector<8x16xf32>,
    %166 = vector.shape_cast %163 : vector<1x16x16xf32> to vector<16x16xf32>
    %c0_77 = arith.constant 0 : index
    %c16_78 = arith.constant 16 : index
    %167 = vector.load %arg34[%c0_77, %c16_78] : memref<16x32xf32, #tpu.memory_space<vmem>>, vector<16x16xf32>
    tpu.vector_store %arg34[%c0_77, %c16_78], %166 {strides = array<i32>} : memref<16x32xf32, #tpu.memory_space<vmem>>, vector<16x16xf32>,
    %c0_79 = arith.constant 0 : index
    %c0_80 = arith.constant 0 : index
    %168 = vector.load %arg33[%c0_79, %c0_80] : memref<8x32xf32, #tpu.memory_space<vmem>>, vector<8x32xf32>
    %169 = arith.truncf %168 : vector<8x32xf32> to vector<8x32xbf16>
    %c0_81 = arith.constant 0 : index
    %c0_82 = arith.constant 0 : index
    %170 = vector.load %arg15[%c0_81, %c0_82] : memref<32x32xbf16, #tpu.memory_space<vmem>>, vector<32x32xbf16>
    %cst_83 = arith.constant dense<0.000000e+00> : vector<8x32xf32>
    %171 = tpu.matmul %169, %170, %cst_83 {dimension_numbers = #tpu.dot_dimension_numbers<[1], [0], [0], [1], [0, 0, 1, 1], [], []>} : vector<8x32xbf16>, vector<32x32xbf16>, vector<8x32xf32> -> vector<8x32xf32>
    %c0_84 = arith.constant 0 : index
    %c0_85 = arith.constant 0 : index
    %172 = vector.load %arg34[%c0_84, %c0_85] : memref<16x32xf32, #tpu.memory_space<vmem>>, vector<16x32xf32>
    %173 = arith.truncf %172 : vector<16x32xf32> to vector<16x32xbf16>
    %c0_86 = arith.constant 0 : index
    %c0_87 = arith.constant 0 : index
    %174 = vector.load %arg17[%c0_86, %c0_87] : memref<32x48xbf16, #tpu.memory_space<vmem>>, vector<32x48xbf16>
    %cst_88 = arith.constant dense<0.000000e+00> : vector<16x48xf32>
    %175 = tpu.matmul %173, %174, %cst_88 {dimension_numbers = #tpu.dot_dimension_numbers<[1], [0], [0], [1], [0, 0, 1, 1], [], []>} : vector<16x32xbf16>, vector<32x48xbf16>, vector<16x48xf32> -> vector<16x48xf32>
    %176 = arith.addf %1, %171 : vector<8x32xf32>
    %c0_89 = arith.constant 0 : index
    %c0_90 = arith.constant 0 : index
    %177 = vector.load %arg16[%c0_89, %c0_90] : memref<1x32xf32, #tpu.memory_space<vmem>>, vector<1x32xf32>
    %178 = vector.broadcast %177 : vector<1x32xf32> to vector<8x32xf32>
    %179 = arith.addf %176, %178 : vector<8x32xf32>
    %180 = arith.addf %3, %175 : vector<16x48xf32>
    %c0_91 = arith.constant 0 : index
    %c0_92 = arith.constant 0 : index
    %181 = vector.load %arg18[%c0_91, %c0_92] : memref<1x48xf32, #tpu.memory_space<vmem>>, vector<1x48xf32>
    %182 = vector.broadcast %181 : vector<1x48xf32> to vector<16x48xf32>
    %183 = arith.addf %180, %182 : vector<16x48xf32>
    %c0_93 = arith.constant 0 : index
    %c0_94 = arith.constant 0 : index
    %184 = vector.load %arg19[%c0_93, %c0_94] : memref<1x32xf32, #tpu.memory_space<vmem>>, vector<1x32xf32>
    %c0_95 = arith.constant 0 : index
    %c0_96 = arith.constant 0 : index
    %185 = vector.load %arg20[%c0_95, %c0_96] : memref<1x32xf32, #tpu.memory_space<vmem>>, vector<1x32xf32>
    %cst_97 = arith.constant dense<0.000000e+00> : vector<8xf32>
    %186 = vector.multi_reduction <add>, %179, %cst_97 [1] : vector<8x32xf32> to vector<8xf32>
    %187 = vector.shape_cast %186 : vector<8xf32> to vector<8x1xf32>
    %cst_98 = arith.constant 3.200000e+01 : f32
    %188 = vector.broadcast %cst_98 : f32 to vector<8x1xf32>
    %189 = arith.divf %187, %188 : vector<8x1xf32>
    %190 = vector.broadcast %189 : vector<8x1xf32> to vector<8x32xf32>
    %191 = arith.subf %179, %190 : vector<8x32xf32>
    %192 = arith.mulf %191, %191 : vector<8x32xf32>
    %cst_99 = arith.constant dense<0.000000e+00> : vector<8xf32>
    %193 = vector.multi_reduction <add>, %192, %cst_99 [1] : vector<8x32xf32> to vector<8xf32>
    %194 = vector.shape_cast %193 : vector<8xf32> to vector<8x1xf32>
    %cst_100 = arith.constant 3.200000e+01 : f32
    %195 = vector.broadcast %cst_100 : f32 to vector<8x1xf32>
    %196 = arith.divf %194, %195 : vector<8x1xf32>
    %197 = vector.broadcast %189 : vector<8x1xf32> to vector<8x32xf32>
    %198 = arith.subf %179, %197 : vector<8x32xf32>
    %cst_101 = arith.constant 9.99999974E-6 : f32
    %199 = vector.broadcast %cst_101 : f32 to vector<8x1xf32>
    %200 = arith.addf %196, %199 : vector<8x1xf32>
    %201 = math.rsqrt %200 : vector<8x1xf32>
    %202 = vector.broadcast %201 : vector<8x1xf32> to vector<8x32xf32>
    %203 = arith.mulf %198, %202 : vector<8x32xf32>
    %204 = vector.broadcast %184 : vector<1x32xf32> to vector<8x32xf32>
    %205 = arith.mulf %203, %204 : vector<8x32xf32>
    %206 = vector.broadcast %185 : vector<1x32xf32> to vector<8x32xf32>
    %207 = arith.addf %205, %206 : vector<8x32xf32>
    %208 = arith.truncf %207 : vector<8x32xf32> to vector<8x32xbf16>
    %c0_102 = arith.constant 0 : index
    %c0_103 = arith.constant 0 : index
    %209 = vector.load %arg21[%c0_102, %c0_103] : memref<32x128xbf16, #tpu.memory_space<vmem>>, vector<32x128xbf16>
    %cst_104 = arith.constant dense<0.000000e+00> : vector<8x128xf32>
    %210 = tpu.matmul %208, %209, %cst_104 {dimension_numbers = #tpu.dot_dimension_numbers<[1], [0], [0], [1], [0, 0, 1, 1], [], []>} : vector<8x32xbf16>, vector<32x128xbf16>, vector<8x128xf32> -> vector<8x128xf32>
    %c0_105 = arith.constant 0 : index
    %c0_106 = arith.constant 0 : index
    %211 = vector.load %arg22[%c0_105, %c0_106] : memref<1x128xf32, #tpu.memory_space<vmem>>, vector<1x128xf32>
    %212 = vector.broadcast %211 : vector<1x128xf32> to vector<8x128xf32>
    %213 = arith.addf %210, %212 : vector<8x128xf32>
    %cst_107 = arith.constant 5.000000e-01 : f32
    %214 = vector.broadcast %cst_107 : f32 to vector<8x128xf32>
    %215 = arith.mulf %214, %213 : vector<8x128xf32>
    %cst_108 = arith.constant 4.471500e-02 : f32
    %216 = vector.broadcast %cst_108 : f32 to vector<8x128xf32>
    %217 = arith.mulf %216, %213 : vector<8x128xf32>
    %218 = arith.mulf %217, %213 : vector<8x128xf32>
    %219 = arith.mulf %218, %213 : vector<8x128xf32>
    %220 = arith.addf %213, %219 : vector<8x128xf32>
    %cst_109 = arith.constant 0.797884583 : f32
    %221 = vector.broadcast %cst_109 : f32 to vector<8x128xf32>
    %222 = arith.mulf %221, %220 : vector<8x128xf32>
    %223 = math.tanh %222 : vector<8x128xf32>
    %cst_110 = arith.constant 1.000000e+00 : f32
    %224 = vector.broadcast %cst_110 : f32 to vector<8x128xf32>
    %225 = arith.addf %224, %223 : vector<8x128xf32>
    %226 = arith.mulf %215, %225 : vector<8x128xf32>
    %227 = arith.truncf %226 : vector<8x128xf32> to vector<8x128xbf16>
    %c0_111 = arith.constant 0 : index
    %c0_112 = arith.constant 0 : index
    %228 = vector.load %arg23[%c0_111, %c0_112] : memref<128x32xbf16, #tpu.memory_space<vmem>>, vector<128x32xbf16>
    %cst_113 = arith.constant dense<0.000000e+00> : vector<8x32xf32>
    %229 = tpu.matmul %227, %228, %cst_113 {dimension_numbers = #tpu.dot_dimension_numbers<[1], [0], [0], [1], [0, 0, 1, 1], [], []>} : vector<8x128xbf16>, vector<128x32xbf16>, vector<8x32xf32> -> vector<8x32xf32>
    %c0_114 = arith.constant 0 : index
    %c0_115 = arith.constant 0 : index
    %230 = vector.load %arg24[%c0_114, %c0_115] : memref<1x32xf32, #tpu.memory_space<vmem>>, vector<1x32xf32>
    %231 = vector.broadcast %230 : vector<1x32xf32> to vector<8x32xf32>
    %232 = arith.addf %229, %231 : vector<8x32xf32>
    %233 = arith.addf %232, %179 : vector<8x32xf32>
    %c0_116 = arith.constant 0 : index
    %c0_117 = arith.constant 0 : index
    %234 = vector.load %arg25[%c0_116, %c0_117] : memref<1x48xf32, #tpu.memory_space<vmem>>, vector<1x48xf32>
    %c0_118 = arith.constant 0 : index
    %c0_119 = arith.constant 0 : index
    %235 = vector.load %arg26[%c0_118, %c0_119] : memref<1x48xf32, #tpu.memory_space<vmem>>, vector<1x48xf32>
    %cst_120 = arith.constant dense<0.000000e+00> : vector<16xf32>
    %236 = vector.multi_reduction <add>, %183, %cst_120 [1] : vector<16x48xf32> to vector<16xf32>
    %237 = vector.shape_cast %236 : vector<16xf32> to vector<16x1xf32>
    %cst_121 = arith.constant 4.800000e+01 : f32
    %238 = vector.broadcast %cst_121 : f32 to vector<16x1xf32>
    %239 = arith.divf %237, %238 : vector<16x1xf32>
    %240 = vector.broadcast %239 : vector<16x1xf32> to vector<16x48xf32>
    %241 = arith.subf %183, %240 : vector<16x48xf32>
    %242 = arith.mulf %241, %241 : vector<16x48xf32>
    %cst_122 = arith.constant dense<0.000000e+00> : vector<16xf32>
    %243 = vector.multi_reduction <add>, %242, %cst_122 [1] : vector<16x48xf32> to vector<16xf32>
    %244 = vector.shape_cast %243 : vector<16xf32> to vector<16x1xf32>
    %cst_123 = arith.constant 4.800000e+01 : f32
    %245 = vector.broadcast %cst_123 : f32 to vector<16x1xf32>
    %246 = arith.divf %244, %245 : vector<16x1xf32>
    %247 = vector.broadcast %239 : vector<16x1xf32> to vector<16x48xf32>
    %248 = arith.subf %183, %247 : vector<16x48xf32>
    %cst_124 = arith.constant 9.99999974E-6 : f32
    %249 = vector.broadcast %cst_124 : f32 to vector<16x1xf32>
    %250 = arith.addf %246, %249 : vector<16x1xf32>
    %251 = math.rsqrt %250 : vector<16x1xf32>
    %252 = vector.broadcast %251 : vector<16x1xf32> to vector<16x48xf32>
    %253 = arith.mulf %248, %252 : vector<16x48xf32>
    %254 = vector.broadcast %234 : vector<1x48xf32> to vector<16x48xf32>
    %255 = arith.mulf %253, %254 : vector<16x48xf32>
    %256 = vector.broadcast %235 : vector<1x48xf32> to vector<16x48xf32>
    %257 = arith.addf %255, %256 : vector<16x48xf32>
    %258 = arith.truncf %257 : vector<16x48xf32> to vector<16x48xbf16>
    %c0_125 = arith.constant 0 : index
    %c0_126 = arith.constant 0 : index
    %259 = vector.load %arg27[%c0_125, %c0_126] : memref<48x192xbf16, #tpu.memory_space<vmem>>, vector<48x192xbf16>
    %cst_127 = arith.constant dense<0.000000e+00> : vector<16x192xf32>
    %260 = tpu.matmul %258, %259, %cst_127 {dimension_numbers = #tpu.dot_dimension_numbers<[1], [0], [0], [1], [0, 0, 1, 1], [], []>} : vector<16x48xbf16>, vector<48x192xbf16>, vector<16x192xf32> -> vector<16x192xf32>
    %c0_128 = arith.constant 0 : index
    %c0_129 = arith.constant 0 : index
    %261 = vector.load %arg28[%c0_128, %c0_129] : memref<1x192xf32, #tpu.memory_space<vmem>>, vector<1x192xf32>
    %262 = vector.broadcast %261 : vector<1x192xf32> to vector<16x192xf32>
    %263 = arith.addf %260, %262 : vector<16x192xf32>
    %cst_130 = arith.constant 5.000000e-01 : f32
    %264 = vector.broadcast %cst_130 : f32 to vector<16x192xf32>
    %265 = arith.mulf %264, %263 : vector<16x192xf32>
    %cst_131 = arith.constant 4.471500e-02 : f32
    %266 = vector.broadcast %cst_131 : f32 to vector<16x192xf32>
    %267 = arith.mulf %266, %263 : vector<16x192xf32>
    %268 = arith.mulf %267, %263 : vector<16x192xf32>
    %269 = arith.mulf %268, %263 : vector<16x192xf32>
    %270 = arith.addf %263, %269 : vector<16x192xf32>
    %cst_132 = arith.constant 0.797884583 : f32
    %271 = vector.broadcast %cst_132 : f32 to vector<16x192xf32>
    %272 = arith.mulf %271, %270 : vector<16x192xf32>
    %273 = math.tanh %272 : vector<16x192xf32>
    %cst_133 = arith.constant 1.000000e+00 : f32
    %274 = vector.broadcast %cst_133 : f32 to vector<16x192xf32>
    %275 = arith.addf %274, %273 : vector<16x192xf32>
    %276 = arith.mulf %265, %275 : vector<16x192xf32>
    %277 = arith.truncf %276 : vector<16x192xf32> to vector<16x192xbf16>
    %c0_134 = arith.constant 0 : index
    %c0_135 = arith.constant 0 : index
    %278 = vector.load %arg29[%c0_134, %c0_135] : memref<192x48xbf16, #tpu.memory_space<vmem>>, vector<192x48xbf16>
    %cst_136 = arith.constant dense<0.000000e+00> : vector<16x48xf32>
    %279 = tpu.matmul %277, %278, %cst_136 {dimension_numbers = #tpu.dot_dimension_numbers<[1], [0], [0], [1], [0, 0, 1, 1], [], []>} : vector<16x192xbf16>, vector<192x48xbf16>, vector<16x48xf32> -> vector<16x48xf32>
    %c0_137 = arith.constant 0 : index
    %c0_138 = arith.constant 0 : index
    %280 = vector.load %arg30[%c0_137, %c0_138] : memref<1x48xf32, #tpu.memory_space<vmem>>, vector<1x48xf32>
    %281 = vector.broadcast %280 : vector<1x48xf32> to vector<16x48xf32>
    %282 = arith.addf %279, %281 : vector<16x48xf32>
    %283 = arith.addf %282, %183 : vector<16x48xf32>
    %284 = vector.shape_cast %233 : vector<8x32xf32> to vector<1x8x32xf32>
    %c0_139 = arith.constant 0 : index
    %c0_140 = arith.constant 0 : index
    %c0_141 = arith.constant 0 : index
    %285 = vector.load %arg31[%c0_139, %c0_140, %c0_141] : memref<1x8x32xf32, #tpu.memory_space<vmem>>, vector<1x8x32xf32>
    tpu.vector_store %arg31[%c0_139, %c0_140, %c0_141], %284 {strides = array<i32>} : memref<1x8x32xf32, #tpu.memory_space<vmem>>, vector<1x8x32xf32>,
    %286 = vector.shape_cast %283 : vector<16x48xf32> to vector<1x16x48xf32>
    %c0_142 = arith.constant 0 : index
    %c0_143 = arith.constant 0 : index
    %c0_144 = arith.constant 0 : index
    %287 = vector.load %arg32[%c0_142, %c0_143, %c0_144] : memref<1x16x48xf32, #tpu.memory_space<vmem>>, vector<1x16x48xf32>
    tpu.vector_store %arg32[%c0_142, %c0_143, %c0_144], %286 {strides = array<i32>} : memref<1x16x48xf32, #tpu.memory_space<vmem>>, vector<1x16x48xf32>,
    return
  }
  func.func @transform_0(%arg0: i32) -> (i32, i32, i32) {
    %c0_i32 = arith.constant 0 : i32
    %c0_i32_0 = arith.constant 0 : i32
    %c0_i32_1 = arith.constant 0 : i32
    return %arg0, %c0_i32, %c0_i32_0 : i32, i32, i32
  }
  func.func @transform_1(%arg0: i32) -> (i32, i32, i32) {
    %c0_i32 = arith.constant 0 : i32
    %c0_i32_0 = arith.constant 0 : i32
    %c0_i32_1 = arith.constant 0 : i32
    return %arg0, %c0_i32, %c0_i32_0 : i32, i32, i32
  }
  func.func @transform_2(%arg0: i32) -> (i32, i32, i32) {
    %c0_i32 = arith.constant 0 : i32
    %c0_i32_0 = arith.constant 0 : i32
    %c0_i32_1 = arith.constant 0 : i32
    return %arg0, %c0_i32, %c0_i32_0 : i32, i32, i32
  }
  func.func @transform_3(%arg0: i32) -> (i32, i32, i32) {
    %c0_i32 = arith.constant 0 : i32
    %c0_i32_0 = arith.constant 0 : i32
    %c0_i32_1 = arith.constant 0 : i32
    return %arg0, %c0_i32, %c0_i32_0 : i32, i32, i32
  }
  func.func @transform_4(%arg0: i32) -> (i32, i32, i32) {
    %c0_i32 = arith.constant 0 : i32
    %c0_i32_0 = arith.constant 0 : i32
    %c0_i32_1 = arith.constant 0 : i32
    return %arg0, %c0_i32, %c0_i32_0 : i32, i32, i32
  }
  func.func @transform_5(%arg0: i32) -> (i32, i32, i32) {
    %c0_i32 = arith.constant 0 : i32
    %c0_i32_0 = arith.constant 0 : i32
    %c0_i32_1 = arith.constant 0 : i32
    return %arg0, %c0_i32, %c0_i32_0 : i32, i32, i32
  }
  func.func @transform_6(%arg0: i32) -> (i32, i32) {
    %c0_i32 = arith.constant 0 : i32
    %c0_i32_0 = arith.constant 0 : i32
    %c0_i32_1 = arith.constant 0 : i32
    return %c0_i32, %c0_i32_0 : i32, i32
  }
  func.func @transform_7(%arg0: i32) -> (i32, i32) {
    %c0_i32 = arith.constant 0 : i32
    %c0_i32_0 = arith.constant 0 : i32
    %c0_i32_1 = arith.constant 0 : i32
    return %c0_i32, %c0_i32_0 : i32, i32
  }
  func.func @transform_8(%arg0: i32) -> (i32, i32) {
    %c0_i32 = arith.constant 0 : i32
    %c0_i32_0 = arith.constant 0 : i32
    %c0_i32_1 = arith.constant 0 : i32
    return %c0_i32, %c0_i32_0 : i32, i32
  }
  func.func @transform_9(%arg0: i32) -> (i32, i32) {
    %c0_i32 = arith.constant 0 : i32
    %c0_i32_0 = arith.constant 0 : i32
    %c0_i32_1 = arith.constant 0 : i32
    return %c0_i32, %c0_i32_0 : i32, i32
  }
  func.func @transform_10(%arg0: i32) -> (i32, i32) {
    %c0_i32 = arith.constant 0 : i32
    %c0_i32_0 = arith.constant 0 : i32
    %c0_i32_1 = arith.constant 0 : i32
    return %c0_i32, %c0_i32_0 : i32, i32
  }
  func.func @transform_11(%arg0: i32) -> (i32, i32) {
    %c0_i32 = arith.constant 0 : i32
    %c0_i32_0 = arith.constant 0 : i32
    %c0_i32_1 = arith.constant 0 : i32
    return %c0_i32, %c0_i32_0 : i32, i32
  }
  func.func @transform_12(%arg0: i32) -> (i32, i32) {
    %c0_i32 = arith.constant 0 : i32
    %c0_i32_0 = arith.constant 0 : i32
    %c0_i32_1 = arith.constant 0 : i32
    return %c0_i32, %c0_i32_0 : i32, i32
  }
  func.func @transform_13(%arg0: i32) -> (i32, i32) {
    %c0_i32 = arith.constant 0 : i32
    %c0_i32_0 = arith.constant 0 : i32
    %c0_i32_1 = arith.constant 0 : i32
    return %c0_i32, %c0_i32_0 : i32, i32
  }
  func.func @transform_14(%arg0: i32) -> (i32, i32) {
    %c0_i32 = arith.constant 0 : i32
    %c0_i32_0 = arith.constant 0 : i32
    %c0_i32_1 = arith.constant 0 : i32
    return %c0_i32, %c0_i32_0 : i32, i32
  }
  func.func @transform_15(%arg0: i32) -> (i32, i32) {
    %c0_i32 = arith.constant 0 : i32
    %c0_i32_0 = arith.constant 0 : i32
    %c0_i32_1 = arith.constant 0 : i32
    return %c0_i32, %c0_i32_0 : i32, i32
  }
  func.func @transform_16(%arg0: i32) -> (i32, i32) {
    %c0_i32 = arith.constant 0 : i32
    %c0_i32_0 = arith.constant 0 : i32
    %c0_i32_1 = arith.constant 0 : i32
    return %c0_i32, %c0_i32_0 : i32, i32
  }
  func.func @transform_17(%arg0: i32) -> (i32, i32) {
    %c0_i32 = arith.constant 0 : i32
    %c0_i32_0 = arith.constant 0 : i32
    %c0_i32_1 = arith.constant 0 : i32
    return %c0_i32, %c0_i32_0 : i32, i32
  }
  func.func @transform_18(%arg0: i32) -> (i32, i32) {
    %c0_i32 = arith.constant 0 : i32
    %c0_i32_0 = arith.constant 0 : i32
    %c0_i32_1 = arith.constant 0 : i32
    return %c0_i32, %c0_i32_0 : i32, i32
  }
  func.func @transform_19(%arg0: i32) -> (i32, i32) {
    %c0_i32 = arith.constant 0 : i32
    %c0_i32_0 = arith.constant 0 : i32
    %c0_i32_1 = arith.constant 0 : i32
    return %c0_i32, %c0_i32_0 : i32, i32
  }
  func.func @transform_20(%arg0: i32) -> (i32, i32) {
    %c0_i32 = arith.constant 0 : i32
    %c0_i32_0 = arith.constant 0 : i32
    %c0_i32_1 = arith.constant 0 : i32
    return %c0_i32, %c0_i32_0 : i32, i32
  }
  func.func @transform_21(%arg0: i32) -> (i32, i32) {
    %c0_i32 = arith.constant 0 : i32
    %c0_i32_0 = arith.constant 0 : i32
    %c0_i32_1 = arith.constant 0 : i32
    return %c0_i32, %c0_i32_0 : i32, i32
  }
  func.func @transform_22(%arg0: i32) -> (i32, i32) {
    %c0_i32 = arith.constant 0 : i32
    %c0_i32_0 = arith.constant 0 : i32
    %c0_i32_1 = arith.constant 0 : i32
    return %c0_i32, %c0_i32_0 : i32, i32
  }
  func.func @transform_23(%arg0: i32) -> (i32, i32) {
    %c0_i32 = arith.constant 0 : i32
    %c0_i32_0 = arith.constant 0 : i32
    %c0_i32_1 = arith.constant 0 : i32
    return %c0_i32, %c0_i32_0 : i32, i32
  }
  func.func @transform_24(%arg0: i32) -> (i32, i32) {
    %c0_i32 = arith.constant 0 : i32
    %c0_i32_0 = arith.constant 0 : i32
    %c0_i32_1 = arith.constant 0 : i32
    return %c0_i32, %c0_i32_0 : i32, i32
  }
  func.func @transform_25(%arg0: i32) -> (i32, i32) {
    %c0_i32 = arith.constant 0 : i32
    %c0_i32_0 = arith.constant 0 : i32
    %c0_i32_1 = arith.constant 0 : i32
    return %c0_i32, %c0_i32_0 : i32, i32
  }
  func.func @transform_26(%arg0: i32) -> (i32, i32) {
    %c0_i32 = arith.constant 0 : i32
    %c0_i32_0 = arith.constant 0 : i32
    %c0_i32_1 = arith.constant 0 : i32
    return %c0_i32, %c0_i32_0 : i32, i32
  }
  func.func @transform_27(%arg0: i32) -> (i32, i32) {
    %c0_i32 = arith.constant 0 : i32
    %c0_i32_0 = arith.constant 0 : i32
    %c0_i32_1 = arith.constant 0 : i32
    return %c0_i32, %c0_i32_0 : i32, i32
  }
  func.func @transform_28(%arg0: i32) -> (i32, i32) {
    %c0_i32 = arith.constant 0 : i32
    %c0_i32_0 = arith.constant 0 : i32
    %c0_i32_1 = arith.constant 0 : i32
    return %c0_i32, %c0_i32_0 : i32, i32
  }
  func.func @transform_29(%arg0: i32) -> (i32, i32) {
    %c0_i32 = arith.constant 0 : i32
    %c0_i32_0 = arith.constant 0 : i32
    %c0_i32_1 = arith.constant 0 : i32
    return %c0_i32, %c0_i32_0 : i32, i32
  }
  func.func @transform_30(%arg0: i32) -> (i32, i32, i32) {
    %c0_i32 = arith.constant 0 : i32
    %c0_i32_0 = arith.constant 0 : i32
    %c0_i32_1 = arith.constant 0 : i32
    return %arg0, %c0_i32, %c0_i32_0 : i32, i32, i32
  }
  func.func @transform_31(%arg0: i32) -> (i32, i32, i32) {
    %c0_i32 = arith.constant 0 : i32
    %c0_i32_0 = arith.constant 0 : i32
    %c0_i32_1 = arith.constant 0 : i32
    return %arg0, %c0_i32, %c0_i32_0 : i32, i32, i32
  }
}

</mosaic_0001>

<llo_original>
// kernel: tpu_custom_call.1
$region0: #{tpu_custom_call.1}
  #allocation0 [shape = 'u32[]', space=smem, size = 0x4, offset = 0x4, fixed_abs, tag = 'smem constant byte address 0x4 - core index']
  #allocation1 [shape = 'u32[72,128]{1,0:T(1,128)}', space=vmem, size = 0x9000, scoped, tag = 'internal scratch']
  #allocation2 [shape = 'f32[8,32]{1,0:T(8,128)}', space=vmem, size = 0x1000, scoped, tag = 'scratch operand']
  #allocation3 [shape = 'f32[16,32]{1,0:T(8,128)}', space=vmem, size = 0x2000, scoped, tag = 'scratch operand']
  %s0 = inlined_call_operand.smem [shape: u32[32], index: -1, kind: input, shape index: {}]
  %s1 = sld [smem:[%s0]]
  %s2 = scalar_lea.smem %s0, 1
  %s3 = sld [smem:[%s2]]
  %s4 = scalar_lea.smem %s0, 2
  %s5 = sld [smem:[%s4]]
  %s6 = scalar_lea.smem %s0, 3
  %s7 = sld [smem:[%s6]]
  %s8 = scalar_lea.smem %s0, 4
  %s9 = sld [smem:[%s8]]
  %s10 = scalar_lea.smem %s0, 5
  %s11 = sld [smem:[%s10]]
  %s12 = scalar_lea.smem %s0, 6
  %s13 = sld [smem:[%s12]]
  %s14 = scalar_lea.smem %s0, 7
  %s15 = sld [smem:[%s14]]
  %s16 = scalar_lea.smem %s0, 8
  %s17 = sld [smem:[%s16]]
  %s18 = scalar_lea.smem %s0, 9
  %s19 = sld [smem:[%s18]]
  %s20 = scalar_lea.smem %s0, 10
  %s21 = sld [smem:[%s20]]
  %s22 = scalar_lea.smem %s0, 11
  %s23 = sld [smem:[%s22]]
  %s24 = scalar_lea.smem %s0, 12
  %s25 = sld [smem:[%s24]]
  %s26 = scalar_lea.smem %s0, 13
  %s27 = sld [smem:[%s26]]
  %s28 = scalar_lea.smem %s0, 14
  %s29 = sld [smem:[%s28]]
  %s30 = scalar_lea.smem %s0, 15
  %s31 = sld [smem:[%s30]]
  %s32 = scalar_lea.smem %s0, 16
  %s33 = sld [smem:[%s32]]
  %s34 = scalar_lea.smem %s0, 17
  %s35 = sld [smem:[%s34]]
  %s36 = scalar_lea.smem %s0, 18
  %s37 = sld [smem:[%s36]]
  %s38 = scalar_lea.smem %s0, 19
  %s39 = sld [smem:[%s38]]
  %s40 = scalar_lea.smem %s0, 20
  %s41 = sld [smem:[%s40]]
  %s42 = scalar_lea.smem %s0, 21
  %s43 = sld [smem:[%s42]]
  %s44 = scalar_lea.smem %s0, 22
  %s45 = sld [smem:[%s44]]
  %s46 = scalar_lea.smem %s0, 23
  %s47 = sld [smem:[%s46]]
  %s48 = scalar_lea.smem %s0, 24
  %s49 = sld [smem:[%s48]]
  %s50 = scalar_lea.smem %s0, 25
  %s51 = sld [smem:[%s50]]
  %s52 = scalar_lea.smem %s0, 26
  %s53 = sld [smem:[%s52]]
  %s54 = scalar_lea.smem %s0, 27
  %s55 = sld [smem:[%s54]]
  %s56 = scalar_lea.smem %s0, 28
  %s57 = sld [smem:[%s56]]
  %s58 = scalar_lea.smem %s0, 29
  %s59 = sld [smem:[%s58]]
  %s60 = scalar_lea.smem %s0, 30
  %s61 = sld [smem:[%s60]]
  %s62 = scalar_lea.smem %s0, 31
  %s63 = sld [smem:[%s62]]
  %64 = xla_tuple %s61, %s63
  %s65 = sld [smem:[#allocation0]]
  $region161: #{tpu_custom_call.1} parent=0
    _
  %s67 = ssub.s32 1, %s65
  %s68 = scalar_select 0, %s67, %s65
  $region1: #{tpu_custom_call.1} parent=0
    #allocation4 [shape = 'u8[8192]{0}', space=vmem, size = 0x2000, scoped, tag = 'output window, operand 0']
    #allocation5 [shape = 's32[2]{0}', space=sflag, size = 0x8, scoped, tag = 'scoped memory for tpu_custom_call.1']
    #allocation6 [shape = 'u8[16384]{0}', space=vmem, size = 0x4000, scoped, tag = 'output window, operand 1']
    #allocation7 [shape = 's32[2]{0}', space=sflag, size = 0x8, scoped, tag = 'scoped memory for tpu_custom_call.1']
    %69 = vsyncpa [#allocation5], 0
    %s70 = scalar_lea.sflag [#allocation5], 1
    %71 = vsyncpa %s70, 0
    %72 = vsyncpa [#allocation7], 0
    %s73 = scalar_lea.sflag [#allocation7], 1
    %74 = vsyncpa %s73, 0
    loop: start=0, step=1, limit=4
    $region2: #{tpu_custom_call.1} parent=1 // loop_pre_header
      _
    $region3: #{tpu_custom_call.1} parent=1 // loop_header
      %s76 = sphi 0, %s80
      %p77 = scmp.ge.s32.totalorder %s76, 4
      %s86 = sphi 0, %s88
      %s89 = sphi 0, %s86
      %s90 = sphi 0, %s89
      %s106 = sphi 0, %s90
      %s112 = sphi 0, %s114
      %s115 = sphi 0, %s112
      %s116 = sphi 0, %s115
      %s132 = sphi 0, %s116
      %s138 = sphi 0, %s140
      %s141 = sphi 0, %s138
      %s142 = sphi 0, %s141
      %s158 = sphi 0, %s142
      %s164 = sphi 0, %s166
      %s167 = sphi 0, %s164
      %s168 = sphi 0, %s167
      %s184 = sphi 0, %s168
      %s190 = sphi 0, %s192
      %s193 = sphi 0, %s190
      %s194 = sphi 0, %s193
      %s210 = sphi 0, %s194
      %s216 = sphi 0, %s218
      %s219 = sphi 0, %s216
      %s220 = sphi 0, %s219
      %s236 = sphi 0, %s220
      %s240 = sphi 0, %s240
      %s242 = sphi 0, %s240
      %s243 = sphi 0, %s242
      %s257 = sphi 0, %s243
      %s261 = sphi 0, %s261
      %s263 = sphi 0, %s261
      %s264 = sphi 0, %s263
      %s278 = sphi 0, %s264
      %s282 = sphi 0, %s282
      %s284 = sphi 0, %s282
      %s285 = sphi 0, %s284
      %s299 = sphi 0, %s285
      %s303 = sphi 0, %s303
      %s305 = sphi 0, %s303
      %s306 = sphi 0, %s305
      %s320 = sphi 0, %s306
      %s324 = sphi 0, %s324
      %s326 = sphi 0, %s324
      %s327 = sphi 0, %s326
      %s341 = sphi 0, %s327
      %s345 = sphi 0, %s345
      %s347 = sphi 0, %s345
      %s348 = sphi 0, %s347
      %s362 = sphi 0, %s348
      %s366 = sphi 0, %s366
      %s368 = sphi 0, %s366
      %s369 = sphi 0, %s368
      %s383 = sphi 0, %s369
      %s387 = sphi 0, %s387
      %s389 = sphi 0, %s387
      %s390 = sphi 0, %s389
      %s404 = sphi 0, %s390
      %s408 = sphi 0, %s408
      %s410 = sphi 0, %s408
      %s411 = sphi 0, %s410
      %s425 = sphi 0, %s411
      %s429 = sphi 0, %s429
      %s431 = sphi 0, %s429
      %s432 = sphi 0, %s431
      %s446 = sphi 0, %s432
      %s450 = sphi 0, %s450
      %s452 = sphi 0, %s450
      %s453 = sphi 0, %s452
      %s467 = sphi 0, %s453
      %s471 = sphi 0, %s471
      %s473 = sphi 0, %s471
      %s474 = sphi 0, %s473
      %s488 = sphi 0, %s474
      %s492 = sphi 0, %s492
      %s494 = sphi 0, %s492
      %s495 = sphi 0, %s494
      %s509 = sphi 0, %s495
      %s513 = sphi 0, %s513
      %s515 = sphi 0, %s513
      %s516 = sphi 0, %s515
      %s530 = sphi 0, %s516
      %s534 = sphi 0, %s534
      %s536 = sphi 0, %s534
      %s537 = sphi 0, %s536
      %s551 = sphi 0, %s537
      %s555 = sphi 0, %s555
      %s557 = sphi 0, %s555
      %s558 = sphi 0, %s557
      %s572 = sphi 0, %s558
      %s576 = sphi 0, %s576
      %s578 = sphi 0, %s576
      %s579 = sphi 0, %s578
      %s593 = sphi 0, %s579
      %s597 = sphi 0, %s597
      %s599 = sphi 0, %s597
      %s600 = sphi 0, %s599
      %s614 = sphi 0, %s600
      %s618 = sphi 0, %s618
      %s620 = sphi 0, %s618
      %s621 = sphi 0, %s620
      %s635 = sphi 0, %s621
      %s639 = sphi 0, %s639
      %s641 = sphi 0, %s639
      %s642 = sphi 0, %s641
      %s656 = sphi 0, %s642
      %s660 = sphi 0, %s660
      %s662 = sphi 0, %s660
      %s663 = sphi 0, %s662
      %s677 = sphi 0, %s663
      %s681 = sphi 0, %s681
      %s683 = sphi 0, %s681
      %s684 = sphi 0, %s683
      %s698 = sphi 0, %s684
      %s702 = sphi 0, %s702
      %s704 = sphi 0, %s702
      %s705 = sphi 0, %s704
      %s719 = sphi 0, %s705
      %s723 = sphi 0, %s723
      %s725 = sphi 0, %s723
      %s726 = sphi 0, %s725
      %s740 = sphi 0, %s726
      %s746 = sphi 0, %s748
      %s749 = sphi 0, %s746
      %s750 = sphi 0, %s749
      %s766 = sphi 0, %s750
      %s772 = sphi 0, %s774
      %s775 = sphi 0, %s772
      %s776 = sphi 0, %s775
      %s792 = sphi 0, %s776
    $region4: #{tpu_custom_call.1} parent=1 // loop_header_branch
      %79 = sbr.rel (%p77) target = $region8
    $region5: #{tpu_custom_call.1} parent=1 // loop_body
      %s81 = ssub.s32 %s76, 1
      %s82 = ssub.s32 %s76, 2
      %s83 = sadd.s32 %s76, 1
      %s84 = ssub.s32 %s76, %s83
      %p85 = scmp.eq.s32.totalorder %s84, 0
      %s87 = sadd.s32 %s86, 1
      %s88 = scalar_select %p85, %s86, %s87
      %p91 = pneg %p85
      %p92 = scmp.eq.s32.totalorder %s76, 1
      %p93 = por %p91, %p92
      %p94 = scmp.ne.s32.totalorder %s86, %s89
      %p95 = scmp.eq.s32.totalorder %s76, 0
      %p96 = por %p94, %p95
      %p97 = scmp.ne.s32.totalorder %s86, %s89
      %p98 = scmp.eq.s32.totalorder %s81, 1
      %p99 = por %p97, %p98
      %p100 = scmp.ne.s32.totalorder %s89, %s90
      %p101 = scmp.eq.s32.totalorder %s81, 0
      %p102 = por %p100, %p101
      %p103 = scmp.ne.s32.totalorder %s89, %s90
      %p104 = scmp.eq.s32.totalorder %s82, 1
      %p105 = por %p103, %p104
      %p107 = scmp.ne.s32.totalorder %s90, %s106
      %p108 = scmp.eq.s32.totalorder %s82, 0
      %p109 = por %p107, %p108
      %s110 = ssub.s32 %s76, %s83
      %p111 = scmp.eq.s32.totalorder %s110, 0
      %s113 = sadd.s32 %s112, 1
      %s114 = scalar_select %p111, %s112, %s113
      %p117 = pneg %p111
      %p118 = scmp.eq.s32.totalorder %s76, 1
      %p119 = por %p117, %p118
      %p120 = scmp.ne.s32.totalorder %s112, %s115
      %p121 = scmp.eq.s32.totalorder %s76, 0
      %p122 = por %p120, %p121
      %p123 = scmp.ne.s32.totalorder %s112, %s115
      %p124 = scmp.eq.s32.totalorder %s81, 1
      %p125 = por %p123, %p124
      %p126 = scmp.ne.s32.totalorder %s115, %s116
      %p127 = scmp.eq.s32.totalorder %s81, 0
      %p128 = por %p126, %p127
      %p129 = scmp.ne.s32.totalorder %s115, %s116
      %p130 = scmp.eq.s32.totalorder %s82, 1
      %p131 = por %p129, %p130
      %p133 = scmp.ne.s32.totalorder %s116, %s132
      %p134 = scmp.eq.s32.totalorder %s82, 0
      %p135 = por %p133, %p134
      %s136 = ssub.s32 %s76, %s83
      %p137 = scmp.eq.s32.totalorder %s136, 0
      %s139 = sadd.s32 %s138, 1
      %s140 = scalar_select %p137, %s138, %s139
      %p143 = pneg %p137
      %p144 = scmp.eq.s32.totalorder %s76, 1
      %p145 = por %p143, %p144
      %p146 = scmp.ne.s32.totalorder %s138, %s141
      %p147 = scmp.eq.s32.totalorder %s76, 0
      %p148 = por %p146, %p147
      %p149 = scmp.ne.s32.totalorder %s138, %s141
      %p150 = scmp.eq.s32.totalorder %s81, 1
      %p151 = por %p149, %p150
      %p152 = scmp.ne.s32.totalorder %s141, %s142
      %p153 = scmp.eq.s32.totalorder %s81, 0
      %p154 = por %p152, %p153
      %p155 = scmp.ne.s32.totalorder %s141, %s142
      %p156 = scmp.eq.s32.totalorder %s82, 1
      %p157 = por %p155, %p156
      %p159 = scmp.ne.s32.totalorder %s142, %s158
      %p160 = scmp.eq.s32.totalorder %s82, 0
      %p161 = por %p159, %p160
      %s162 = ssub.s32 %s76, %s83
      %p163 = scmp.eq.s32.totalorder %s162, 0
      %s165 = sadd.s32 %s164, 1
      %s166 = scalar_select %p163, %s164, %s165
      %p169 = pneg %p163
      %p170 = scmp.eq.s32.totalorder %s76, 1
      %p171 = por %p169, %p170
      %p172 = scmp.ne.s32.totalorder %s164, %s167
      %p173 = scmp.eq.s32.totalorder %s76, 0
      %p174 = por %p172, %p173
      %p175 = scmp.ne.s32.totalorder %s164, %s167
      %p176 = scmp.eq.s32.totalorder %s81, 1
      %p177 = por %p175, %p176
      %p178 = scmp.ne.s32.totalorder %s167, %s168
      %p179 = scmp.eq.s32.totalorder %s81, 0
      %p180 = por %p178, %p179
      %p181 = scmp.ne.s32.totalorder %s167, %s168
      %p182 = scmp.eq.s32.totalorder %s82, 1
      %p183 = por %p181, %p182
      %p185 = scmp.ne.s32.totalorder %s168, %s184
      %p186 = scmp.eq.s32.totalorder %s82, 0
      %p187 = por %p185, %p186
      %s188 = ssub.s32 %s76, %s83
      %p189 = scmp.eq.s32.totalorder %s188, 0
      %s191 = sadd.s32 %s190, 1
      %s192 = scalar_select %p189, %s190, %s191
      %p195 = pneg %p189
      %p196 = scmp.eq.s32.totalorder %s76, 1
      %p197 = por %p195, %p196
      %p198 = scmp.ne.s32.totalorder %s190, %s193
      %p199 = scmp.eq.s32.totalorder %s76, 0
      %p200 = por %p198, %p199
      %p201 = scmp.ne.s32.totalorder %s190, %s193
      %p202 = scmp.eq.s32.totalorder %s81, 1
      %p203 = por %p201, %p202
      %p204 = scmp.ne.s32.totalorder %s193, %s194
      %p205 = scmp.eq.s32.totalorder %s81, 0
      %p206 = por %p204, %p205
      %p207 = scmp.ne.s32.totalorder %s193, %s194
      %p208 = scmp.eq.s32.totalorder %s82, 1
      %p209 = por %p207, %p208
      %p211 = scmp.ne.s32.totalorder %s194, %s210
      %p212 = scmp.eq.s32.totalorder %s82, 0
      %p213 = por %p211, %p212
      %s214 = ssub.s32 %s76, %s83
      %p215 = scmp.eq.s32.totalorder %s214, 0
      %s217 = sadd.s32 %s216, 1
      %s218 = scalar_select %p215, %s216, %s217
      %p221 = pneg %p215
      %p222 = scmp.eq.s32.totalorder %s76, 1
      %p223 = por %p221, %p222
      %p224 = scmp.ne.s32.totalorder %s216, %s219
      %p225 = scmp.eq.s32.totalorder %s76, 0
      %p226 = por %p224, %p225
      %p227 = scmp.ne.s32.totalorder %s216, %s219
      %p228 = scmp.eq.s32.totalorder %s81, 1
      %p229 = por %p227, %p228
      %p230 = scmp.ne.s32.totalorder %s219, %s220
      %p231 = scmp.eq.s32.totalorder %s81, 0
      %p232 = por %p230, %p231
      %p233 = scmp.ne.s32.totalorder %s219, %s220
      %p234 = scmp.eq.s32.totalorder %s82, 1
      %p235 = por %p233, %p234
      %p237 = scmp.ne.s32.totalorder %s220, %s236
      %p238 = scmp.eq.s32.totalorder %s82, 0
      %p239 = por %p237, %p238
      %s241 = sadd.s32 %s240, 1
      %p244 = scmp.eq.s32.totalorder %s76, 1
      %p245 = scmp.ne.s32.totalorder %s240, %s242
      %p246 = scmp.eq.s32.totalorder %s76, 0
      %p247 = por %p245, %p246
      %p248 = scmp.ne.s32.totalorder %s240, %s242
      %p249 = scmp.eq.s32.totalorder %s81, 1
      %p250 = por %p248, %p249
      %p251 = scmp.ne.s32.totalorder %s242, %s243
      %p252 = scmp.eq.s32.totalorder %s81, 0
      %p253 = por %p251, %p252
      %p254 = scmp.ne.s32.totalorder %s242, %s243
      %p255 = scmp.eq.s32.totalorder %s82, 1
      %p256 = por %p254, %p255
      %p258 = scmp.ne.s32.totalorder %s243, %s257
      %p259 = scmp.eq.s32.totalorder %s82, 0
      %p260 = por %p258, %p259
      %s262 = sadd.s32 %s261, 1
      %p265 = scmp.eq.s32.totalorder %s76, 1
      %p266 = scmp.ne.s32.totalorder %s261, %s263
      %p267 = scmp.eq.s32.totalorder %s76, 0
      %p268 = por %p266, %p267
      %p269 = scmp.ne.s32.totalorder %s261, %s263
      %p270 = scmp.eq.s32.totalorder %s81, 1
      %p271 = por %p269, %p270
      %p272 = scmp.ne.s32.totalorder %s263, %s264
      %p273 = scmp.eq.s32.totalorder %s81, 0
      %p274 = por %p272, %p273
      %p275 = scmp.ne.s32.totalorder %s263, %s264
      %p276 = scmp.eq.s32.totalorder %s82, 1
      %p277 = por %p275, %p276
      %p279 = scmp.ne.s32.totalorder %s264, %s278
      %p280 = scmp.eq.s32.totalorder %s82, 0
      %p281 = por %p279, %p280
      %s283 = sadd.s32 %s282, 1
      %p286 = scmp.eq.s32.totalorder %s76, 1
      %p287 = scmp.ne.s32.totalorder %s282, %s284
      %p288 = scmp.eq.s32.totalorder %s76, 0
      %p289 = por %p287, %p288
      %p290 = scmp.ne.s32.totalorder %s282, %s284
      %p291 = scmp.eq.s32.totalorder %s81, 1
      %p292 = por %p290, %p291
      %p293 = scmp.ne.s32.totalorder %s284, %s285
      %p294 = scmp.eq.s32.totalorder %s81, 0
      %p295 = por %p293, %p294
      %p296 = scmp.ne.s32.totalorder %s284, %s285
      %p297 = scmp.eq.s32.totalorder %s82, 1
      %p298 = por %p296, %p297
      %p300 = scmp.ne.s32.totalorder %s285, %s299
      %p301 = scmp.eq.s32.totalorder %s82, 0
      %p302 = por %p300, %p301
      %s304 = sadd.s32 %s303, 1
      %p307 = scmp.eq.s32.totalorder %s76, 1
      %p308 = scmp.ne.s32.totalorder %s303, %s305
      %p309 = scmp.eq.s32.totalorder %s76, 0
      %p310 = por %p308, %p309
      %p311 = scmp.ne.s32.totalorder %s303, %s305
      %p312 = scmp.eq.s32.totalorder %s81, 1
      %p313 = por %p311, %p312
      %p314 = scmp.ne.s32.totalorder %s305, %s306
      %p315 = scmp.eq.s32.totalorder %s81, 0
      %p316 = por %p314, %p315
      %p317 = scmp.ne.s32.totalorder %s305, %s306
      %p318 = scmp.eq.s32.totalorder %s82, 1
      %p319 = por %p317, %p318
      %p321 = scmp.ne.s32.totalorder %s306, %s320
      %p322 = scmp.eq.s32.totalorder %s82, 0
      %p323 = por %p321, %p322
      %s325 = sadd.s32 %s324, 1
      %p328 = scmp.eq.s32.totalorder %s76, 1
      %p329 = scmp.ne.s32.totalorder %s324, %s326
      %p330 = scmp.eq.s32.totalorder %s76, 0
      %p331 = por %p329, %p330
      %p332 = scmp.ne.s32.totalorder %s324, %s326
      %p333 = scmp.eq.s32.totalorder %s81, 1
      %p334 = por %p332, %p333
      %p335 = scmp.ne.s32.totalorder %s326, %s327
      %p336 = scmp.eq.s32.totalorder %s81, 0
      %p337 = por %p335, %p336
      %p338 = scmp.ne.s32.totalorder %s326, %s327
      %p339 = scmp.eq.s32.totalorder %s82, 1
      %p340 = por %p338, %p339
      %p342 = scmp.ne.s32.totalorder %s327, %s341
      %p343 = scmp.eq.s32.totalorder %s82, 0
      %p344 = por %p342, %p343
      %s346 = sadd.s32 %s345, 1
      %p349 = scmp.eq.s32.totalorder %s76, 1
      %p350 = scmp.ne.s32.totalorder %s345, %s347
      %p351 = scmp.eq.s32.totalorder %s76, 0
      %p352 = por %p350, %p351
      %p353 = scmp.ne.s32.totalorder %s345, %s347
      %p354 = scmp.eq.s32.totalorder %s81, 1
      %p355 = por %p353, %p354
      %p356 = scmp.ne.s32.totalorder %s347, %s348
      %p357 = scmp.eq.s32.totalorder %s81, 0
      %p358 = por %p356, %p357
      %p359 = scmp.ne.s32.totalorder %s347, %s348
      %p360 = scmp.eq.s32.totalorder %s82, 1
      %p361 = por %p359, %p360
      %p363 = scmp.ne.s32.totalorder %s348, %s362
      %p364 = scmp.eq.s32.totalorder %s82, 0
      %p365 = por %p363, %p364
      %s367 = sadd.s32 %s366, 1
      %p370 = scmp.eq.s32.totalorder %s76, 1
      %p371 = scmp.ne.s32.totalorder %s366, %s368
      %p372 = scmp.eq.s32.totalorder %s76, 0
      %p373 = por %p371, %p372
      %p374 = scmp.ne.s32.totalorder %s366, %s368
      %p375 = scmp.eq.s32.totalorder %s81, 1
      %p376 = por %p374, %p375
      %p377 = scmp.ne.s32.totalorder %s368, %s369
      %p378 = scmp.eq.s32.totalorder %s81, 0
      %p379 = por %p377, %p378
      %p380 = scmp.ne.s32.totalorder %s368, %s369
      %p381 = scmp.eq.s32.totalorder %s82, 1
      %p382 = por %p380, %p381
      %p384 = scmp.ne.s32.totalorder %s369, %s383
      %p385 = scmp.eq.s32.totalorder %s82, 0
      %p386 = por %p384, %p385
      %s388 = sadd.s32 %s387, 1
      %p391 = scmp.eq.s32.totalorder %s76, 1
      %p392 = scmp.ne.s32.totalorder %s387, %s389
      %p393 = scmp.eq.s32.totalorder %s76, 0
      %p394 = por %p392, %p393
      %p395 = scmp.ne.s32.totalorder %s387, %s389
      %p396 = scmp.eq.s32.totalorder %s81, 1
      %p397 = por %p395, %p396
      %p398 = scmp.ne.s32.totalorder %s389, %s390
      %p399 = scmp.eq.s32.totalorder %s81, 0
      %p400 = por %p398, %p399
      %p401 = scmp.ne.s32.totalorder %s389, %s390
      %p402 = scmp.eq.s32.totalorder %s82, 1
      %p403 = por %p401, %p402
      %p405 = scmp.ne.s32.totalorder %s390, %s404
      %p406 = scmp.eq.s32.totalorder %s82, 0
      %p407 = por %p405, %p406
      %s409 = sadd.s32 %s408, 1
      %p412 = scmp.eq.s32.totalorder %s76, 1
      %p413 = scmp.ne.s32.totalorder %s408, %s410
      %p414 = scmp.eq.s32.totalorder %s76, 0
      %p415 = por %p413, %p414
      %p416 = scmp.ne.s32.totalorder %s408, %s410
      %p417 = scmp.eq.s32.totalorder %s81, 1
      %p418 = por %p416, %p417
      %p419 = scmp.ne.s32.totalorder %s410, %s411
      %p420 = scmp.eq.s32.totalorder %s81, 0
      %p421 = por %p419, %p420
      %p422 = scmp.ne.s32.totalorder %s410, %s411
      %p423 = scmp.eq.s32.totalorder %s82, 1
      %p424 = por %p422, %p423
      %p426 = scmp.ne.s32.totalorder %s411, %s425
      %p427 = scmp.eq.s32.totalorder %s82, 0
      %p428 = por %p426, %p427
      %s430 = sadd.s32 %s429, 1
      %p433 = scmp.eq.s32.totalorder %s76, 1
      %p434 = scmp.ne.s32.totalorder %s429, %s431
      %p435 = scmp.eq.s32.totalorder %s76, 0
      %p436 = por %p434, %p435
      %p437 = scmp.ne.s32.totalorder %s429, %s431
      %p438 = scmp.eq.s32.totalorder %s81, 1
      %p439 = por %p437, %p438
      %p440 = scmp.ne.s32.totalorder %s431, %s432
      %p441 = scmp.eq.s32.totalorder %s81, 0
      %p442 = por %p440, %p441
      %p443 = scmp.ne.s32.totalorder %s431, %s432
      %p444 = scmp.eq.s32.totalorder %s82, 1
      %p445 = por %p443, %p444
      %p447 = scmp.ne.s32.totalorder %s432, %s446
      %p448 = scmp.eq.s32.totalorder %s82, 0
      %p449 = por %p447, %p448
      %s451 = sadd.s32 %s450, 1
      %p454 = scmp.eq.s32.totalorder %s76, 1
      %p455 = scmp.ne.s32.totalorder %s450, %s452
      %p456 = scmp.eq.s32.totalorder %s76, 0
      %p457 = por %p455, %p456
      %p458 = scmp.ne.s32.totalorder %s450, %s452
      %p459 = scmp.eq.s32.totalorder %s81, 1
      %p460 = por %p458, %p459
      %p461 = scmp.ne.s32.totalorder %s452, %s453
      %p462 = scmp.eq.s32.totalorder %s81, 0
      %p463 = por %p461, %p462
      %p464 = scmp.ne.s32.totalorder %s452, %s453
      %p465 = scmp.eq.s32.totalorder %s82, 1
      %p466 = por %p464, %p465
      %p468 = scmp.ne.s32.totalorder %s453, %s467
      %p469 = scmp.eq.s32.totalorder %s82, 0
      %p470 = por %p468, %p469
      %s472 = sadd.s32 %s471, 1
      %p475 = scmp.eq.s32.totalorder %s76, 1
      %p476 = scmp.ne.s32.totalorder %s471, %s473
      %p477 = scmp.eq.s32.totalorder %s76, 0
      %p478 = por %p476, %p477
      %p479 = scmp.ne.s32.totalorder %s471, %s473
      %p480 = scmp.eq.s32.totalorder %s81, 1
      %p481 = por %p479, %p480
      %p482 = scmp.ne.s32.totalorder %s473, %s474
      %p483 = scmp.eq.s32.totalorder %s81, 0
      %p484 = por %p482, %p483
      %p485 = scmp.ne.s32.totalorder %s473, %s474
      %p486 = scmp.eq.s32.totalorder %s82, 1
      %p487 = por %p485, %p486
      %p489 = scmp.ne.s32.totalorder %s474, %s488
      %p490 = scmp.eq.s32.totalorder %s82, 0
      %p491 = por %p489, %p490
      %s493 = sadd.s32 %s492, 1
      %p496 = scmp.eq.s32.totalorder %s76, 1
      %p497 = scmp.ne.s32.totalorder %s492, %s494
      %p498 = scmp.eq.s32.totalorder %s76, 0
      %p499 = por %p497, %p498
      %p500 = scmp.ne.s32.totalorder %s492, %s494
      %p501 = scmp.eq.s32.totalorder %s81, 1
      %p502 = por %p500, %p501
      %p503 = scmp.ne.s32.totalorder %s494, %s495
      %p504 = scmp.eq.s32.totalorder %s81, 0
      %p505 = por %p503, %p504
      %p506 = scmp.ne.s32.totalorder %s494, %s495
      %p507 = scmp.eq.s32.totalorder %s82, 1
      %p508 = por %p506, %p507
      %p510 = scmp.ne.s32.totalorder %s495, %s509
      %p511 = scmp.eq.s32.totalorder %s82, 0
      %p512 = por %p510, %p511
      %s514 = sadd.s32 %s513, 1
      %p517 = scmp.eq.s32.totalorder %s76, 1
      %p518 = scmp.ne.s32.totalorder %s513, %s515
      %p519 = scmp.eq.s32.totalorder %s76, 0
      %p520 = por %p518, %p519
      %p521 = scmp.ne.s32.totalorder %s513, %s515
      %p522 = scmp.eq.s32.totalorder %s81, 1
      %p523 = por %p521, %p522
      %p524 = scmp.ne.s32.totalorder %s515, %s516
      %p525 = scmp.eq.s32.totalorder %s81, 0
      %p526 = por %p524, %p525
      %p527 = scmp.ne.s32.totalorder %s515, %s516
      %p528 = scmp.eq.s32.totalorder %s82, 1
      %p529 = por %p527, %p528
      %p531 = scmp.ne.s32.totalorder %s516, %s530
      %p532 = scmp.eq.s32.totalorder %s82, 0
      %p533 = por %p531, %p532
      %s535 = sadd.s32 %s534, 1
      %p538 = scmp.eq.s32.totalorder %s76, 1
      %p539 = scmp.ne.s32.totalorder %s534, %s536
      %p540 = scmp.eq.s32.totalorder %s76, 0
      %p541 = por %p539, %p540
      %p542 = scmp.ne.s32.totalorder %s534, %s536
      %p543 = scmp.eq.s32.totalorder %s81, 1
      %p544 = por %p542, %p543
      %p545 = scmp.ne.s32.totalorder %s536, %s537
      %p546 = scmp.eq.s32.totalorder %s81, 0
      %p547 = por %p545, %p546
      %p548 = scmp.ne.s32.totalorder %s536, %s537
      %p549 = scmp.eq.s32.totalorder %s82, 1
      %p550 = por %p548, %p549
      %p552 = scmp.ne.s32.totalorder %s537, %s551
      %p553 = scmp.eq.s32.totalorder %s82, 0
      %p554 = por %p552, %p553
      %s556 = sadd.s32 %s555, 1
      %p559 = scmp.eq.s32.totalorder %s76, 1
      %p560 = scmp.ne.s32.totalorder %s555, %s557
      %p561 = scmp.eq.s32.totalorder %s76, 0
      %p562 = por %p560, %p561
      %p563 = scmp.ne.s32.totalorder %s555, %s557
      %p564 = scmp.eq.s32.totalorder %s81, 1
      %p565 = por %p563, %p564
      %p566 = scmp.ne.s32.totalorder %s557, %s558
      %p567 = scmp.eq.s32.totalorder %s81, 0
      %p568 = por %p566, %p567
      %p569 = scmp.ne.s32.totalorder %s557, %s558
      %p570 = scmp.eq.s32.totalorder %s82, 1
      %p571 = por %p569, %p570
      %p573 = scmp.ne.s32.totalorder %s558, %s572
      %p574 = scmp.eq.s32.totalorder %s82, 0
      %p575 = por %p573, %p574
      %s577 = sadd.s32 %s576, 1
      %p580 = scmp.eq.s32.totalorder %s76, 1
      %p581 = scmp.ne.s32.totalorder %s576, %s578
      %p582 = scmp.eq.s32.totalorder %s76, 0
      %p583 = por %p581, %p582
      %p584 = scmp.ne.s32.totalorder %s576, %s578
      %p585 = scmp.eq.s32.totalorder %s81, 1
      %p586 = por %p584, %p585
      %p587 = scmp.ne.s32.totalorder %s578, %s579
      %p588 = scmp.eq.s32.totalorder %s81, 0
      %p589 = por %p587, %p588
      %p590 = scmp.ne.s32.totalorder %s578, %s579
      %p591 = scmp.eq.s32.totalorder %s82, 1
      %p592 = por %p590, %p591
      %p594 = scmp.ne.s32.totalorder %s579, %s593
      %p595 = scmp.eq.s32.totalorder %s82, 0
      %p596 = por %p594, %p595
      %s598 = sadd.s32 %s597, 1
      %p601 = scmp.eq.s32.totalorder %s76, 1
      %p602 = scmp.ne.s32.totalorder %s597, %s599
      %p603 = scmp.eq.s32.totalorder %s76, 0
      %p604 = por %p602, %p603
      %p605 = scmp.ne.s32.totalorder %s597, %s599
      %p606 = scmp.eq.s32.totalorder %s81, 1
      %p607 = por %p605, %p606
      %p608 = scmp.ne.s32.totalorder %s599, %s600
      %p609 = scmp.eq.s32.totalorder %s81, 0
      %p610 = por %p608, %p609
      %p611 = scmp.ne.s32.totalorder %s599, %s600
      %p612 = scmp.eq.s32.totalorder %s82, 1
      %p613 = por %p611, %p612
      %p615 = scmp.ne.s32.totalorder %s600, %s614
      %p616 = scmp.eq.s32.totalorder %s82, 0
      %p617 = por %p615, %p616
      %s619 = sadd.s32 %s618, 1
      %p622 = scmp.eq.s32.totalorder %s76, 1
      %p623 = scmp.ne.s32.totalorder %s618, %s620
      %p624 = scmp.eq.s32.totalorder %s76, 0
      %p625 = por %p623, %p624
      %p626 = scmp.ne.s32.totalorder %s618, %s620
      %p627 = scmp.eq.s32.totalorder %s81, 1
      %p628 = por %p626, %p627
      %p629 = scmp.ne.s32.totalorder %s620, %s621
      %p630 = scmp.eq.s32.totalorder %s81, 0
      %p631 = por %p629, %p630
      %p632 = scmp.ne.s32.totalorder %s620, %s621
      %p633 = scmp.eq.s32.totalorder %s82, 1
      %p634 = por %p632, %p633
      %p636 = scmp.ne.s32.totalorder %s621, %s635
      %p637 = scmp.eq.s32.totalorder %s82, 0
      %p638 = por %p636, %p637
      %s640 = sadd.s32 %s639, 1
      %p643 = scmp.eq.s32.totalorder %s76, 1
      %p644 = scmp.ne.s32.totalorder %s639, %s641
      %p645 = scmp.eq.s32.totalorder %s76, 0
      %p646 = por %p644, %p645
      %p647 = scmp.ne.s32.totalorder %s639, %s641
      %p648 = scmp.eq.s32.totalorder %s81, 1
      %p649 = por %p647, %p648
      %p650 = scmp.ne.s32.totalorder %s641, %s642
      %p651 = scmp.eq.s32.totalorder %s81, 0
      %p652 = por %p650, %p651
      %p653 = scmp.ne.s32.totalorder %s641, %s642
      %p654 = scmp.eq.s32.totalorder %s82, 1
      %p655 = por %p653, %p654
      %p657 = scmp.ne.s32.totalorder %s642, %s656
      %p658 = scmp.eq.s32.totalorder %s82, 0
      %p659 = por %p657, %p658
      %s661 = sadd.s32 %s660, 1
      %p664 = scmp.eq.s32.totalorder %s76, 1
      %p665 = scmp.ne.s32.totalorder %s660, %s662
      %p666 = scmp.eq.s32.totalorder %s76, 0
      %p667 = por %p665, %p666
      %p668 = scmp.ne.s32.totalorder %s660, %s662
      %p669 = scmp.eq.s32.totalorder %s81, 1
      %p670 = por %p668, %p669
      %p671 = scmp.ne.s32.totalorder %s662, %s663
      %p672 = scmp.eq.s32.totalorder %s81, 0
      %p673 = por %p671, %p672
      %p674 = scmp.ne.s32.totalorder %s662, %s663
      %p675 = scmp.eq.s32.totalorder %s82, 1
      %p676 = por %p674, %p675
      %p678 = scmp.ne.s32.totalorder %s663, %s677
      %p679 = scmp.eq.s32.totalorder %s82, 0
      %p680 = por %p678, %p679
      %s682 = sadd.s32 %s681, 1
      %p685 = scmp.eq.s32.totalorder %s76, 1
      %p686 = scmp.ne.s32.totalorder %s681, %s683
      %p687 = scmp.eq.s32.totalorder %s76, 0
      %p688 = por %p686, %p687
      %p689 = scmp.ne.s32.totalorder %s681, %s683
      %p690 = scmp.eq.s32.totalorder %s81, 1
      %p691 = por %p689, %p690
      %p692 = scmp.ne.s32.totalorder %s683, %s684
      %p693 = scmp.eq.s32.totalorder %s81, 0
      %p694 = por %p692, %p693
      %p695 = scmp.ne.s32.totalorder %s683, %s684
      %p696 = scmp.eq.s32.totalorder %s82, 1
      %p697 = por %p695, %p696
      %p699 = scmp.ne.s32.totalorder %s684, %s698
      %p700 = scmp.eq.s32.totalorder %s82, 0
      %p701 = por %p699, %p700
      %s703 = sadd.s32 %s702, 1
      %p706 = scmp.eq.s32.totalorder %s76, 1
      %p707 = scmp.ne.s32.totalorder %s702, %s704
      %p708 = scmp.eq.s32.totalorder %s76, 0
      %p709 = por %p707, %p708
      %p710 = scmp.ne.s32.totalorder %s702, %s704
      %p711 = scmp.eq.s32.totalorder %s81, 1
      %p712 = por %p710, %p711
      %p713 = scmp.ne.s32.totalorder %s704, %s705
      %p714 = scmp.eq.s32.totalorder %s81, 0
      %p715 = por %p713, %p714
      %p716 = scmp.ne.s32.totalorder %s704, %s705
      %p717 = scmp.eq.s32.totalorder %s82, 1
      %p718 = por %p716, %p717
      %p720 = scmp.ne.s32.totalorder %s705, %s719
      %p721 = scmp.eq.s32.totalorder %s82, 0
      %p722 = por %p720, %p721
      %s724 = sadd.s32 %s723, 1
      %p727 = scmp.eq.s32.totalorder %s76, 1
      %p728 = scmp.ne.s32.totalorder %s723, %s725
      %p729 = scmp.eq.s32.totalorder %s76, 0
      %p730 = por %p728, %p729
      %p731 = scmp.ne.s32.totalorder %s723, %s725
      %p732 = scmp.eq.s32.totalorder %s81, 1
      %p733 = por %p731, %p732
      %p734 = scmp.ne.s32.totalorder %s725, %s726
      %p735 = scmp.eq.s32.totalorder %s81, 0
      %p736 = por %p734, %p735
      %p737 = scmp.ne.s32.totalorder %s725, %s726
      %p738 = scmp.eq.s32.totalorder %s82, 1
      %p739 = por %p737, %p738
      %p741 = scmp.ne.s32.totalorder %s726, %s740
      %p742 = scmp.eq.s32.totalorder %s82, 0
      %p743 = por %p741, %p742
      %s744 = ssub.s32 %s76, %s83
      %p745 = scmp.eq.s32.totalorder %s744, 0
      %s747 = sadd.s32 %s746, 1
      %s748 = scalar_select %p745, %s746, %s747
      %p751 = pneg %p745
      %p752 = scmp.eq.s32.totalorder %s76, 1
      %p753 = por %p751, %p752
      %p754 = scmp.ne.s32.totalorder %s746, %s749
      %p755 = scmp.eq.s32.totalorder %s76, 0
      %p756 = por %p754, %p755
      %p757 = scmp.ne.s32.totalorder %s746, %s749
      %p758 = scmp.eq.s32.totalorder %s81, 1
      %p759 = por %p757, %p758
      %p760 = scmp.ne.s32.totalorder %s749, %s750
      %p761 = scmp.eq.s32.totalorder %s81, 0
      %p762 = por %p760, %p761
      %p763 = scmp.ne.s32.totalorder %s749, %s750
      %p764 = scmp.eq.s32.totalorder %s82, 1
      %p765 = por %p763, %p764
      %p767 = scmp.ne.s32.totalorder %s750, %s766
      %p768 = scmp.eq.s32.totalorder %s82, 0
      %p769 = por %p767, %p768
      %s770 = ssub.s32 %s76, %s83
      %p771 = scmp.eq.s32.totalorder %s770, 0
      %s773 = sadd.s32 %s772, 1
      %s774 = scalar_select %p771, %s772, %s773
      %p777 = pneg %p771
      %p778 = scmp.eq.s32.totalorder %s76, 1
      %p779 = por %p777, %p778
      %p780 = scmp.ne.s32.totalorder %s772, %s775
      %p781 = scmp.eq.s32.totalorder %s76, 0
      %p782 = por %p780, %p781
      %p783 = scmp.ne.s32.totalorder %s772, %s775
      %p784 = scmp.eq.s32.totalorder %s81, 1
      %p785 = por %p783, %p784
      %p786 = scmp.ne.s32.totalorder %s775, %s776
      %p787 = scmp.eq.s32.totalorder %s81, 0
      %p788 = por %p786, %p787
      %p789 = scmp.ne.s32.totalorder %s775, %s776
      %p790 = scmp.eq.s32.totalorder %s82, 1
      %p791 = por %p789, %p790
      %p793 = scmp.ne.s32.totalorder %s776, %s792
      %p794 = scmp.eq.s32.totalorder %s82, 0
      %p795 = por %p793, %p794
      %p796 = scmp.le.s32.totalorder 1, %s76
      %p797 = scmp.lt.s32.totalorder %s76, 3
      %p798 = pnand %p796, %p797
      %p799 = pneg %p798
      // Predicated region
      $region9: #{tpu_custom_call.1} parent=5 // pred_check
        _
      $region10: #{tpu_custom_call.1} parent=5 // pred_check_branch
        %801 = sbr.rel (%p798) target = $region12
      $region11: #{tpu_custom_call.1} parent=5 // pred_region
        %s802 = ssub.s32 %s76, 1
        // Predicated region
        $region13: #{tpu_custom_call.1} parent=11 // pred_check
          %p803 = pneg %p253
        $region14: #{tpu_custom_call.1} parent=11 // pred_check_branch
          %805 = sbr.rel (%p803) target = $region16
        $region15: #{tpu_custom_call.1} parent=11 // pred_region
          _
        $region16: #{tpu_custom_call.1} parent=11 // pred_fallthru
          _
        // Predicated region
        $region17: #{tpu_custom_call.1} parent=11 // pred_check
          %p806 = pneg %p274
        $region18: #{tpu_custom_call.1} parent=11 // pred_check_branch
          %808 = sbr.rel (%p806) target = $region20
        $region19: #{tpu_custom_call.1} parent=11 // pred_region
          _
        $region20: #{tpu_custom_call.1} parent=11 // pred_fallthru
          _
        // Predicated region
        $region21: #{tpu_custom_call.1} parent=11 // pred_check
          %p809 = pneg %p295
        $region22: #{tpu_custom_call.1} parent=11 // pred_check_branch
          %811 = sbr.rel (%p809) target = $region24
        $region23: #{tpu_custom_call.1} parent=11 // pred_region
          _
        $region24: #{tpu_custom_call.1} parent=11 // pred_fallthru
          _
        // Predicated region
        $region25: #{tpu_custom_call.1} parent=11 // pred_check
          %p812 = pneg %p316
        $region26: #{tpu_custom_call.1} parent=11 // pred_check_branch
          %814 = sbr.rel (%p812) target = $region28
        $region27: #{tpu_custom_call.1} parent=11 // pred_region
          _
        $region28: #{tpu_custom_call.1} parent=11 // pred_fallthru
          _
        // Predicated region
        $region29: #{tpu_custom_call.1} parent=11 // pred_check
          %p815 = pneg %p337
        $region30: #{tpu_custom_call.1} parent=11 // pred_check_branch
          %817 = sbr.rel (%p815) target = $region32
        $region31: #{tpu_custom_call.1} parent=11 // pred_region
          _
        $region32: #{tpu_custom_call.1} parent=11 // pred_fallthru
          _
        // Predicated region
        $region33: #{tpu_custom_call.1} parent=11 // pred_check
          %p818 = pneg %p358
        $region34: #{tpu_custom_call.1} parent=11 // pred_check_branch
          %820 = sbr.rel (%p818) target = $region36
        $region35: #{tpu_custom_call.1} parent=11 // pred_region
          _
        $region36: #{tpu_custom_call.1} parent=11 // pred_fallthru
          _
        // Predicated region
        $region37: #{tpu_custom_call.1} parent=11 // pred_check
          %p821 = pneg %p379
        $region38: #{tpu_custom_call.1} parent=11 // pred_check_branch
          %823 = sbr.rel (%p821) target = $region40
        $region39: #{tpu_custom_call.1} parent=11 // pred_region
          _
        $region40: #{tpu_custom_call.1} parent=11 // pred_fallthru
          _
        // Predicated region
        $region41: #{tpu_custom_call.1} parent=11 // pred_check
          %p824 = pneg %p400
        $region42: #{tpu_custom_call.1} parent=11 // pred_check_branch
          %826 = sbr.rel (%p824) target = $region44
        $region43: #{tpu_custom_call.1} parent=11 // pred_region
          _
        $region44: #{tpu_custom_call.1} parent=11 // pred_fallthru
          _
        // Predicated region
        $region45: #{tpu_custom_call.1} parent=11 // pred_check
          %p827 = pneg %p421
        $region46: #{tpu_custom_call.1} parent=11 // pred_check_branch
          %829 = sbr.rel (%p827) target = $region48
        $region47: #{tpu_custom_call.1} parent=11 // pred_region
          _
        $region48: #{tpu_custom_call.1} parent=11 // pred_fallthru
          _
        // Predicated region
        $region49: #{tpu_custom_call.1} parent=11 // pred_check
          %p830 = pneg %p442
        $region50: #{tpu_custom_call.1} parent=11 // pred_check_branch
          %832 = sbr.rel (%p830) target = $region52
        $region51: #{tpu_custom_call.1} parent=11 // pred_region
          _
        $region52: #{tpu_custom_call.1} parent=11 // pred_fallthru
          _
        // Predicated region
        $region53: #{tpu_custom_call.1} parent=11 // pred_check
          %p833 = pneg %p463
        $region54: #{tpu_custom_call.1} parent=11 // pred_check_branch
          %835 = sbr.rel (%p833) target = $region56
        $region55: #{tpu_custom_call.1} parent=11 // pred_region
          _
        $region56: #{tpu_custom_call.1} parent=11 // pred_fallthru
          _
        // Predicated region
        $region57: #{tpu_custom_call.1} parent=11 // pred_check
          %p836 = pneg %p484
        $region58: #{tpu_custom_call.1} parent=11 // pred_check_branch
          %838 = sbr.rel (%p836) target = $region60
        $region59: #{tpu_custom_call.1} parent=11 // pred_region
          _
        $region60: #{tpu_custom_call.1} parent=11 // pred_fallthru
          _
        // Predicated region
        $region61: #{tpu_custom_call.1} parent=11 // pred_check
          %p839 = pneg %p505
        $region62: #{tpu_custom_call.1} parent=11 // pred_check_branch
          %841 = sbr.rel (%p839) target = $region64
        $region63: #{tpu_custom_call.1} parent=11 // pred_region
          _
        $region64: #{tpu_custom_call.1} parent=11 // pred_fallthru
          _
        // Predicated region
        $region65: #{tpu_custom_call.1} parent=11 // pred_check
          %p842 = pneg %p526
        $region66: #{tpu_custom_call.1} parent=11 // pred_check_branch
          %844 = sbr.rel (%p842) target = $region68
        $region67: #{tpu_custom_call.1} parent=11 // pred_region
          _
        $region68: #{tpu_custom_call.1} parent=11 // pred_fallthru
          _
        // Predicated region
        $region69: #{tpu_custom_call.1} parent=11 // pred_check
          %p845 = pneg %p547
        $region70: #{tpu_custom_call.1} parent=11 // pred_check_branch
          %847 = sbr.rel (%p845) target = $region72
        $region71: #{tpu_custom_call.1} parent=11 // pred_region
          _
        $region72: #{tpu_custom_call.1} parent=11 // pred_fallthru
          _
        // Predicated region
        $region73: #{tpu_custom_call.1} parent=11 // pred_check
          %p848 = pneg %p568
        $region74: #{tpu_custom_call.1} parent=11 // pred_check_branch
          %850 = sbr.rel (%p848) target = $region76
        $region75: #{tpu_custom_call.1} parent=11 // pred_region
          _
        $region76: #{tpu_custom_call.1} parent=11 // pred_fallthru
          _
        // Predicated region
        $region77: #{tpu_custom_call.1} parent=11 // pred_check
          %p851 = pneg %p589
        $region78: #{tpu_custom_call.1} parent=11 // pred_check_branch
          %853 = sbr.rel (%p851) target = $region80
        $region79: #{tpu_custom_call.1} parent=11 // pred_region
          _
        $region80: #{tpu_custom_call.1} parent=11 // pred_fallthru
          _
        // Predicated region
        $region81: #{tpu_custom_call.1} parent=11 // pred_check
          %p854 = pneg %p610
        $region82: #{tpu_custom_call.1} parent=11 // pred_check_branch
          %856 = sbr.rel (%p854) target = $region84
        $region83: #{tpu_custom_call.1} parent=11 // pred_region
          _
        $region84: #{tpu_custom_call.1} parent=11 // pred_fallthru
          _
        // Predicated region
        $region85: #{tpu_custom_call.1} parent=11 // pred_check
          %p857 = pneg %p631
        $region86: #{tpu_custom_call.1} parent=11 // pred_check_branch
          %859 = sbr.rel (%p857) target = $region88
        $region87: #{tpu_custom_call.1} parent=11 // pred_region
          _
        $region88: #{tpu_custom_call.1} parent=11 // pred_fallthru
          _
        // Predicated region
        $region89: #{tpu_custom_call.1} parent=11 // pred_check
          %p860 = pneg %p652
        $region90: #{tpu_custom_call.1} parent=11 // pred_check_branch
          %862 = sbr.rel (%p860) target = $region92
        $region91: #{tpu_custom_call.1} parent=11 // pred_region
          _
        $region92: #{tpu_custom_call.1} parent=11 // pred_fallthru
          _
        // Predicated region
        $region93: #{tpu_custom_call.1} parent=11 // pred_check
          %p863 = pneg %p673
        $region94: #{tpu_custom_call.1} parent=11 // pred_check_branch
          %865 = sbr.rel (%p863) target = $region96
        $region95: #{tpu_custom_call.1} parent=11 // pred_region
          _
        $region96: #{tpu_custom_call.1} parent=11 // pred_fallthru
          _
        // Predicated region
        $region97: #{tpu_custom_call.1} parent=11 // pred_check
          %p866 = pneg %p694
        $region98: #{tpu_custom_call.1} parent=11 // pred_check_branch
          %868 = sbr.rel (%p866) target = $region100
        $region99: #{tpu_custom_call.1} parent=11 // pred_region
          _
        $region100: #{tpu_custom_call.1} parent=11 // pred_fallthru
          _
        // Predicated region
        $region101: #{tpu_custom_call.1} parent=11 // pred_check
          %p869 = pneg %p715
        $region102: #{tpu_custom_call.1} parent=11 // pred_check_branch
          %871 = sbr.rel (%p869) target = $region104
        $region103: #{tpu_custom_call.1} parent=11 // pred_region
          _
        $region104: #{tpu_custom_call.1} parent=11 // pred_fallthru
          _
        // Predicated region
        $region105: #{tpu_custom_call.1} parent=11 // pred_check
          %p872 = pneg %p736
        $region106: #{tpu_custom_call.1} parent=11 // pred_check_branch
          %874 = sbr.rel (%p872) target = $region108
        $region107: #{tpu_custom_call.1} parent=11 // pred_region
          _
        $region108: #{tpu_custom_call.1} parent=11 // pred_fallthru
          _
      $region12: #{tpu_custom_call.1} parent=5 // pred_fallthru
        _
      %p875 = scmp.lt.s32.totalorder %s76, 2
      // Predicated region
      $region109: #{tpu_custom_call.1} parent=5 // pred_check
        %p876 = pneg %p875
      $region110: #{tpu_custom_call.1} parent=5 // pred_check_branch
        %878 = sbr.rel (%p876) target = $region112
      $region111: #{tpu_custom_call.1} parent=5 // pred_region
        // Predicated region
        $region113: #{tpu_custom_call.1} parent=111 // pred_check
          %p879 = pneg %p96
        $region114: #{tpu_custom_call.1} parent=111 // pred_check_branch
          %881 = sbr.rel (%p879) target = $region116
        $region115: #{tpu_custom_call.1} parent=111 // pred_region
          %p882 = scmp.lt.s32.totalorder %s76, 1
          %s883 = scalar_select %p882, %s76, 1
          %s884 = smul.addr %s883, 8
          %s885 = scalar_lea.vmem %s1, %s884
        $region116: #{tpu_custom_call.1} parent=111 // pred_fallthru
          _
        // Predicated region
        $region117: #{tpu_custom_call.1} parent=111 // pred_check
          %p886 = pneg %p122
        $region118: #{tpu_custom_call.1} parent=111 // pred_check_branch
          %888 = sbr.rel (%p886) target = $region120
        $region119: #{tpu_custom_call.1} parent=111 // pred_region
          %p889 = scmp.lt.s32.totalorder %s76, 1
          %s890 = scalar_select %p889, %s76, 1
          %s891 = smul.addr %s890, 2
          %s892 = smul.addr %s891, 8
          %s893 = scalar_lea.vmem %s3, %s892
        $region120: #{tpu_custom_call.1} parent=111 // pred_fallthru
          _
        // Predicated region
        $region121: #{tpu_custom_call.1} parent=111 // pred_check
          %p894 = pneg %p148
        $region122: #{tpu_custom_call.1} parent=111 // pred_check_branch
          %896 = sbr.rel (%p894) target = $region124
        $region123: #{tpu_custom_call.1} parent=111 // pred_region
          %p897 = scmp.lt.s32.totalorder %s76, 1
          %s898 = scalar_select %p897, %s76, 1
          %s899 = smul.addr %s898, 8
          %s900 = scalar_lea.vmem %s5, %s899
        $region124: #{tpu_custom_call.1} parent=111 // pred_fallthru
          _
        // Predicated region
        $region125: #{tpu_custom_call.1} parent=111 // pred_check
          %p901 = pneg %p174
        $region126: #{tpu_custom_call.1} parent=111 // pred_check_branch
          %903 = sbr.rel (%p901) target = $region128
        $region127: #{tpu_custom_call.1} parent=111 // pred_region
          %p904 = scmp.lt.s32.totalorder %s76, 1
          %s905 = scalar_select %p904, %s76, 1
          %s906 = scalar_lea.vmem %s7, %s905
        $region128: #{tpu_custom_call.1} parent=111 // pred_fallthru
          _
        // Predicated region
        $region129: #{tpu_custom_call.1} parent=111 // pred_check
          %p907 = pneg %p200
        $region130: #{tpu_custom_call.1} parent=111 // pred_check_branch
          %909 = sbr.rel (%p907) target = $region132
        $region131: #{tpu_custom_call.1} parent=111 // pred_region
          %p910 = scmp.lt.s32.totalorder %s76, 1
          %s911 = scalar_select %p910, %s76, 1
          %s912 = smul.addr %s911, 2
          %s913 = smul.addr %s912, 8
          %s914 = scalar_lea.vmem %s9, %s913
        $region132: #{tpu_custom_call.1} parent=111 // pred_fallthru
          _
        // Predicated region
        $region133: #{tpu_custom_call.1} parent=111 // pred_check
          %p915 = pneg %p226
        $region134: #{tpu_custom_call.1} parent=111 // pred_check_branch
          %917 = sbr.rel (%p915) target = $region136
        $region135: #{tpu_custom_call.1} parent=111 // pred_region
          %p918 = scmp.lt.s32.totalorder %s76, 1
          %s919 = scalar_select %p918, %s76, 1
          %s920 = scalar_lea.vmem %s11, %s919
        $region136: #{tpu_custom_call.1} parent=111 // pred_fallthru
          _
      $region112: #{tpu_custom_call.1} parent=5 // pred_fallthru
        _
      %p921 = scmp.le.s32.totalorder 1, %s76
      %p922 = scmp.lt.s32.totalorder %s76, 3
      %p923 = pnand %p921, %p922
      %p924 = pneg %p923
      // Predicated region
      $region137: #{tpu_custom_call.1} parent=5 // pred_check
        _
      $region138: #{tpu_custom_call.1} parent=5 // pred_check_branch
        %926 = sbr.rel (%p923) target = $region140
      $region139: #{tpu_custom_call.1} parent=5 // pred_region
        %s927 = ssub.s32 %s76, 1
        %p928 = scmp.lt.s32.totalorder %s81, 1
        %s929 = scalar_select %p928, %s81, 1
        %s930 = smul.addr %s929, 8
        %s931 = scalar_lea.vmem %s1, %s930
        %p932 = pneg %p102
        %p933 = pneg %p99
        %p934 = scmp.lt.s32.totalorder %s81, 1
        %s935 = scalar_select %p934, %s81, 1
        %s936 = smul.addr %s935, 2
        %s937 = smul.addr %s936, 8
        %s938 = scalar_lea.vmem %s3, %s937
        %p939 = pneg %p128
        %p940 = pneg %p125
        %p941 = scmp.lt.s32.totalorder %s81, 1
        %s942 = scalar_select %p941, %s81, 1
        %s943 = smul.addr %s942, 8
        %s944 = scalar_lea.vmem %s5, %s943
        %p945 = pneg %p154
        %p946 = pneg %p151
        %p947 = scmp.lt.s32.totalorder %s81, 1
        %s948 = scalar_select %p947, %s81, 1
        %s949 = scalar_lea.vmem %s7, %s948
        %p950 = pneg %p180
        %p951 = pneg %p177
        %p952 = scmp.lt.s32.totalorder %s81, 1
        %s953 = scalar_select %p952, %s81, 1
        %s954 = smul.addr %s953, 2
        %s955 = smul.addr %s954, 8
        %s956 = scalar_lea.vmem %s9, %s955
        %p957 = pneg %p206
        %p958 = pneg %p203
        %p959 = scmp.lt.s32.totalorder %s81, 1
        %s960 = scalar_select %p959, %s81, 1
        %s961 = scalar_lea.vmem %s11, %s960
        %p962 = pneg %p232
        %p963 = pneg %p229
        %p964 = pneg %p253
        %p965 = pneg %p250
        %p966 = pneg %p274
        %p967 = pneg %p271
        %p968 = pneg %p295
        %p969 = pneg %p292
        %p970 = pneg %p316
        %p971 = pneg %p313
        %p972 = pneg %p337
        %p973 = pneg %p334
        %p974 = pneg %p358
        %p975 = pneg %p355
        %p976 = pneg %p379
        %p977 = pneg %p376
        %p978 = pneg %p400
        %p979 = pneg %p397
        %p980 = pneg %p421
        %p981 = pneg %p418
        %p982 = pneg %p442
        %p983 = pneg %p439
        %p984 = pneg %p463
        %p985 = pneg %p460
        %p986 = pneg %p484
        %p987 = pneg %p481
        %p988 = pneg %p505
        %p989 = pneg %p502
        %p990 = pneg %p526
        %p991 = pneg %p523
        %p992 = pneg %p547
        %p993 = pneg %p544
        %p994 = pneg %p568
        %p995 = pneg %p565
        %p996 = pneg %p589
        %p997 = pneg %p586
        %p998 = pneg %p610
        %p999 = pneg %p607
        %p1000 = pneg %p631
        %p1001 = pneg %p628
        %p1002 = pneg %p652
        %p1003 = pneg %p649
        %p1004 = pneg %p673
        %p1005 = pneg %p670
        %p1006 = pneg %p694
        %p1007 = pneg %p691
        %p1008 = pneg %p715
        %p1009 = pneg %p712
        %p1010 = pneg %p736
        %p1011 = pneg %p733
        %p1012 = pneg %p762
        %p1013 = pneg %p759
        %s1014 = sand.u32 %s749, 1
        %s1015 = scalar_lea.sflag [#allocation5], %s1014
        %s1016 = sand.u32 %s749, 1
        %s1017 = smul.addr %s1016, 8
        %s1018 = scalar_lea.vmem [#allocation4], %s1017
        %p1019 = pneg %p788
        %p1020 = pneg %p785
        %s1021 = sand.u32 %s775, 1
        %s1022 = scalar_lea.sflag [#allocation7], %s1021
        %s1023 = sand.u32 %s775, 1
        %s1024 = smul.addr %s1023, 16
        %s1025 = scalar_lea.vmem [#allocation6], %s1024
        %p1026 = scmp.lt.s32.totalorder %s81, 1
        %s1027 = scalar_select %p1026, %s81, 1
        %s1028 = smul.addr %s1027, 8
        %s1029 = scalar_lea.vmem %s1, %s1028
        %p1030 = scmp.lt.s32.totalorder %s81, 1
        %s1031 = scalar_select %p1030, %s81, 1
        %s1032 = smul.addr %s1031, 2
        %s1033 = smul.addr %s1032, 8
        %s1034 = scalar_lea.vmem %s3, %s1033
        %p1035 = scmp.lt.s32.totalorder %s81, 1
        %s1036 = scalar_select %p1035, %s81, 1
        %s1037 = smul.addr %s1036, 8
        %s1038 = scalar_lea.vmem %s5, %s1037
        %p1039 = scmp.lt.s32.totalorder %s81, 1
        %s1040 = scalar_select %p1039, %s81, 1
        %s1041 = scalar_lea.vmem %s7, %s1040
        %p1042 = scmp.lt.s32.totalorder %s81, 1
        %s1043 = scalar_select %p1042, %s81, 1
        %s1044 = smul.addr %s1043, 2
        %s1045 = smul.addr %s1044, 8
        %s1046 = scalar_lea.vmem %s9, %s1045
        %p1047 = scmp.lt.s32.totalorder %s81, 1
        %s1048 = scalar_select %p1047, %s81, 1
        %s1049 = scalar_lea.vmem %s11, %s1048
        %v1051 = vld [vmem:[%s1029] sm:$0xff]
        %v1052 = vld [vmem:[%s1034] sm:$0xff]
        %v1053 = vld [vmem:[%s1034 + $0x8] sm:$0xff]
        %v1054 = vld [vmem:[%s13] sm:$0x1]
        %v1055 = vld [vmem:[%s15] sm:$0x1]
        %vm1056 = vcmask 261120
        %v1057 = vsel %vm1056, %v1051, 0.0
        %1058 = vadd.xlane.f32.xlu0 %v1057
        %v1059 = vpop.xlane.xlu0 %1058
        %v1060 = vrcp.pop 32.0
        %v1061 = vmul.f32 32.0, %v1060
        %v1062 = vsub.f32 1.0, %v1061
        %v1063 = vmul.f32 %v1060, %v1062
        %v1064 = vadd.f32 %v1060, %v1063
        %vm1065 = vweird.f32 %v1060
        %v1066 = vsel %vm1065, %v1060, %v1064
        %v1067 = vmul.f32 %v1059, %v1066
        %v1068 = vsub.f32 %v1051, %v1067
        %v1069 = vmul.f32 %v1068, %v1068
        %v1070 = vsel %vm1056, %v1069, 0.0
        %1071 = vadd.xlane.f32.xlu0 %v1070
        %v1072 = vpop.xlane.xlu0 %1071
        %v1073 = vmul.f32 %v1072, %v1066
        %v1074 = vadd.f32 %v1073, 1e-05
        %v1075 = vrsqrt.pop %v1074
        %v1076 = vmul.f32 %v1075, %v1074
        %v1077 = vmul.f32 %v1076, %v1075
        %v1078 = vmul.f32 0.5, %v1077
        %v1079 = vsub.f32 1.5, %v1078
        %v1080 = vmul.f32 %v1075, %v1079
        %vm1081 = vweird.f32 %v1074
        %vm1082 = vweird.f32 %v1075
        %vm1083 = vmor %vm1081, %vm1082
        %v1084 = vsel %vm1083, %v1075, %v1080
        %v1085 = vmul.f32 %v1068, %v1084
        %v1087 = vperm.slane %v1054, 0
        %v1089 = vmul.f32 %v1085, %v1087
        %v1091 = vperm.slane %v1055, 0
        %v1093 = vadd.f32 %v1089, %v1091
        %v1094 = vpack.c.bf16 %v1093, %v1093
        %v1095 = vld [vmem:[%s17] sm:$0x1]
        %v1096 = vld [vmem:[%s19] sm:$0x1]
        %vm1097 = vcmask 392192
        %v1098 = vsel %vm1097, %v1052, 0.0
        %1099 = vadd.xlane.f32.xlu0 %v1098
        %v1100 = vpop.xlane.xlu0 %1099
        %v1101 = vsel %vm1097, %v1053, 0.0
        %1102 = vadd.xlane.f32.xlu0 %v1101
        %v1103 = vpop.xlane.xlu0 %1102
        %v1104 = vrcp.pop 48.0
        %v1105 = vmul.f32 48.0, %v1104
        %v1106 = vsub.f32 1.0, %v1105
        %v1107 = vmul.f32 %v1104, %v1106
        %v1108 = vadd.f32 %v1104, %v1107
        %vm1109 = vweird.f32 %v1104
        %v1110 = vsel %vm1109, %v1104, %v1108
        %v1111 = vmul.f32 %v1100, %v1110
        %v1112 = vmul.f32 %v1103, %v1110
        %v1113 = vsub.f32 %v1052, %v1111
        %v1114 = vsub.f32 %v1053, %v1112
        %v1115 = vmul.f32 %v1113, %v1113
        %v1116 = vmul.f32 %v1114, %v1114
        %v1117 = vsel %vm1097, %v1115, 0.0
        %1118 = vadd.xlane.f32.xlu0 %v1117
        %v1119 = vpop.xlane.xlu0 %1118
        %v1120 = vsel %vm1097, %v1116, 0.0
        %1121 = vadd.xlane.f32.xlu0 %v1120
        %v1122 = vpop.xlane.xlu0 %1121
        %v1123 = vmul.f32 %v1119, %v1110
        %v1124 = vmul.f32 %v1122, %v1110
        %v1125 = vadd.f32 %v1123, 1e-05
        %v1126 = vadd.f32 %v1124, 1e-05
        %v1127 = vrsqrt.pop %v1125
        %v1128 = vmul.f32 %v1127, %v1125
        %v1129 = vmul.f32 %v1128, %v1127
        %v1130 = vmul.f32 0.5, %v1129
        %v1131 = vsub.f32 1.5, %v1130
        %v1132 = vmul.f32 %v1127, %v1131
        %vm1133 = vweird.f32 %v1125
        %vm1134 = vweird.f32 %v1127
        %vm1135 = vmor %vm1133, %vm1134
        %v1136 = vsel %vm1135, %v1127, %v1132
        %v1137 = vrsqrt.pop %v1126
        %v1138 = vmul.f32 %v1137, %v1126
        %v1139 = vmul.f32 %v1138, %v1137
        %v1140 = vmul.f32 0.5, %v1139
        %v1141 = vsub.f32 1.5, %v1140
        %v1142 = vmul.f32 %v1137, %v1141
        %vm1143 = vweird.f32 %v1126
        %vm1144 = vweird.f32 %v1137
        %vm1145 = vmor %vm1143, %vm1144
        %v1146 = vsel %vm1145, %v1137, %v1142
        %v1147 = vmul.f32 %v1113, %v1136
        %v1148 = vmul.f32 %v1114, %v1146
        %v1150 = vperm.slane %v1095, 0
        %v1152 = vmul.f32 %v1147, %v1150
        %v1153 = vmul.f32 %v1148, %v1150
        %v1155 = vperm.slane %v1096, 0
        %v1157 = vadd.f32 %v1152, %v1155
        %v1158 = vadd.f32 %v1153, %v1155
        %v1159 = vpack.c.bf16 %v1158, %v1157
        %v1160 = vld [vmem:[%s21] sm:$0xf]
        %v1161 = vld [vmem:[%s21 + $0x4] sm:$0xf]
        %v1162 = vld [vmem:[%s21 + $0x8] sm:$0xf]
        %v1163 = vld [vmem:[%s21 + $0xc] sm:$0xf]
        %v1168 = vunpack.c.l.b16 %v1160
        %v1169 = vunpack.c.l.b16 %v1161
        %v1170 = vunpack.c.l.b16 %v1162
        %v1171 = vunpack.c.l.b16 %v1163
        %v1172 = vpack.c.b16 %v1169, %v1168
        %v1173 = vpack.c.b16 %v1171, %v1170
        %v1177 = vsel %vm1056, %v1094, 0
        %1179 = vmatpush.bf16.msra.mxu0 0
        %1180 = vmatpush.bf16.msra.mxu0 0
        %1181 = vmatpush.bf16.msra.mxu0 0
        %1182 = vmatpush.bf16.msra.mxu0 0
        %1183 = vmatpush.bf16.msra.mxu0 0
        %1184 = vmatpush.bf16.msra.mxu0 0
        %1185 = vmatpush.bf16.msra.mxu0 %v1173
        %1186 = vmatpush.bf16.msra.mxu0 %v1172
        %1187 = vmatmul.bf16.gmra.mxu0 %v1177
        %v1188 = vpop.f32.mrf.mxu0
        %v1189 = vadd.f32 0.0, %v1188
        %v1190 = vpop.f32.mrf.mxu0
        %1191 = vdwg.mxu0
        %v1192 = vpack.c.bf16 %v1189, %v1189
        %v1193 = vld [vmem:[%s23] sm:$0xf]
        %v1194 = vld [vmem:[%s23 + $0x4] sm:$0xf]
        %v1195 = vld [vmem:[%s23 + $0x8] sm:$0xf]
        %v1196 = vld [vmem:[%s23 + $0xc] sm:$0xf]
        %v1201 = vunpack.c.l.b16 %v1193
        %v1202 = vunpack.c.l.b16 %v1194
        %v1203 = vunpack.c.l.b16 %v1195
        %v1204 = vunpack.c.l.b16 %v1196
        %v1205 = vpack.c.b16 %v1202, %v1201
        %v1206 = vpack.c.b16 %v1204, %v1203
        %1209 = vmatpush.bf16.msra.mxu0 0
        %1210 = vmatpush.bf16.msra.mxu0 0
        %1211 = vmatpush.bf16.msra.mxu0 0
        %1212 = vmatpush.bf16.msra.mxu0 0
        %1213 = vmatpush.bf16.msra.mxu0 0
        %1214 = vmatpush.bf16.msra.mxu0 0
        %1215 = vmatpush.bf16.msra.mxu0 %v1206
        %1216 = vmatpush.bf16.msra.mxu0 %v1205
        %1217 = vmatmul.bf16.gmra.mxu0 %v1177
        %v1218 = vpop.f32.mrf.mxu0
        %v1219 = vadd.f32 0.0, %v1218
        %v1220 = vpop.f32.mrf.mxu0
        %1221 = vdwg.mxu0
        %v1222 = vpack.c.bf16 %v1219, %v1219
        %v1223 = vld [vmem:[%s25] sm:$0xf]
        %v1224 = vld [vmem:[%s25 + $0x4] sm:$0xf]
        %v1225 = vld [vmem:[%s25 + $0x8] sm:$0xf]
        %v1226 = vld [vmem:[%s25 + $0xc] sm:$0xf]
        %v1227 = vld [vmem:[%s25 + $0x10] sm:$0xf]
        %v1228 = vld [vmem:[%s25 + $0x14] sm:$0xf]
        %v1235 = vunpack.c.l.b16 %v1223
        %v1236 = vunpack.c.l.b16 %v1224
        %v1237 = vunpack.c.l.b16 %v1225
        %v1238 = vunpack.c.l.b16 %v1226
        %v1239 = vunpack.c.l.b16 %v1227
        %v1240 = vunpack.c.l.b16 %v1228
        %v1241 = vpack.c.b16 %v1236, %v1235
        %v1242 = vpack.c.b16 %v1238, %v1237
        %v1243 = vpack.c.b16 %v1240, %v1239
        %v1248 = vsel %vm1097, %v1159, 0
        %1250 = vmatpush.bf16.msra.mxu0 0
        %1251 = vmatpush.bf16.msra.mxu0 0
        %1252 = vmatpush.bf16.msra.mxu0 0
        %1253 = vmatpush.bf16.msra.mxu0 0
        %1254 = vmatpush.bf16.msra.mxu0 0
        %1255 = vmatpush.bf16.msra.mxu0 %v1243
        %1256 = vmatpush.bf16.msra.mxu0 %v1242
        %1257 = vmatpush.bf16.msra.mxu0 %v1241
        %1258 = vmatmul.bf16.gmra.mxu0 %v1248
        %v1259 = vpop.f32.mrf.mxu0
        %v1260 = vadd.f32 0.0, %v1259
        %v1261 = vpop.f32.mrf.mxu0
        %v1262 = vadd.f32 0.0, %v1261
        %1263 = vdwg.mxu0
        %v1264 = vpack.c.bf16 %v1260, %v1260
        %v1265 = vpack.c.bf16 %v1262, %v1262
        %v1266 = vld [vmem:[%s27] sm:$0xf]
        %v1267 = vld [vmem:[%s27 + $0x4] sm:$0xf]
        %v1268 = vld [vmem:[%s27 + $0x8] sm:$0xf]
        %v1269 = vld [vmem:[%s27 + $0xc] sm:$0xf]
        %v1270 = vld [vmem:[%s27 + $0x10] sm:$0xf]
        %v1271 = vld [vmem:[%s27 + $0x14] sm:$0xf]
        %v1278 = vunpack.c.l.b16 %v1266
        %v1279 = vunpack.c.l.b16 %v1267
        %v1280 = vunpack.c.l.b16 %v1268
        %v1281 = vunpack.c.l.b16 %v1269
        %v1282 = vunpack.c.l.b16 %v1270
        %v1283 = vunpack.c.l.b16 %v1271
        %v1284 = vpack.c.b16 %v1279, %v1278
        %v1285 = vpack.c.b16 %v1281, %v1280
        %v1286 = vpack.c.b16 %v1283, %v1282
        %1290 = vmatpush.bf16.msra.mxu0 0
        %1291 = vmatpush.bf16.msra.mxu0 0
        %1292 = vmatpush.bf16.msra.mxu0 0
        %1293 = vmatpush.bf16.msra.mxu0 0
        %1294 = vmatpush.bf16.msra.mxu0 0
        %1295 = vmatpush.bf16.msra.mxu0 %v1286
        %1296 = vmatpush.bf16.msra.mxu0 %v1285
        %1297 = vmatpush.bf16.msra.mxu0 %v1284
        %1298 = vmatmul.bf16.gmra.mxu0 %v1248
        %v1299 = vpop.f32.mrf.mxu0
        %v1300 = vadd.f32 0.0, %v1299
        %v1301 = vpop.f32.mrf.mxu0
        %v1302 = vadd.f32 0.0, %v1301
        %1303 = vdwg.mxu0
        %v1304 = vpack.c.bf16 %v1300, %v1300
        %v1305 = vpack.c.bf16 %v1302, %v1302
        %v1306 = vld [vmem:[%s1038] sm:$0xff]
        %v1307 = vld [vmem:[%s1041] sm:$0x1]
        %1309 = vset.pattern.permute.xlu0 0
        %1310 = vperm.xlu0 %1309, %v1306
        %v1311 = vpop.permute.xlu0 %1310
        %v1314 = vperm.slane %v1307, 0
        %v1316 = vmul.f32 %v1311, %v1314
        %vm1317 = vcmp.gt.f32.partialorder %v1316, 0.0
        %v1318 = vld [vmem:[%s1046] sm:$0xff]
        %v1319 = vld [vmem:[%s1046 + $0x8] sm:$0xff]
        %v1320 = vld [vmem:[%s1049] sm:$0x1]
        %1322 = vset.pattern.permute.xlu0 0
        %1323 = vperm.xlu0 %1322, %v1318
        %v1324 = vpop.permute.xlu0 %1323
        %1327 = vset.pattern.permute.xlu0 0
        %1328 = vperm.xlu0 %1327, %v1319
        %v1329 = vpop.permute.xlu0 %1328
        %v1332 = vperm.slane %v1320, 0
        %v1334 = vmul.f32 %v1324, %v1332
        %v1335 = vmul.f32 %v1329, %v1332
        %vm1336 = vcmp.gt.f32.partialorder %v1334, 0.0
        %vm1337 = vcmp.gt.f32.partialorder %v1335, 0.0
        %v1340 = vunpack.c.l.b16 %v1264
        %v1341 = vunpack.c.l.b16 %v1265
        %v1342 = vpack.c.b16 %v1341, %v1340
        %vm1343 = vcmask 130048
        %v1345 = vsel %vm1343, %v1192, 0
        %v1348 = vsel %vm1343, %v1342, 0
        %1350 = vmatpush.bf16.xpose.msra.mxu0 0
        %1351 = vmatpush.bf16.xpose.msra.mxu0 0
        %1352 = vmatpush.bf16.xpose.msra.mxu0 0
        %1353 = vmatpush.bf16.xpose.msra.mxu0 0
        %1354 = vmatpush.bf16.xpose.msra.mxu0 0
        %1355 = vmatpush.bf16.xpose.msra.mxu0 0
        %1356 = vmatpush.bf16.xpose.msra.mxu0 0
        %1357 = vmatpush.bf16.xpose.msra.mxu0 %v1348
        %1358 = vmatmul.bf16.gmra.mxu0 %v1345
        %v1359 = vpop.f32.mrf.mxu0
        %v1360 = vadd.f32 0.0, %v1359
        %v1361 = vpop.f32.mrf.mxu0
        %1362 = vdwg.mxu0
        %v1363 = vmul.f32 %v1360, 0.25
        %v1364 = vsel %vm1317, %v1363, -3.4028235e+38
        %v1365 = vsel %vm1343, %v1364, -inf
        %1366 = vmax.xlane.f32.xlu0 %v1365
        %v1367 = vpop.xlane.xlu0 %1366
        %v1368 = vsub.f32 %v1364, %v1367
        %v1369 = vmul.f32 %v1368, 1.442695
        %v1370 = vpow.pop %v1369
        %v1371 = vsel %vm1343, %v1370, 0.0
        %1372 = vadd.xlane.f32.xlu0 %v1371
        %v1373 = vpop.xlane.xlu0 %1372
        %v1374 = vrcp.pop %v1373
        %v1375 = vmul.f32 %v1370, %v1374
        %1376 = vmatpush.bf16.xpose.msra.mxu0 0
        %1377 = vmatpush.bf16.xpose.msra.mxu0 0
        %1378 = vmatpush.bf16.xpose.msra.mxu0 0
        %1379 = vmatpush.bf16.xpose.msra.mxu0 0
        %1380 = vmatpush.bf16.xpose.msra.mxu0 0
        %1381 = vmatpush.bf16.xpose.msra.mxu0 0
        %1382 = vmatpush.bf16.xpose.msra.mxu0 0
        %1383 = vmatpush.bf16.xpose.msra.mxu0 %v1345
        %1384 = vmatmul.bf16.gmra.mxu0 %v1348
        %v1385 = vpop.f32.mrf.mxu0
        %v1386 = vadd.f32 0.0, %v1385
        %v1387 = vpop.f32.mrf.mxu0
        %v1388 = vadd.f32 0.0, %v1387
        %1389 = vdwg.mxu0
        %v1390 = vmul.f32 %v1386, 0.25
        %v1391 = vmul.f32 %v1388, 0.25
        %v1392 = vsel %vm1336, %v1390, -3.4028235e+38
        %v1393 = vsel %vm1337, %v1391, -3.4028235e+38
        %vm1394 = vcmask 64512
        %v1395 = vsel %vm1394, %v1392, -inf
        %1396 = vmax.xlane.f32.xlu0 %v1395
        %v1397 = vpop.xlane.xlu0 %1396
        %v1398 = vsel %vm1394, %v1393, -inf
        %1399 = vmax.xlane.f32.xlu0 %v1398
        %v1400 = vpop.xlane.xlu0 %1399
        %v1401 = vsub.f32 %v1392, %v1397
        %v1402 = vsub.f32 %v1393, %v1400
        %v1403 = vmul.f32 %v1401, 1.442695
        %v1404 = vpow.pop %v1403
        %v1405 = vmul.f32 %v1402, 1.442695
        %v1406 = vpow.pop %v1405
        %v1407 = vsel %vm1394, %v1404, 0.0
        %1408 = vadd.xlane.f32.xlu0 %v1407
        %v1409 = vpop.xlane.xlu0 %1408
        %v1410 = vsel %vm1394, %v1406, 0.0
        %1411 = vadd.xlane.f32.xlu0 %v1410
        %v1412 = vpop.xlane.xlu0 %1411
        %v1413 = vrcp.pop %v1409
        %v1414 = vrcp.pop %v1412
        %v1415 = vmul.f32 %v1404, %v1413
        %v1416 = vmul.f32 %v1406, %v1414
        %v1417 = vpack.c.bf16 %v1375, %v1375
        %v1420 = vunpack.c.l.b16 %v1304
        %v1421 = vunpack.c.l.b16 %v1305
        %v1422 = vpack.c.b16 %v1421, %v1420
        %v1425 = vsel %vm1343, %v1417, 0
        %1427 = vmatpush.bf16.msra.mxu0 0
        %1428 = vmatpush.bf16.msra.mxu0 0
        %1429 = vmatpush.bf16.msra.mxu0 0
        %1430 = vmatpush.bf16.msra.mxu0 0
        %1431 = vmatpush.bf16.msra.mxu0 0
        %1432 = vmatpush.bf16.msra.mxu0 0
        %1433 = vmatpush.bf16.msra.mxu0 0
        %1434 = vmatpush.bf16.msra.mxu0 %v1422
        %1435 = vmatmul.bf16.gmra.mxu0 %v1425
        %v1436 = vpop.f32.mrf.mxu0
        %v1437 = vadd.f32 0.0, %v1436
        %v1438 = vpop.f32.mrf.mxu0
        %1439 = vdwg.mxu0
        %v1440 = vpack.c.bf16 %v1415, %v1415
        %v1441 = vpack.c.bf16 %v1416, %v1416
        %v1444 = vunpack.c.l.b16 %v1440
        %v1445 = vunpack.c.l.b16 %v1441
        %v1446 = vpack.c.b16 %v1445, %v1444
        %v1448 = vsel %vm1394, %v1446, 0
        %vm1450 = vcmask 1043456
        %v1452 = vsel %vm1450, %v1222, 0
        %1454 = vmatpush.bf16.msra.mxu0 0
        %1455 = vmatpush.bf16.msra.mxu0 0
        %1456 = vmatpush.bf16.msra.mxu0 0
        %1457 = vmatpush.bf16.msra.mxu0 0
        %1458 = vmatpush.bf16.msra.mxu0 0
        %1459 = vmatpush.bf16.msra.mxu0 0
        %1460 = vmatpush.bf16.msra.mxu0 0
        %1461 = vmatpush.bf16.msra.mxu0 %v1452
        %1462 = vmatmul.bf16.gmra.mxu0 %v1448
        %v1463 = vpop.f32.mrf.mxu0
        %v1464 = vadd.f32 0.0, %v1463
        %v1465 = vpop.f32.mrf.mxu0
        %v1466 = vadd.f32 0.0, %v1465
        %1467 = vdwg.mxu0
        %1468 = vst.msk [vmem:[#allocation2] sm:$0xff] %vm1343, %v1437
        %1469 = vst.msk [vmem:[#allocation3] sm:$0xff] %vm1343, %v1464
        %1470 = vst.msk [vmem:[#allocation3 + $0x8] sm:$0xff] %vm1343, %v1466
        %v1472 = vunpack.c.l.b16 %v1192
        %v1473 = vpack.c.b16 %v1472, %v1472
        %1474 = vrot.lane.b32.xlu0 %v1473, 112
        %v1475 = vpop.permute.xlu0 %1474
        %1476 = vrot.lane.b32.xlu0 %v1342, 112
        %v1477 = vpop.permute.xlu0 %1476
        %v1479 = vsel %vm1343, %v1475, 0
        %v1482 = vsel %vm1343, %v1477, 0
        %1484 = vmatpush.bf16.xpose.msra.mxu0 0
        %1485 = vmatpush.bf16.xpose.msra.mxu0 0
        %1486 = vmatpush.bf16.xpose.msra.mxu0 0
        %1487 = vmatpush.bf16.xpose.msra.mxu0 0
        %1488 = vmatpush.bf16.xpose.msra.mxu0 0
        %1489 = vmatpush.bf16.xpose.msra.mxu0 0
        %1490 = vmatpush.bf16.xpose.msra.mxu0 0
        %1491 = vmatpush.bf16.xpose.msra.mxu0 %v1482
        %1492 = vmatmul.bf16.gmra.mxu0 %v1479
        %v1493 = vpop.f32.mrf.mxu0
        %v1494 = vadd.f32 0.0, %v1493
        %v1495 = vpop.f32.mrf.mxu0
        %1496 = vdwg.mxu0
        %v1497 = vmul.f32 %v1494, 0.25
        %v1498 = vsel %vm1317, %v1497, -3.4028235e+38
        %v1499 = vsel %vm1343, %v1498, -inf
        %1500 = vmax.xlane.f32.xlu0 %v1499
        %v1501 = vpop.xlane.xlu0 %1500
        %v1502 = vsub.f32 %v1498, %v1501
        %v1503 = vmul.f32 %v1502, 1.442695
        %v1504 = vpow.pop %v1503
        %v1505 = vsel %vm1343, %v1504, 0.0
        %1506 = vadd.xlane.f32.xlu0 %v1505
        %v1507 = vpop.xlane.xlu0 %1506
        %v1508 = vrcp.pop %v1507
        %v1509 = vmul.f32 %v1504, %v1508
        %1510 = vmatpush.bf16.xpose.msra.mxu0 0
        %1511 = vmatpush.bf16.xpose.msra.mxu0 0
        %1512 = vmatpush.bf16.xpose.msra.mxu0 0
        %1513 = vmatpush.bf16.xpose.msra.mxu0 0
        %1514 = vmatpush.bf16.xpose.msra.mxu0 0
        %1515 = vmatpush.bf16.xpose.msra.mxu0 0
        %1516 = vmatpush.bf16.xpose.msra.mxu0 0
        %1517 = vmatpush.bf16.xpose.msra.mxu0 %v1479
        %1518 = vmatmul.bf16.gmra.mxu0 %v1482
        %v1519 = vpop.f32.mrf.mxu0
        %v1520 = vadd.f32 0.0, %v1519
        %v1521 = vpop.f32.mrf.mxu0
        %v1522 = vadd.f32 0.0, %v1521
        %1523 = vdwg.mxu0
        %v1524 = vmul.f32 %v1520, 0.25
        %v1525 = vmul.f32 %v1522, 0.25
        %v1526 = vsel %vm1336, %v1524, -3.4028235e+38
        %v1527 = vsel %vm1337, %v1525, -3.4028235e+38
        %v1528 = vsel %vm1394, %v1526, -inf
        %1529 = vmax.xlane.f32.xlu0 %v1528
        %v1530 = vpop.xlane.xlu0 %1529
        %v1531 = vsel %vm1394, %v1527, -inf
        %1532 = vmax.xlane.f32.xlu0 %v1531
        %v1533 = vpop.xlane.xlu0 %1532
        %v1534 = vsub.f32 %v1526, %v1530
        %v1535 = vsub.f32 %v1527, %v1533
        %v1536 = vmul.f32 %v1534, 1.442695
        %v1537 = vpow.pop %v1536
        %v1538 = vmul.f32 %v1535, 1.442695
        %v1539 = vpow.pop %v1538
        %v1540 = vsel %vm1394, %v1537, 0.0
        %1541 = vadd.xlane.f32.xlu0 %v1540
        %v1542 = vpop.xlane.xlu0 %1541
        %v1543 = vsel %vm1394, %v1539, 0.0
        %1544 = vadd.xlane.f32.xlu0 %v1543
        %v1545 = vpop.xlane.xlu0 %1544
        %v1546 = vrcp.pop %v1542
        %v1547 = vrcp.pop %v1545
        %v1548 = vmul.f32 %v1537, %v1546
        %v1549 = vmul.f32 %v1539, %v1547
        %v1550 = vpack.c.bf16 %v1509, %v1509
        %1551 = vrot.lane.b32.xlu0 %v1422, 112
        %v1552 = vpop.permute.xlu0 %1551
        %v1555 = vsel %vm1343, %v1550, 0
        %1557 = vmatpush.bf16.msra.mxu0 0
        %1558 = vmatpush.bf16.msra.mxu0 0
        %1559 = vmatpush.bf16.msra.mxu0 0
        %1560 = vmatpush.bf16.msra.mxu0 0
        %1561 = vmatpush.bf16.msra.mxu0 0
        %1562 = vmatpush.bf16.msra.mxu0 0
        %1563 = vmatpush.bf16.msra.mxu0 0
        %1564 = vmatpush.bf16.msra.mxu0 %v1552
        %1565 = vmatmul.bf16.gmra.mxu0 %v1555
        %v1566 = vpop.f32.mrf.mxu0
        %v1567 = vadd.f32 0.0, %v1566
        %v1568 = vpop.f32.mrf.mxu0
        %1569 = vdwg.mxu0
        %v1570 = vpack.c.bf16 %v1548, %v1548
        %v1571 = vpack.c.bf16 %v1549, %v1549
        %v1574 = vunpack.c.l.b16 %v1570
        %v1575 = vunpack.c.l.b16 %v1571
        %v1576 = vpack.c.b16 %v1575, %v1574
        %v1578 = vunpack.c.l.b16 %v1222
        %v1579 = vpack.c.b16 %v1578, %v1578
        %1580 = vrot.lane.b32.xlu0 %v1579, 112
        %v1581 = vpop.permute.xlu0 %1580
        %v1583 = vsel %vm1394, %v1576, 0
        %v1586 = vsel %vm1450, %v1581, 0
        %1588 = vmatpush.bf16.msra.mxu0 0
        %1589 = vmatpush.bf16.msra.mxu0 0
        %1590 = vmatpush.bf16.msra.mxu0 0
        %1591 = vmatpush.bf16.msra.mxu0 0
        %1592 = vmatpush.bf16.msra.mxu0 0
        %1593 = vmatpush.bf16.msra.mxu0 0
        %1594 = vmatpush.bf16.msra.mxu0 0
        %1595 = vmatpush.bf16.msra.mxu0 %v1586
        %1596 = vmatmul.bf16.gmra.mxu0 %v1583
        %v1597 = vpop.f32.mrf.mxu0
        %v1598 = vadd.f32 0.0, %v1597
        %v1599 = vpop.f32.mrf.mxu0
        %v1600 = vadd.f32 0.0, %v1599
        %1601 = vdwg.mxu0
        %1603 = vrot.lane.b32.xlu0 %v1567, 16
        %v1604 = vpop.permute.xlu0 %1603
        %vm1606 = vcmask 261248
        %1607 = vst.msk [vmem:[#allocation2] sm:$0xff] %vm1606, %v1604
        %1610 = vrot.lane.b32.xlu0 %v1598, 16
        %v1611 = vpop.permute.xlu0 %1610
        %1612 = vrot.lane.b32.xlu0 %v1600, 16
        %v1613 = vpop.permute.xlu0 %1612
        %1616 = vst.msk [vmem:[#allocation3] sm:$0xff] %vm1606, %v1611
        %1617 = vst.msk [vmem:[#allocation3 + $0x8] sm:$0xff] %vm1606, %v1613
        %v1618 = vld [vmem:[#allocation2] sm:$0xff]
        %v1619 = vpack.c.bf16 %v1618, %v1618
        %v1620 = vld [vmem:[%s29] sm:$0xf]
        %v1621 = vld [vmem:[%s29 + $0x4] sm:$0xf]
        %v1622 = vld [vmem:[%s29 + $0x8] sm:$0xf]
        %v1623 = vld [vmem:[%s29 + $0xc] sm:$0xf]
        %v1628 = vunpack.c.l.b16 %v1620
        %v1629 = vunpack.c.l.b16 %v1621
        %v1630 = vunpack.c.l.b16 %v1622
        %v1631 = vunpack.c.l.b16 %v1623
        %v1632 = vpack.c.b16 %v1629, %v1628
        %v1633 = vpack.c.b16 %v1631, %v1630
        %v1637 = vsel %vm1056, %v1619, 0
        %1639 = vmatpush.bf16.msra.mxu0 0
        %1640 = vmatpush.bf16.msra.mxu0 0
        %1641 = vmatpush.bf16.msra.mxu0 0
        %1642 = vmatpush.bf16.msra.mxu0 0
        %1643 = vmatpush.bf16.msra.mxu0 0
        %1644 = vmatpush.bf16.msra.mxu0 0
        %1645 = vmatpush.bf16.msra.mxu0 %v1633
        %1646 = vmatpush.bf16.msra.mxu0 %v1632
        %1647 = vmatmul.bf16.gmra.mxu0 %v1637
        %v1648 = vpop.f32.mrf.mxu0
        %v1649 = vadd.f32 0.0, %v1648
        %v1650 = vpop.f32.mrf.mxu0
        %1651 = vdwg.mxu0
        %v1652 = vld [vmem:[#allocation3] sm:$0xff]
        %v1653 = vld [vmem:[#allocation3 + $0x8] sm:$0xff]
        %v1654 = vpack.c.bf16 %v1653, %v1652
        %v1655 = vld [vmem:[%s33] sm:$0xf]
        %v1656 = vld [vmem:[%s33 + $0x4] sm:$0xf]
        %v1657 = vld [vmem:[%s33 + $0x8] sm:$0xf]
        %v1658 = vld [vmem:[%s33 + $0xc] sm:$0xf]
        %v1663 = vunpack.c.l.b16 %v1655
        %v1664 = vunpack.c.l.b16 %v1656
        %v1665 = vunpack.c.l.b16 %v1657
        %v1666 = vunpack.c.l.b16 %v1658
        %v1667 = vpack.c.b16 %v1664, %v1663
        %v1668 = vpack.c.b16 %v1666, %v1665
        %v1672 = vsel %vm1056, %v1654, 0
        %1674 = vmatpush.bf16.msra.mxu0 0
        %1675 = vmatpush.bf16.msra.mxu0 0
        %1676 = vmatpush.bf16.msra.mxu0 0
        %1677 = vmatpush.bf16.msra.mxu0 0
        %1678 = vmatpush.bf16.msra.mxu0 0
        %1679 = vmatpush.bf16.msra.mxu0 0
        %1680 = vmatpush.bf16.msra.mxu0 %v1668
        %1681 = vmatpush.bf16.msra.mxu0 %v1667
        %1682 = vmatmul.bf16.gmra.mxu0 %v1672
        %v1683 = vpop.f32.mrf.mxu0
        %v1684 = vadd.f32 0.0, %v1683
        %v1685 = vpop.f32.mrf.mxu0
        %v1686 = vadd.f32 0.0, %v1685
        %1687 = vdwg.mxu0
        %v1688 = vadd.f32 %v1051, %v1649
        %v1689 = vld [vmem:[%s31] sm:$0x1]
        %v1691 = vperm.slane %v1689, 0
        %v1693 = vadd.f32 %v1688, %v1691
        %v1694 = vadd.f32 %v1052, %v1684
        %v1695 = vadd.f32 %v1053, %v1686
        %v1696 = vld [vmem:[%s35] sm:$0x1]
        %v1698 = vperm.slane %v1696, 0
        %v1700 = vadd.f32 %v1694, %v1698
        %v1701 = vadd.f32 %v1695, %v1698
        %v1702 = vld [vmem:[%s37] sm:$0x1]
        %v1703 = vld [vmem:[%s39] sm:$0x1]
        %v1704 = vsel %vm1056, %v1693, 0.0
        %1705 = vadd.xlane.f32.xlu0 %v1704
        %v1706 = vpop.xlane.xlu0 %1705
        %v1707 = vmul.f32 %v1706, %v1066
        %v1708 = vsub.f32 %v1693, %v1707
        %v1709 = vmul.f32 %v1708, %v1708
        %v1710 = vsel %vm1056, %v1709, 0.0
        %1711 = vadd.xlane.f32.xlu0 %v1710
        %v1712 = vpop.xlane.xlu0 %1711
        %v1713 = vmul.f32 %v1712, %v1066
        %v1714 = vadd.f32 %v1713, 1e-05
        %v1715 = vrsqrt.pop %v1714
        %v1716 = vmul.f32 %v1715, %v1714
        %v1717 = vmul.f32 %v1716, %v1715
        %v1718 = vmul.f32 0.5, %v1717
        %v1719 = vsub.f32 1.5, %v1718
        %v1720 = vmul.f32 %v1715, %v1719
        %vm1721 = vweird.f32 %v1714
        %vm1722 = vweird.f32 %v1715
        %vm1723 = vmor %vm1721, %vm1722
        %v1724 = vsel %vm1723, %v1715, %v1720
        %v1725 = vmul.f32 %v1708, %v1724
        %v1727 = vperm.slane %v1702, 0
        %v1729 = vmul.f32 %v1725, %v1727
        %v1731 = vperm.slane %v1703, 0
        %v1733 = vadd.f32 %v1729, %v1731
        %v1734 = vpack.c.bf16 %v1733, %v1733
        %v1735 = vld [vmem:[%s41] sm:$0xf]
        %v1736 = vld [vmem:[%s41 + $0x4] sm:$0xf]
        %v1737 = vld [vmem:[%s41 + $0x8] sm:$0xf]
        %v1738 = vld [vmem:[%s41 + $0xc] sm:$0xf]
        %v1739 = vld [vmem:[%s43] sm:$0x1]
        %v1741 = vperm.slane %v1739, 0
        %v1747 = vunpack.c.l.b16 %v1735
        %v1748 = vunpack.c.l.b16 %v1736
        %v1749 = vunpack.c.l.b16 %v1737
        %v1750 = vunpack.c.l.b16 %v1738
        %v1751 = vpack.c.b16 %v1748, %v1747
        %v1752 = vpack.c.b16 %v1750, %v1749
        %v1756 = vsel %vm1056, %v1734, 0
        %1758 = vmatpush.bf16.msra.mxu0 0
        %1759 = vmatpush.bf16.msra.mxu0 0
        %1760 = vmatpush.bf16.msra.mxu0 0
        %1761 = vmatpush.bf16.msra.mxu0 0
        %1762 = vmatpush.bf16.msra.mxu0 0
        %1763 = vmatpush.bf16.msra.mxu0 0
        %1764 = vmatpush.bf16.msra.mxu0 %v1752
        %1765 = vmatpush.bf16.msra.mxu0 %v1751
        %1766 = vmatmul.bf16.gmra.mxu0 %v1756
        %v1767 = vpop.f32.mrf.mxu0
        %v1768 = vadd.f32 %v1741, %v1767
        %v1769 = vpop.f32.mrf.mxu0
        %1770 = vdwg.mxu0
        %v1771 = vmul.f32 %v1768, 0.5
        %v1772 = vmul.f32 %v1768, 0.044715
        %v1773 = vmul.f32 %v1772, %v1768
        %v1774 = vmul.f32 %v1773, %v1768
        %v1775 = vadd.f32 %v1768, %v1774
        %v1776 = vmul.f32 %v1775, 0.7978846
        %v1777 = vtanh.pop %v1776
        %v1778 = vadd.f32 %v1777, 1.0
        %v1779 = vmul.f32 %v1771, %v1778
        %v1780 = vpack.c.bf16 %v1779, %v1779
        %v1781 = vld [vmem:[%s45] sm:$0xf]
        %v1782 = vld [vmem:[%s45 + $0x4] sm:$0xf]
        %v1783 = vld [vmem:[%s45 + $0x8] sm:$0xf]
        %v1784 = vld [vmem:[%s45 + $0xc] sm:$0xf]
        %v1785 = vld [vmem:[%s45 + $0x10] sm:$0xf]
        %v1786 = vld [vmem:[%s45 + $0x14] sm:$0xf]
        %v1787 = vld [vmem:[%s45 + $0x18] sm:$0xf]
        %v1788 = vld [vmem:[%s45 + $0x1c] sm:$0xf]
        %v1789 = vld [vmem:[%s45 + $0x20] sm:$0xf]
        %v1790 = vld [vmem:[%s45 + $0x24] sm:$0xf]
        %v1791 = vld [vmem:[%s45 + $0x28] sm:$0xf]
        %v1792 = vld [vmem:[%s45 + $0x2c] sm:$0xf]
        %v1793 = vld [vmem:[%s45 + $0x30] sm:$0xf]
        %v1794 = vld [vmem:[%s45 + $0x34] sm:$0xf]
        %v1795 = vld [vmem:[%s45 + $0x38] sm:$0xf]
        %v1796 = vld [vmem:[%s45 + $0x3c] sm:$0xf]
        %v1797 = vld [vmem:[%s47] sm:$0x1]
        %v1799 = vperm.slane %v1797, 0
        %v1817 = vunpack.c.l.b16 %v1781
        %v1818 = vunpack.c.l.b16 %v1782
        %v1819 = vunpack.c.l.b16 %v1783
        %v1820 = vunpack.c.l.b16 %v1784
        %v1821 = vunpack.c.l.b16 %v1785
        %v1822 = vunpack.c.l.b16 %v1786
        %v1823 = vunpack.c.l.b16 %v1787
        %v1824 = vunpack.c.l.b16 %v1788
        %v1825 = vunpack.c.l.b16 %v1789
        %v1826 = vunpack.c.l.b16 %v1790
        %v1827 = vunpack.c.l.b16 %v1791
        %v1828 = vunpack.c.l.b16 %v1792
        %v1829 = vunpack.c.l.b16 %v1793
        %v1830 = vunpack.c.l.b16 %v1794
        %v1831 = vunpack.c.l.b16 %v1795
        %v1832 = vunpack.c.l.b16 %v1796
        %v1833 = vpack.c.b16 %v1818, %v1817
        %v1834 = vpack.c.b16 %v1820, %v1819
        %v1835 = vpack.c.b16 %v1822, %v1821
        %v1836 = vpack.c.b16 %v1824, %v1823
        %v1837 = vpack.c.b16 %v1826, %v1825
        %v1838 = vpack.c.b16 %v1828, %v1827
        %v1839 = vpack.c.b16 %v1830, %v1829
        %v1840 = vpack.c.b16 %v1832, %v1831
        %1849 = vmatpush.bf16.msra.mxu0 %v1840
        %1850 = vmatpush.bf16.msra.mxu0 %v1839
        %1851 = vmatpush.bf16.msra.mxu0 %v1838
        %1852 = vmatpush.bf16.msra.mxu0 %v1837
        %1853 = vmatpush.bf16.msra.mxu0 %v1836
        %1854 = vmatpush.bf16.msra.mxu0 %v1835
        %1855 = vmatpush.bf16.msra.mxu0 %v1834
        %1856 = vmatpush.bf16.msra.mxu0 %v1833
        %1857 = vmatmul.bf16.gmra.mxu0 %v1780
        %v1858 = vpop.f32.mrf.mxu0
        %v1859 = vadd.f32 %v1799, %v1858
        %v1860 = vpop.f32.mrf.mxu0
        %1861 = vdwg.mxu0
        %v1862 = vadd.f32 %v1859, %v1693
        %v1863 = vld [vmem:[%s49] sm:$0x1]
        %v1864 = vld [vmem:[%s51] sm:$0x1]
        %v1865 = vsel %vm1097, %v1700, 0.0
        %1866 = vadd.xlane.f32.xlu0 %v1865
        %v1867 = vpop.xlane.xlu0 %1866
        %v1868 = vsel %vm1097, %v1701, 0.0
        %1869 = vadd.xlane.f32.xlu0 %v1868
        %v1870 = vpop.xlane.xlu0 %1869
        %v1871 = vmul.f32 %v1867, %v1110
        %v1872 = vmul.f32 %v1870, %v1110
        %v1873 = vsub.f32 %v1700, %v1871
        %v1874 = vsub.f32 %v1701, %v1872
        %v1875 = vmul.f32 %v1873, %v1873
        %v1876 = vmul.f32 %v1874, %v1874
        %v1877 = vsel %vm1097, %v1875, 0.0
        %1878 = vadd.xlane.f32.xlu0 %v1877
        %v1879 = vpop.xlane.xlu0 %1878
        %v1880 = vsel %vm1097, %v1876, 0.0
        %1881 = vadd.xlane.f32.xlu0 %v1880
        %v1882 = vpop.xlane.xlu0 %1881
        %v1883 = vmul.f32 %v1879, %v1110
        %v1884 = vmul.f32 %v1882, %v1110
        %v1885 = vadd.f32 %v1883, 1e-05
        %v1886 = vadd.f32 %v1884, 1e-05
        %v1887 = vrsqrt.pop %v1885
        %v1888 = vmul.f32 %v1887, %v1885
        %v1889 = vmul.f32 %v1888, %v1887
        %v1890 = vmul.f32 0.5, %v1889
        %v1891 = vsub.f32 1.5, %v1890
        %v1892 = vmul.f32 %v1887, %v1891
        %vm1893 = vweird.f32 %v1885
        %vm1894 = vweird.f32 %v1887
        %vm1895 = vmor %vm1893, %vm1894
        %v1896 = vsel %vm1895, %v1887, %v1892
        %v1897 = vrsqrt.pop %v1886
        %v1898 = vmul.f32 %v1897, %v1886
        %v1899 = vmul.f32 %v1898, %v1897
        %v1900 = vmul.f32 0.5, %v1899
        %v1901 = vsub.f32 1.5, %v1900
        %v1902 = vmul.f32 %v1897, %v1901
        %vm1903 = vweird.f32 %v1886
        %vm1904 = vweird.f32 %v1897
        %vm1905 = vmor %vm1903, %vm1904
        %v1906 = vsel %vm1905, %v1897, %v1902
        %v1907 = vmul.f32 %v1873, %v1896
        %v1908 = vmul.f32 %v1874, %v1906
        %v1910 = vperm.slane %v1863, 0
        %v1912 = vmul.f32 %v1907, %v1910
        %v1913 = vmul.f32 %v1908, %v1910
        %v1915 = vperm.slane %v1864, 0
        %v1917 = vadd.f32 %v1912, %v1915
        %v1918 = vadd.f32 %v1913, %v1915
        %v1919 = vpack.c.bf16 %v1918, %v1917
        %v1920 = vld [vmem:[%s53] sm:$0xff]
        %v1921 = vld [vmem:[%s53 + $0x8] sm:$0xff]
        %v1922 = vld [vmem:[%s53 + $0x10] sm:$0xff]
        %v1923 = vld [vmem:[%s53 + $0x18] sm:$0xff]
        %v1924 = vld [vmem:[%s53 + $0x20] sm:$0xff]
        %v1925 = vld [vmem:[%s53 + $0x28] sm:$0xff]
        %v1926 = vld [vmem:[%s55] sm:$0x3]
        %v1928 = vperm.slane %v1926, 0
        %v1929 = vperm.slane %v1926, 1
        %v1938 = vunpack.c.l.b16 %v1920
        %v1939 = vunpack.c.h.b16 %v1920
        %v1940 = vunpack.c.l.b16 %v1921
        %v1941 = vunpack.c.h.b16 %v1921
        %v1942 = vunpack.c.l.b16 %v1922
        %v1943 = vunpack.c.h.b16 %v1922
        %v1944 = vunpack.c.l.b16 %v1923
        %v1945 = vunpack.c.h.b16 %v1923
        %v1946 = vunpack.c.l.b16 %v1924
        %v1947 = vunpack.c.h.b16 %v1924
        %v1948 = vunpack.c.l.b16 %v1925
        %v1949 = vunpack.c.h.b16 %v1925
        %v1950 = vpack.c.b16 %v1940, %v1938
        %v1951 = vpack.c.b16 %v1941, %v1939
        %v1952 = vpack.c.b16 %v1944, %v1942
        %v1953 = vpack.c.b16 %v1945, %v1943
        %v1954 = vpack.c.b16 %v1948, %v1946
        %v1955 = vpack.c.b16 %v1949, %v1947
        %v1963 = vsel %vm1097, %v1919, 0
        %1965 = vmatpush.bf16.msra.mxu0 0
        %1966 = vmatpush.bf16.msra.mxu0 0
        %1967 = vmatpush.bf16.msra.mxu0 0
        %1968 = vmatpush.bf16.msra.mxu0 0
        %1969 = vmatpush.bf16.msra.mxu0 0
        %1970 = vmatpush.bf16.msra.mxu0 %v1954
        %1971 = vmatpush.bf16.msra.mxu0 %v1952
        %1972 = vmatpush.bf16.msra.mxu0 %v1950
        %1973 = vmatmul.bf16.gmra.mxu0 %v1963
        %v1974 = vpop.f32.mrf.mxu0
        %v1975 = vadd.f32 %v1928, %v1974
        %v1976 = vpop.f32.mrf.mxu0
        %v1977 = vadd.f32 %v1928, %v1976
        %1978 = vdwg.mxu0
        %1979 = vmatpush.bf16.msra.mxu0 0
        %1980 = vmatpush.bf16.msra.mxu0 0
        %1981 = vmatpush.bf16.msra.mxu0 0
        %1982 = vmatpush.bf16.msra.mxu0 0
        %1983 = vmatpush.bf16.msra.mxu0 0
        %1984 = vmatpush.bf16.msra.mxu0 %v1955
        %1985 = vmatpush.bf16.msra.mxu0 %v1953
        %1986 = vmatpush.bf16.msra.mxu0 %v1951
        %1987 = vmatmul.bf16.gmra.mxu0 %v1963
        %v1988 = vpop.f32.mrf.mxu0
        %v1989 = vadd.f32 %v1929, %v1988
        %v1990 = vpop.f32.mrf.mxu0
        %v1991 = vadd.f32 %v1929, %v1990
        %1992 = vdwg.mxu0
        %v1993 = vmul.f32 %v1975, 0.5
        %v1994 = vmul.f32 %v1989, 0.5
        %v1995 = vmul.f32 %v1977, 0.5
        %v1996 = vmul.f32 %v1991, 0.5
        %v1997 = vmul.f32 %v1975, 0.044715
        %v1998 = vmul.f32 %v1989, 0.044715
        %v1999 = vmul.f32 %v1977, 0.044715
        %v2000 = vmul.f32 %v1991, 0.044715
        %v2001 = vmul.f32 %v1997, %v1975
        %v2002 = vmul.f32 %v1998, %v1989
        %v2003 = vmul.f32 %v1999, %v1977
        %v2004 = vmul.f32 %v2000, %v1991
        %v2005 = vmul.f32 %v2001, %v1975
        %v2006 = vmul.f32 %v2002, %v1989
        %v2007 = vmul.f32 %v2003, %v1977
        %v2008 = vmul.f32 %v2004, %v1991
        %v2009 = vadd.f32 %v1975, %v2005
        %v2010 = vadd.f32 %v1989, %v2006
        %v2011 = vadd.f32 %v1977, %v2007
        %v2012 = vadd.f32 %v1991, %v2008
        %v2013 = vmul.f32 %v2009, 0.7978846
        %v2014 = vmul.f32 %v2010, 0.7978846
        %v2015 = vmul.f32 %v2011, 0.7978846
        %v2016 = vmul.f32 %v2012, 0.7978846
        %v2017 = vtanh.pop %v2013
        %v2018 = vtanh.pop %v2014
        %v2019 = vtanh.pop %v2015
        %v2020 = vtanh.pop %v2016
        %v2021 = vadd.f32 %v2017, 1.0
        %v2022 = vadd.f32 %v2018, 1.0
        %v2023 = vadd.f32 %v2019, 1.0
        %v2024 = vadd.f32 %v2020, 1.0
        %v2025 = vmul.f32 %v1993, %v2021
        %v2026 = vmul.f32 %v1994, %v2022
        %v2027 = vmul.f32 %v1995, %v2023
        %v2028 = vmul.f32 %v1996, %v2024
        %v2029 = vpack.c.bf16 %v2027, %v2025
        %v2030 = vpack.c.bf16 %v2028, %v2026
        %v2031 = vld [vmem:[%s57] sm:$0xf]
        %v2032 = vld [vmem:[%s57 + $0x4] sm:$0xf]
        %v2033 = vld [vmem:[%s57 + $0x8] sm:$0xf]
        %v2034 = vld [vmem:[%s57 + $0xc] sm:$0xf]
        %v2035 = vld [vmem:[%s57 + $0x10] sm:$0xf]
        %v2036 = vld [vmem:[%s57 + $0x14] sm:$0xf]
        %v2037 = vld [vmem:[%s57 + $0x18] sm:$0xf]
        %v2038 = vld [vmem:[%s57 + $0x1c] sm:$0xf]
        %v2039 = vld [vmem:[%s57 + $0x20] sm:$0xf]
        %v2040 = vld [vmem:[%s57 + $0x24] sm:$0xf]
        %v2041 = vld [vmem:[%s57 + $0x28] sm:$0xf]
        %v2042 = vld [vmem:[%s57 + $0x2c] sm:$0xf]
        %v2043 = vld [vmem:[%s57 + $0x30] sm:$0xf]
        %v2044 = vld [vmem:[%s57 + $0x34] sm:$0xf]
        %v2045 = vld [vmem:[%s57 + $0x38] sm:$0xf]
        %v2046 = vld [vmem:[%s57 + $0x3c] sm:$0xf]
        %v2047 = vld [vmem:[%s57 + $0x40] sm:$0xf]
        %v2048 = vld [vmem:[%s57 + $0x44] sm:$0xf]
        %v2049 = vld [vmem:[%s57 + $0x48] sm:$0xf]
        %v2050 = vld [vmem:[%s57 + $0x4c] sm:$0xf]
        %v2051 = vld [vmem:[%s57 + $0x50] sm:$0xf]
        %v2052 = vld [vmem:[%s57 + $0x54] sm:$0xf]
        %v2053 = vld [vmem:[%s57 + $0x58] sm:$0xf]
        %v2054 = vld [vmem:[%s57 + $0x5c] sm:$0xf]
        %v2055 = vld [vmem:[%s59] sm:$0x1]
        %v2057 = vperm.slane %v2055, 0
        %v2083 = vunpack.c.l.b16 %v2031
        %v2084 = vunpack.c.l.b16 %v2032
        %v2085 = vunpack.c.l.b16 %v2033
        %v2086 = vunpack.c.l.b16 %v2034
        %v2087 = vunpack.c.l.b16 %v2035
        %v2088 = vunpack.c.l.b16 %v2036
        %v2089 = vunpack.c.l.b16 %v2037
        %v2090 = vunpack.c.l.b16 %v2038
        %v2091 = vunpack.c.l.b16 %v2039
        %v2092 = vunpack.c.l.b16 %v2040
        %v2093 = vunpack.c.l.b16 %v2041
        %v2094 = vunpack.c.l.b16 %v2042
        %v2095 = vunpack.c.l.b16 %v2043
        %v2096 = vunpack.c.l.b16 %v2044
        %v2097 = vunpack.c.l.b16 %v2045
        %v2098 = vunpack.c.l.b16 %v2046
        %v2099 = vunpack.c.l.b16 %v2047
        %v2100 = vunpack.c.l.b16 %v2048
        %v2101 = vunpack.c.l.b16 %v2049
        %v2102 = vunpack.c.l.b16 %v2050
        %v2103 = vunpack.c.l.b16 %v2051
        %v2104 = vunpack.c.l.b16 %v2052
        %v2105 = vunpack.c.l.b16 %v2053
        %v2106 = vunpack.c.l.b16 %v2054
        %v2107 = vpack.c.b16 %v2084, %v2083
        %v2108 = vpack.c.b16 %v2086, %v2085
        %v2109 = vpack.c.b16 %v2088, %v2087
        %v2110 = vpack.c.b16 %v2090, %v2089
        %v2111 = vpack.c.b16 %v2092, %v2091
        %v2112 = vpack.c.b16 %v2094, %v2093
        %v2113 = vpack.c.b16 %v2096, %v2095
        %v2114 = vpack.c.b16 %v2098, %v2097
        %v2115 = vpack.c.b16 %v2100, %v2099
        %v2116 = vpack.c.b16 %v2102, %v2101
        %v2117 = vpack.c.b16 %v2104, %v2103
        %v2118 = vpack.c.b16 %v2106, %v2105
        %vm2131 = vcmask 523264
        %v2133 = vsel %vm2131, %v2030, 0
        %2135 = vmatpush.bf16.msra.mxu0 %v2114
        %2136 = vmatpush.bf16.msra.mxu0 %v2113
        %2137 = vmatpush.bf16.msra.mxu0 %v2112
        %2138 = vmatpush.bf16.msra.mxu0 %v2111
        %2139 = vmatpush.bf16.msra.mxu0 %v2110
        %2140 = vmatpush.bf16.msra.mxu0 %v2109
        %2141 = vmatpush.bf16.msra.mxu0 %v2108
        %2142 = vmatpush.bf16.msra.mxu0 %v2107
        %2143 = vmatmul.bf16.gmra.mxu0 %v2029
        %v2144 = vpop.f32.mrf.mxu0
        %v2145 = vadd.f32 %v2057, %v2144
        %v2146 = vpop.f32.mrf.mxu0
        %v2147 = vadd.f32 %v2057, %v2146
        %2148 = vdwg.mxu0
        %2149 = vmatpush.bf16.msra.mxu0 0
        %2150 = vmatpush.bf16.msra.mxu0 0
        %2151 = vmatpush.bf16.msra.mxu0 0
        %2152 = vmatpush.bf16.msra.mxu0 0
        %2153 = vmatpush.bf16.msra.mxu0 %v2118
        %2154 = vmatpush.bf16.msra.mxu0 %v2117
        %2155 = vmatpush.bf16.msra.mxu0 %v2116
        %2156 = vmatpush.bf16.msra.mxu0 %v2115
        %2157 = vmatmul.bf16.gmra.mxu0 %v2133
        %v2158 = vpop.f32.mrf.mxu0
        %v2159 = vadd.f32 %v2145, %v2158
        %v2160 = vpop.f32.mrf.mxu0
        %v2161 = vadd.f32 %v2147, %v2160
        %2162 = vdwg.mxu0
        %v2163 = vadd.f32 %v2159, %v1700
        %v2164 = vadd.f32 %v2161, %v1701
        %2165 = vst.msk [vmem:[%s1018] sm:$0xff] %vm1056, %v1862
        %2166 = vst.msk [vmem:[%s1025] sm:$0xff] %vm1097, %v2163
        %2167 = vst.msk [vmem:[%s1025 + $0x8] sm:$0xff] %vm1097, %v2164
        %s2168 = sand.u32 %s749, 1
        %s2169 = scalar_lea.sflag [#allocation5], %s2168
        %s2170 = sand.u32 %s749, 1
        %s2171 = smul.addr %s2170, 8
        %s2172 = scalar_lea.vmem [#allocation4], %s2171
        %s2173 = sand.u32 %s775, 1
        %s2174 = scalar_lea.sflag [#allocation7], %s2173
        %s2175 = sand.u32 %s775, 1
        %s2176 = smul.addr %s2175, 16
        %s2177 = scalar_lea.vmem [#allocation6], %s2176
        // Predicated region
        $region141: #{tpu_custom_call.1} parent=139 // pred_check
          %p2178 = pneg %p759
        $region142: #{tpu_custom_call.1} parent=139 // pred_check_branch
          %2180 = sbr.rel (%p2178) target = $region144
        $region143: #{tpu_custom_call.1} parent=139 // pred_region
          %2182 = vsyncadd %s2169, 0
          %s2183 = smul.addr %s81, 8
          %s2184 = scalar_lea.hbm %s61, %s2183
          %s2186 = sshll.u32 %s2172, 4
          %s2187 = int_to_ptr.vmem [resolvable:$true] %s2186
          %s2188 = sshll.u32 %s2184, 4
          %s2189 = int_to_ptr.hbm [resolvable:$true] %s2188
          %2191 = dma.vmem_to_hbm [thread:$0]  %s2187, 128, %s2189, %s2169
        $region144: #{tpu_custom_call.1} parent=139 // pred_fallthru
          _
        // Predicated region
        $region145: #{tpu_custom_call.1} parent=139 // pred_check
          %p2192 = pneg %p785
        $region146: #{tpu_custom_call.1} parent=139 // pred_check_branch
          %2194 = sbr.rel (%p2192) target = $region148
        $region147: #{tpu_custom_call.1} parent=139 // pred_region
          %2196 = vsyncadd %s2174, 0
          %s2197 = smul.addr %s81, 2
          %s2198 = smul.addr %s2197, 8
          %s2199 = scalar_lea.hbm %s63, %s2198
          %s2200 = sshll.u32 %s2177, 4
          %s2201 = int_to_ptr.vmem [resolvable:$true] %s2200
          %s2202 = sshll.u32 %s2199, 4
          %s2203 = int_to_ptr.hbm [resolvable:$true] %s2202
          %2208 = dma.vmem_to_hbm [thread:$0]  %s2201, 256, %s2203, %s2174, 128, 128, 8
        $region148: #{tpu_custom_call.1} parent=139 // pred_fallthru
          _
      $region140: #{tpu_custom_call.1} parent=5 // pred_fallthru
        _
      %p2209 = scmp.le.s32.totalorder 2, %s76
      // Predicated region
      $region149: #{tpu_custom_call.1} parent=5 // pred_check
        %p2210 = pneg %p2209
      $region150: #{tpu_custom_call.1} parent=5 // pred_check_branch
        %2212 = sbr.rel (%p2210) target = $region152
      $region151: #{tpu_custom_call.1} parent=5 // pred_region
        %s2213 = ssub.s32 %s76, 2
        // Predicated region
        $region153: #{tpu_custom_call.1} parent=151 // pred_check
          %p2214 = pneg %p765
        $region154: #{tpu_custom_call.1} parent=151 // pred_check_branch
          %2216 = sbr.rel (%p2214) target = $region156
        $region155: #{tpu_custom_call.1} parent=151 // pred_region
          %s2217 = sand.u32 %s750, 1
          %s2218 = scalar_lea.sflag [#allocation5], %s2217
          %s2219 = sand.u32 %s750, 1
          %s2220 = smul.addr %s2219, 8
          %s2221 = scalar_lea.vmem [#allocation4], %s2220
          %2223 = dma.done %s2218, 128
        $region156: #{tpu_custom_call.1} parent=151 // pred_fallthru
          _
        // Predicated region
        $region157: #{tpu_custom_call.1} parent=151 // pred_check
          %p2224 = pneg %p791
        $region158: #{tpu_custom_call.1} parent=151 // pred_check_branch
          %2226 = sbr.rel (%p2224) target = $region160
        $region159: #{tpu_custom_call.1} parent=151 // pred_region
          %s2227 = sand.u32 %s776, 1
          %s2228 = scalar_lea.sflag [#allocation7], %s2227
          %s2229 = sand.u32 %s776, 1
          %s2230 = smul.addr %s2229, 16
          %s2231 = scalar_lea.vmem [#allocation6], %s2230
          %2233 = dma.done %s2228, 256
        $region160: #{tpu_custom_call.1} parent=151 // pred_fallthru
          _
      $region152: #{tpu_custom_call.1} parent=5 // pred_fallthru
        _
    $region6: #{tpu_custom_call.1} parent=1 // loop_footer
      %s80 = sadd.s32 1, %s76
    $region7: #{tpu_custom_call.1} parent=1 // loop_footer_branch
      %75 = sbr.rel target = $region3
    $region8: #{tpu_custom_call.1} parent=1 // loop_exit
      _
    %2234 = vsyncpa [#allocation5], 1
    %s2235 = scalar_lea.sflag [#allocation5], 1
    %2236 = vsyncpa %s2235, 1
    %2237 = vsyncpa [#allocation7], 1
    %s2238 = scalar_lea.sflag [#allocation7], 1
    %2239 = vsyncpa %s2238, 1

// kernel: tpu_custom_call.1
$region0: #{tpu_custom_call.1}
  #allocation0 [shape = 'u32[]', space=smem, size = 0x4, offset = 0x4, fixed_abs, tag = 'smem constant byte address 0x4 - core index']
  #allocation1 [shape = 'u32[72,128]{1,0:T(1,128)}', space=vmem, size = 0x9000, scoped, tag = 'internal scratch']
  #allocation2 [shape = 'f32[8,32]{1,0:T(8,128)}', space=vmem, size = 0x1000, scoped, tag = 'scratch operand']
  #allocation3 [shape = 'f32[16,32]{1,0:T(8,128)}', space=vmem, size = 0x2000, scoped, tag = 'scratch operand']
  %s0 = inlined_call_operand.smem [shape: u32[32], index: -1, kind: input, shape index: {}]
  %s1 = sld [smem:[%s0]]
  %s2 = scalar_lea.smem %s0, 1
  %s3 = sld [smem:[%s2]]
  %s4 = scalar_lea.smem %s0, 2
  %s5 = sld [smem:[%s4]]
  %s6 = scalar_lea.smem %s0, 3
  %s7 = sld [smem:[%s6]]
  %s8 = scalar_lea.smem %s0, 4
  %s9 = sld [smem:[%s8]]
  %s10 = scalar_lea.smem %s0, 5
  %s11 = sld [smem:[%s10]]
  %s12 = scalar_lea.smem %s0, 6
  %s13 = sld [smem:[%s12]]
  %s14 = scalar_lea.smem %s0, 7
  %s15 = sld [smem:[%s14]]
  %s16 = scalar_lea.smem %s0, 8
  %s17 = sld [smem:[%s16]]
  %s18 = scalar_lea.smem %s0, 9
  %s19 = sld [smem:[%s18]]
  %s20 = scalar_lea.smem %s0, 10
  %s21 = sld [smem:[%s20]]
  %s22 = scalar_lea.smem %s0, 11
  %s23 = sld [smem:[%s22]]
  %s24 = scalar_lea.smem %s0, 12
  %s25 = sld [smem:[%s24]]
  %s26 = scalar_lea.smem %s0, 13
  %s27 = sld [smem:[%s26]]
  %s28 = scalar_lea.smem %s0, 14
  %s29 = sld [smem:[%s28]]
  %s30 = scalar_lea.smem %s0, 15
  %s31 = sld [smem:[%s30]]
  %s32 = scalar_lea.smem %s0, 16
  %s33 = sld [smem:[%s32]]
  %s34 = scalar_lea.smem %s0, 17
  %s35 = sld [smem:[%s34]]
  %s36 = scalar_lea.smem %s0, 18
  %s37 = sld [smem:[%s36]]
  %s38 = scalar_lea.smem %s0, 19
  %s39 = sld [smem:[%s38]]
  %s40 = scalar_lea.smem %s0, 20
  %s41 = sld [smem:[%s40]]
  %s42 = scalar_lea.smem %s0, 21
  %s43 = sld [smem:[%s42]]
  %s44 = scalar_lea.smem %s0, 22
  %s45 = sld [smem:[%s44]]
  %s46 = scalar_lea.smem %s0, 23
  %s47 = sld [smem:[%s46]]
  %s48 = scalar_lea.smem %s0, 24
  %s49 = sld [smem:[%s48]]
  %s50 = scalar_lea.smem %s0, 25
  %s51 = sld [smem:[%s50]]
  %s52 = scalar_lea.smem %s0, 26
  %s53 = sld [smem:[%s52]]
  %s54 = scalar_lea.smem %s0, 27
  %s55 = sld [smem:[%s54]]
  %s56 = scalar_lea.smem %s0, 28
  %s57 = sld [smem:[%s56]]
  %s58 = scalar_lea.smem %s0, 29
  %s59 = sld [smem:[%s58]]
  %s60 = scalar_lea.smem %s0, 30
  %s61 = sld [smem:[%s60]]
  %s62 = scalar_lea.smem %s0, 31
  %s63 = sld [smem:[%s62]]
  %64 = xla_tuple %s61, %s63
  %s65 = sld [smem:[#allocation0]]
  $region161: #{tpu_custom_call.1} parent=0
    _
  %s67 = ssub.s32 1, %s65
  %s68 = scalar_select 0, %s67, %s65
  $region1: #{tpu_custom_call.1} parent=0
    #allocation4 [shape = 'u8[8192]{0}', space=vmem, size = 0x2000, scoped, tag = 'output window, operand 0']
    #allocation5 [shape = 's32[2]{0}', space=sflag, size = 0x8, scoped, tag = 'scoped memory for tpu_custom_call.1']
    #allocation6 [shape = 'u8[16384]{0}', space=vmem, size = 0x4000, scoped, tag = 'output window, operand 1']
    #allocation7 [shape = 's32[2]{0}', space=sflag, size = 0x8, scoped, tag = 'scoped memory for tpu_custom_call.1']
    %69 = vsyncpa [#allocation5], 0
    %s70 = scalar_lea.sflag [#allocation5], 1
    %71 = vsyncpa %s70, 0
    %72 = vsyncpa [#allocation7], 0
    %s73 = scalar_lea.sflag [#allocation7], 1
    %74 = vsyncpa %s73, 0
    loop: start=0, step=1, limit=4
    $region2: #{tpu_custom_call.1} parent=1 // loop_pre_header
      _
    $region3: #{tpu_custom_call.1} parent=1 // loop_header
      %s76 = sphi 0, %s80
      %p77 = scmp.ge.s32.totalorder %s76, 4
      %s86 = sphi 0, %s88
      %s89 = sphi 0, %s86
      %s90 = sphi 0, %s89
      %s106 = sphi 0, %s90
      %s112 = sphi 0, %s114
      %s115 = sphi 0, %s112
      %s116 = sphi 0, %s115
      %s132 = sphi 0, %s116
      %s138 = sphi 0, %s140
      %s141 = sphi 0, %s138
      %s142 = sphi 0, %s141
      %s158 = sphi 0, %s142
      %s164 = sphi 0, %s166
      %s167 = sphi 0, %s164
      %s168 = sphi 0, %s167
      %s184 = sphi 0, %s168
      %s190 = sphi 0, %s192
      %s193 = sphi 0, %s190
      %s194 = sphi 0, %s193
      %s210 = sphi 0, %s194
      %s216 = sphi 0, %s218
      %s219 = sphi 0, %s216
      %s220 = sphi 0, %s219
      %s236 = sphi 0, %s220
      %s240 = sphi 0, %s240
      %s242 = sphi 0, %s240
      %s243 = sphi 0, %s242
      %s257 = sphi 0, %s243
      %s261 = sphi 0, %s261
      %s263 = sphi 0, %s261
      %s264 = sphi 0, %s263
      %s278 = sphi 0, %s264
      %s282 = sphi 0, %s282
      %s284 = sphi 0, %s282
      %s285 = sphi 0, %s284
      %s299 = sphi 0, %s285
      %s303 = sphi 0, %s303
      %s305 = sphi 0, %s303
      %s306 = sphi 0, %s305
      %s320 = sphi 0, %s306
      %s324 = sphi 0, %s324
      %s326 = sphi 0, %s324
      %s327 = sphi 0, %s326
      %s341 = sphi 0, %s327
      %s345 = sphi 0, %s345
      %s347 = sphi 0, %s345
      %s348 = sphi 0, %s347
      %s362 = sphi 0, %s348
      %s366 = sphi 0, %s366
      %s368 = sphi 0, %s366
      %s369 = sphi 0, %s368
      %s383 = sphi 0, %s369
      %s387 = sphi 0, %s387
      %s389 = sphi 0, %s387
      %s390 = sphi 0, %s389
      %s404 = sphi 0, %s390
      %s408 = sphi 0, %s408
      %s410 = sphi 0, %s408
      %s411 = sphi 0, %s410
      %s425 = sphi 0, %s411
      %s429 = sphi 0, %s429
      %s431 = sphi 0, %s429
      %s432 = sphi 0, %s431
      %s446 = sphi 0, %s432
      %s450 = sphi 0, %s450
      %s452 = sphi 0, %s450
      %s453 = sphi 0, %s452
      %s467 = sphi 0, %s453
      %s471 = sphi 0, %s471
      %s473 = sphi 0, %s471
      %s474 = sphi 0, %s473
      %s488 = sphi 0, %s474
      %s492 = sphi 0, %s492
      %s494 = sphi 0, %s492
      %s495 = sphi 0, %s494
      %s509 = sphi 0, %s495
      %s513 = sphi 0, %s513
      %s515 = sphi 0, %s513
      %s516 = sphi 0, %s515
      %s530 = sphi 0, %s516
      %s534 = sphi 0, %s534
      %s536 = sphi 0, %s534
      %s537 = sphi 0, %s536
      %s551 = sphi 0, %s537
      %s555 = sphi 0, %s555
      %s557 = sphi 0, %s555
      %s558 = sphi 0, %s557
      %s572 = sphi 0, %s558
      %s576 = sphi 0, %s576
      %s578 = sphi 0, %s576
      %s579 = sphi 0, %s578
      %s593 = sphi 0, %s579
      %s597 = sphi 0, %s597
      %s599 = sphi 0, %s597
      %s600 = sphi 0, %s599
      %s614 = sphi 0, %s600
      %s618 = sphi 0, %s618
      %s620 = sphi 0, %s618
      %s621 = sphi 0, %s620
      %s635 = sphi 0, %s621
      %s639 = sphi 0, %s639
      %s641 = sphi 0, %s639
      %s642 = sphi 0, %s641
      %s656 = sphi 0, %s642
      %s660 = sphi 0, %s660
      %s662 = sphi 0, %s660
      %s663 = sphi 0, %s662
      %s677 = sphi 0, %s663
      %s681 = sphi 0, %s681
      %s683 = sphi 0, %s681
      %s684 = sphi 0, %s683
      %s698 = sphi 0, %s684
      %s702 = sphi 0, %s702
      %s704 = sphi 0, %s702
      %s705 = sphi 0, %s704
      %s719 = sphi 0, %s705
      %s723 = sphi 0, %s723
      %s725 = sphi 0, %s723
      %s726 = sphi 0, %s725
      %s740 = sphi 0, %s726
      %s746 = sphi 0, %s748
      %s749 = sphi 0, %s746
      %s750 = sphi 0, %s749
      %s766 = sphi 0, %s750
      %s772 = sphi 0, %s774
      %s775 = sphi 0, %s772
      %s776 = sphi 0, %s775
      %s792 = sphi 0, %s776
    $region4: #{tpu_custom_call.1} parent=1 // loop_header_branch
      %79 = sbr.rel (%p77) target = $region8
    $region5: #{tpu_custom_call.1} parent=1 // loop_body
      %s81 = ssub.s32 %s76, 1
      %s82 = ssub.s32 %s76, 2
      %s83 = sadd.s32 %s76, 1
      %s84 = ssub.s32 %s76, %s83
      %p85 = scmp.eq.s32.totalorder %s84, 0
      %s87 = sadd.s32 %s86, 1
      %s88 = scalar_select %p85, %s86, %s87
      %p91 = pneg %p85
      %p92 = scmp.eq.s32.totalorder %s76, 1
      %p93 = por %p91, %p92
      %p94 = scmp.ne.s32.totalorder %s86, %s89
      %p95 = scmp.eq.s32.totalorder %s76, 0
      %p96 = por %p94, %p95
      %p97 = scmp.ne.s32.totalorder %s86, %s89
      %p98 = scmp.eq.s32.totalorder %s81, 1
      %p99 = por %p97, %p98
      %p100 = scmp.ne.s32.totalorder %s89, %s90
      %p101 = scmp.eq.s32.totalorder %s81, 0
      %p102 = por %p100, %p101
      %p103 = scmp.ne.s32.totalorder %s89, %s90
      %p104 = scmp.eq.s32.totalorder %s82, 1
      %p105 = por %p103, %p104
      %p107 = scmp.ne.s32.totalorder %s90, %s106
      %p108 = scmp.eq.s32.totalorder %s82, 0
      %p109 = por %p107, %p108
      %s110 = ssub.s32 %s76, %s83
      %p111 = scmp.eq.s32.totalorder %s110, 0
      %s113 = sadd.s32 %s112, 1
      %s114 = scalar_select %p111, %s112, %s113
      %p117 = pneg %p111
      %p118 = scmp.eq.s32.totalorder %s76, 1
      %p119 = por %p117, %p118
      %p120 = scmp.ne.s32.totalorder %s112, %s115
      %p121 = scmp.eq.s32.totalorder %s76, 0
      %p122 = por %p120, %p121
      %p123 = scmp.ne.s32.totalorder %s112, %s115
      %p124 = scmp.eq.s32.totalorder %s81, 1
      %p125 = por %p123, %p124
      %p126 = scmp.ne.s32.totalorder %s115, %s116
      %p127 = scmp.eq.s32.totalorder %s81, 0
      %p128 = por %p126, %p127
      %p129 = scmp.ne.s32.totalorder %s115, %s116
      %p130 = scmp.eq.s32.totalorder %s82, 1
      %p131 = por %p129, %p130
      %p133 = scmp.ne.s32.totalorder %s116, %s132
      %p134 = scmp.eq.s32.totalorder %s82, 0
      %p135 = por %p133, %p134
      %s136 = ssub.s32 %s76, %s83
      %p137 = scmp.eq.s32.totalorder %s136, 0
      %s139 = sadd.s32 %s138, 1
      %s140 = scalar_select %p137, %s138, %s139
      %p143 = pneg %p137
      %p144 = scmp.eq.s32.totalorder %s76, 1
      %p145 = por %p143, %p144
      %p146 = scmp.ne.s32.totalorder %s138, %s141
      %p147 = scmp.eq.s32.totalorder %s76, 0
      %p148 = por %p146, %p147
      %p149 = scmp.ne.s32.totalorder %s138, %s141
      %p150 = scmp.eq.s32.totalorder %s81, 1
      %p151 = por %p149, %p150
      %p152 = scmp.ne.s32.totalorder %s141, %s142
      %p153 = scmp.eq.s32.totalorder %s81, 0
      %p154 = por %p152, %p153
      %p155 = scmp.ne.s32.totalorder %s141, %s142
      %p156 = scmp.eq.s32.totalorder %s82, 1
      %p157 = por %p155, %p156
      %p159 = scmp.ne.s32.totalorder %s142, %s158
      %p160 = scmp.eq.s32.totalorder %s82, 0
      %p161 = por %p159, %p160
      %s162 = ssub.s32 %s76, %s83
      %p163 = scmp.eq.s32.totalorder %s162, 0
      %s165 = sadd.s32 %s164, 1
      %s166 = scalar_select %p163, %s164, %s165
      %p169 = pneg %p163
      %p170 = scmp.eq.s32.totalorder %s76, 1
      %p171 = por %p169, %p170
      %p172 = scmp.ne.s32.totalorder %s164, %s167
      %p173 = scmp.eq.s32.totalorder %s76, 0
      %p174 = por %p172, %p173
      %p175 = scmp.ne.s32.totalorder %s164, %s167
      %p176 = scmp.eq.s32.totalorder %s81, 1
      %p177 = por %p175, %p176
      %p178 = scmp.ne.s32.totalorder %s167, %s168
      %p179 = scmp.eq.s32.totalorder %s81, 0
      %p180 = por %p178, %p179
      %p181 = scmp.ne.s32.totalorder %s167, %s168
      %p182 = scmp.eq.s32.totalorder %s82, 1
      %p183 = por %p181, %p182
      %p185 = scmp.ne.s32.totalorder %s168, %s184
      %p186 = scmp.eq.s32.totalorder %s82, 0
      %p187 = por %p185, %p186
      %s188 = ssub.s32 %s76, %s83
      %p189 = scmp.eq.s32.totalorder %s188, 0
      %s191 = sadd.s32 %s190, 1
      %s192 = scalar_select %p189, %s190, %s191
      %p195 = pneg %p189
      %p196 = scmp.eq.s32.totalorder %s76, 1
      %p197 = por %p195, %p196
      %p198 = scmp.ne.s32.totalorder %s190, %s193
      %p199 = scmp.eq.s32.totalorder %s76, 0
      %p200 = por %p198, %p199
      %p201 = scmp.ne.s32.totalorder %s190, %s193
      %p202 = scmp.eq.s32.totalorder %s81, 1
      %p203 = por %p201, %p202
      %p204 = scmp.ne.s32.totalorder %s193, %s194
      %p205 = scmp.eq.s32.totalorder %s81, 0
      %p206 = por %p204, %p205
      %p207 = scmp.ne.s32.totalorder %s193, %s194
      %p208 = scmp.eq.s32.totalorder %s82, 1
      %p209 = por %p207, %p208
      %p211 = scmp.ne.s32.totalorder %s194, %s210
      %p212 = scmp.eq.s32.totalorder %s82, 0
      %p213 = por %p211, %p212
      %s214 = ssub.s32 %s76, %s83
      %p215 = scmp.eq.s32.totalorder %s214, 0
      %s217 = sadd.s32 %s216, 1
      %s218 = scalar_select %p215, %s216, %s217
      %p221 = pneg %p215
      %p222 = scmp.eq.s32.totalorder %s76, 1
      %p223 = por %p221, %p222
      %p224 = scmp.ne.s32.totalorder %s216, %s219
      %p225 = scmp.eq.s32.totalorder %s76, 0
      %p226 = por %p224, %p225
      %p227 = scmp.ne.s32.totalorder %s216, %s219
      %p228 = scmp.eq.s32.totalorder %s81, 1
      %p229 = por %p227, %p228
      %p230 = scmp.ne.s32.totalorder %s219, %s220
      %p231 = scmp.eq.s32.totalorder %s81, 0
      %p232 = por %p230, %p231
      %p233 = scmp.ne.s32.totalorder %s219, %s220
      %p234 = scmp.eq.s32.totalorder %s82, 1
      %p235 = por %p233, %p234
      %p237 = scmp.ne.s32.totalorder %s220, %s236
      %p238 = scmp.eq.s32.totalorder %s82, 0
      %p239 = por %p237, %p238
      %s241 = sadd.s32 %s240, 1
      %p244 = scmp.eq.s32.totalorder %s76, 1
      %p245 = scmp.ne.s32.totalorder %s240, %s242
      %p246 = scmp.eq.s32.totalorder %s76, 0
      %p247 = por %p245, %p246
      %p248 = scmp.ne.s32.totalorder %s240, %s242
      %p249 = scmp.eq.s32.totalorder %s81, 1
      %p250 = por %p248, %p249
      %p251 = scmp.ne.s32.totalorder %s242, %s243
      %p252 = scmp.eq.s32.totalorder %s81, 0
      %p253 = por %p251, %p252
      %p254 = scmp.ne.s32.totalorder %s242, %s243
      %p255 = scmp.eq.s32.totalorder %s82, 1
      %p256 = por %p254, %p255
      %p258 = scmp.ne.s32.totalorder %s243, %s257
      %p259 = scmp.eq.s32.totalorder %s82, 0
      %p260 = por %p258, %p259
      %s262 = sadd.s32 %s261, 1
      %p265 = scmp.eq.s32.totalorder %s76, 1
      %p266 = scmp.ne.s32.totalorder %s261, %s263
      %p267 = scmp.eq.s32.totalorder %s76, 0
      %p268 = por %p266, %p267
      %p269 = scmp.ne.s32.totalorder %s261, %s263
      %p270 = scmp.eq.s32.totalorder %s81, 1
      %p271 = por %p269, %p270
      %p272 = scmp.ne.s32.totalorder %s263, %s264
      %p273 = scmp.eq.s32.totalorder %s81, 0
      %p274 = por %p272, %p273
      %p275 = scmp.ne.s32.totalorder %s263, %s264
      %p276 = scmp.eq.s32.totalorder %s82, 1
      %p277 = por %p275, %p276
      %p279 = scmp.ne.s32.totalorder %s264, %s278
      %p280 = scmp.eq.s32.totalorder %s82, 0
      %p281 = por %p279, %p280
      %s283 = sadd.s32 %s282, 1
      %p286 = scmp.eq.s32.totalorder %s76, 1
      %p287 = scmp.ne.s32.totalorder %s282, %s284
      %p288 = scmp.eq.s32.totalorder %s76, 0
      %p289 = por %p287, %p288
      %p290 = scmp.ne.s32.totalorder %s282, %s284
      %p291 = scmp.eq.s32.totalorder %s81, 1
      %p292 = por %p290, %p291
      %p293 = scmp.ne.s32.totalorder %s284, %s285
      %p294 = scmp.eq.s32.totalorder %s81, 0
      %p295 = por %p293, %p294
      %p296 = scmp.ne.s32.totalorder %s284, %s285
      %p297 = scmp.eq.s32.totalorder %s82, 1
      %p298 = por %p296, %p297
      %p300 = scmp.ne.s32.totalorder %s285, %s299
      %p301 = scmp.eq.s32.totalorder %s82, 0
      %p302 = por %p300, %p301
      %s304 = sadd.s32 %s303, 1
      %p307 = scmp.eq.s32.totalorder %s76, 1
      %p308 = scmp.ne.s32.totalorder %s303, %s305
      %p309 = scmp.eq.s32.totalorder %s76, 0
      %p310 = por %p308, %p309
      %p311 = scmp.ne.s32.totalorder %s303, %s305
      %p312 = scmp.eq.s32.totalorder %s81, 1
      %p313 = por %p311, %p312
      %p314 = scmp.ne.s32.totalorder %s305, %s306
      %p315 = scmp.eq.s32.totalorder %s81, 0
      %p316 = por %p314, %p315
      %p317 = scmp.ne.s32.totalorder %s305, %s306
      %p318 = scmp.eq.s32.totalorder %s82, 1
      %p319 = por %p317, %p318
      %p321 = scmp.ne.s32.totalorder %s306, %s320
      %p322 = scmp.eq.s32.totalorder %s82, 0
      %p323 = por %p321, %p322
      %s325 = sadd.s32 %s324, 1
      %p328 = scmp.eq.s32.totalorder %s76, 1
      %p329 = scmp.ne.s32.totalorder %s324, %s326
      %p330 = scmp.eq.s32.totalorder %s76, 0
      %p331 = por %p329, %p330
      %p332 = scmp.ne.s32.totalorder %s324, %s326
      %p333 = scmp.eq.s32.totalorder %s81, 1
      %p334 = por %p332, %p333
      %p335 = scmp.ne.s32.totalorder %s326, %s327
      %p336 = scmp.eq.s32.totalorder %s81, 0
      %p337 = por %p335, %p336
      %p338 = scmp.ne.s32.totalorder %s326, %s327
      %p339 = scmp.eq.s32.totalorder %s82, 1
      %p340 = por %p338, %p339
      %p342 = scmp.ne.s32.totalorder %s327, %s341
      %p343 = scmp.eq.s32.totalorder %s82, 0
      %p344 = por %p342, %p343
      %s346 = sadd.s32 %s345, 1
      %p349 = scmp.eq.s32.totalorder %s76, 1
      %p350 = scmp.ne.s32.totalorder %s345, %s347
      %p351 = scmp.eq.s32.totalorder %s76, 0
      %p352 = por %p350, %p351
      %p353 = scmp.ne.s32.totalorder %s345, %s347
      %p354 = scmp.eq.s32.totalorder %s81, 1
      %p355 = por %p353, %p354
      %p356 = scmp.ne.s32.totalorder %s347, %s348
      %p357 = scmp.eq.s32.totalorder %s81, 0
      %p358 = por %p356, %p357
      %p359 = scmp.ne.s32.totalorder %s347, %s348
      %p360 = scmp.eq.s32.totalorder %s82, 1
      %p361 = por %p359, %p360
      %p363 = scmp.ne.s32.totalorder %s348, %s362
      %p364 = scmp.eq.s32.totalorder %s82, 0
      %p365 = por %p363, %p364
      %s367 = sadd.s32 %s366, 1
      %p370 = scmp.eq.s32.totalorder %s76, 1
      %p371 = scmp.ne.s32.totalorder %s366, %s368
      %p372 = scmp.eq.s32.totalorder %s76, 0
      %p373 = por %p371, %p372
      %p374 = scmp.ne.s32.totalorder %s366, %s368
      %p375 = scmp.eq.s32.totalorder %s81, 1
      %p376 = por %p374, %p375
      %p377 = scmp.ne.s32.totalorder %s368, %s369
      %p378 = scmp.eq.s32.totalorder %s81, 0
      %p379 = por %p377, %p378
      %p380 = scmp.ne.s32.totalorder %s368, %s369
      %p381 = scmp.eq.s32.totalorder %s82, 1
      %p382 = por %p380, %p381
      %p384 = scmp.ne.s32.totalorder %s369, %s383
      %p385 = scmp.eq.s32.totalorder %s82, 0
      %p386 = por %p384, %p385
      %s388 = sadd.s32 %s387, 1
      %p391 = scmp.eq.s32.totalorder %s76, 1
      %p392 = scmp.ne.s32.totalorder %s387, %s389
      %p393 = scmp.eq.s32.totalorder %s76, 0
      %p394 = por %p392, %p393
      %p395 = scmp.ne.s32.totalorder %s387, %s389
      %p396 = scmp.eq.s32.totalorder %s81, 1
      %p397 = por %p395, %p396
      %p398 = scmp.ne.s32.totalorder %s389, %s390
      %p399 = scmp.eq.s32.totalorder %s81, 0
      %p400 = por %p398, %p399
      %p401 = scmp.ne.s32.totalorder %s389, %s390
      %p402 = scmp.eq.s32.totalorder %s82, 1
      %p403 = por %p401, %p402
      %p405 = scmp.ne.s32.totalorder %s390, %s404
      %p406 = scmp.eq.s32.totalorder %s82, 0
      %p407 = por %p405, %p406
      %s409 = sadd.s32 %s408, 1
      %p412 = scmp.eq.s32.totalorder %s76, 1
      %p413 = scmp.ne.s32.totalorder %s408, %s410
      %p414 = scmp.eq.s32.totalorder %s76, 0
      %p415 = por %p413, %p414
      %p416 = scmp.ne.s32.totalorder %s408, %s410
      %p417 = scmp.eq.s32.totalorder %s81, 1
      %p418 = por %p416, %p417
      %p419 = scmp.ne.s32.totalorder %s410, %s411
      %p420 = scmp.eq.s32.totalorder %s81, 0
      %p421 = por %p419, %p420
      %p422 = scmp.ne.s32.totalorder %s410, %s411
      %p423 = scmp.eq.s32.totalorder %s82, 1
      %p424 = por %p422, %p423
      %p426 = scmp.ne.s32.totalorder %s411, %s425
      %p427 = scmp.eq.s32.totalorder %s82, 0
      %p428 = por %p426, %p427
      %s430 = sadd.s32 %s429, 1
      %p433 = scmp.eq.s32.totalorder %s76, 1
      %p434 = scmp.ne.s32.totalorder %s429, %s431
      %p435 = scmp.eq.s32.totalorder %s76, 0
      %p436 = por %p434, %p435
      %p437 = scmp.ne.s32.totalorder %s429, %s431
      %p438 = scmp.eq.s32.totalorder %s81, 1
      %p439 = por %p437, %p438
      %p440 = scmp.ne.s32.totalorder %s431, %s432
      %p441 = scmp.eq.s32.totalorder %s81, 0
      %p442 = por %p440, %p441
      %p443 = scmp.ne.s32.totalorder %s431, %s432
      %p444 = scmp.eq.s32.totalorder %s82, 1
      %p445 = por %p443, %p444
      %p447 = scmp.ne.s32.totalorder %s432, %s446
      %p448 = scmp.eq.s32.totalorder %s82, 0
      %p449 = por %p447, %p448
      %s451 = sadd.s32 %s450, 1
      %p454 = scmp.eq.s32.totalorder %s76, 1
      %p455 = scmp.ne.s32.totalorder %s450, %s452
      %p456 = scmp.eq.s32.totalorder %s76, 0
      %p457 = por %p455, %p456
      %p458 = scmp.ne.s32.totalorder %s450, %s452
      %p459 = scmp.eq.s32.totalorder %s81, 1
      %p460 = por %p458, %p459
      %p461 = scmp.ne.s32.totalorder %s452, %s453
      %p462 = scmp.eq.s32.totalorder %s81, 0
      %p463 = por %p461, %p462
      %p464 = scmp.ne.s32.totalorder %s452, %s453
      %p465 = scmp.eq.s32.totalorder %s82, 1
      %p466 = por %p464, %p465
      %p468 = scmp.ne.s32.totalorder %s453, %s467
      %p469 = scmp.eq.s32.totalorder %s82, 0
      %p470 = por %p468, %p469
      %s472 = sadd.s32 %s471, 1
      %p475 = scmp.eq.s32.totalorder %s76, 1
      %p476 = scmp.ne.s32.totalorder %s471, %s473
      %p477 = scmp.eq.s32.totalorder %s76, 0
      %p478 = por %p476, %p477
      %p479 = scmp.ne.s32.totalorder %s471, %s473
      %p480 = scmp.eq.s32.totalorder %s81, 1
      %p481 = por %p479, %p480
      %p482 = scmp.ne.s32.totalorder %s473, %s474
      %p483 = scmp.eq.s32.totalorder %s81, 0
      %p484 = por %p482, %p483
      %p485 = scmp.ne.s32.totalorder %s473, %s474
      %p486 = scmp.eq.s32.totalorder %s82, 1
      %p487 = por %p485, %p486
      %p489 = scmp.ne.s32.totalorder %s474, %s488
      %p490 = scmp.eq.s32.totalorder %s82, 0
      %p491 = por %p489, %p490
      %s493 = sadd.s32 %s492, 1
      %p496 = scmp.eq.s32.totalorder %s76, 1
      %p497 = scmp.ne.s32.totalorder %s492, %s494
      %p498 = scmp.eq.s32.totalorder %s76, 0
      %p499 = por %p497, %p498
      %p500 = scmp.ne.s32.totalorder %s492, %s494
      %p501 = scmp.eq.s32.totalorder %s81, 1
      %p502 = por %p500, %p501
      %p503 = scmp.ne.s32.totalorder %s494, %s495
      %p504 = scmp.eq.s32.totalorder %s81, 0
      %p505 = por %p503, %p504
      %p506 = scmp.ne.s32.totalorder %s494, %s495
      %p507 = scmp.eq.s32.totalorder %s82, 1
      %p508 = por %p506, %p507
      %p510 = scmp.ne.s32.totalorder %s495, %s509
      %p511 = scmp.eq.s32.totalorder %s82, 0
      %p512 = por %p510, %p511
      %s514 = sadd.s32 %s513, 1
      %p517 = scmp.eq.s32.totalorder %s76, 1
      %p518 = scmp.ne.s32.totalorder %s513, %s515
      %p519 = scmp.eq.s32.totalorder %s76, 0
      %p520 = por %p518, %p519
      %p521 = scmp.ne.s32.totalorder %s513, %s515
      %p522 = scmp.eq.s32.totalorder %s81, 1
      %p523 = por %p521, %p522
      %p524 = scmp.ne.s32.totalorder %s515, %s516
      %p525 = scmp.eq.s32.totalorder %s81, 0
      %p526 = por %p524, %p525
      %p527 = scmp.ne.s32.totalorder %s515, %s516
      %p528 = scmp.eq.s32.totalorder %s82, 1
      %p529 = por %p527, %p528
      %p531 = scmp.ne.s32.totalorder %s516, %s530
      %p532 = scmp.eq.s32.totalorder %s82, 0
      %p533 = por %p531, %p532
      %s535 = sadd.s32 %s534, 1
      %p538 = scmp.eq.s32.totalorder %s76, 1
      %p539 = scmp.ne.s32.totalorder %s534, %s536
      %p540 = scmp.eq.s32.totalorder %s76, 0
      %p541 = por %p539, %p540
      %p542 = scmp.ne.s32.totalorder %s534, %s536
      %p543 = scmp.eq.s32.totalorder %s81, 1
      %p544 = por %p542, %p543
      %p545 = scmp.ne.s32.totalorder %s536, %s537
      %p546 = scmp.eq.s32.totalorder %s81, 0
      %p547 = por %p545, %p546
      %p548 = scmp.ne.s32.totalorder %s536, %s537
      %p549 = scmp.eq.s32.totalorder %s82, 1
      %p550 = por %p548, %p549
      %p552 = scmp.ne.s32.totalorder %s537, %s551
      %p553 = scmp.eq.s32.totalorder %s82, 0
      %p554 = por %p552, %p553
      %s556 = sadd.s32 %s555, 1
      %p559 = scmp.eq.s32.totalorder %s76, 1
      %p560 = scmp.ne.s32.totalorder %s555, %s557
      %p561 = scmp.eq.s32.totalorder %s76, 0
      %p562 = por %p560, %p561
      %p563 = scmp.ne.s32.totalorder %s555, %s557
      %p564 = scmp.eq.s32.totalorder %s81, 1
      %p565 = por %p563, %p564
      %p566 = scmp.ne.s32.totalorder %s557, %s558
      %p567 = scmp.eq.s32.totalorder %s81, 0
      %p568 = por %p566, %p567
      %p569 = scmp.ne.s32.totalorder %s557, %s558
      %p570 = scmp.eq.s32.totalorder %s82, 1
      %p571 = por %p569, %p570
      %p573 = scmp.ne.s32.totalorder %s558, %s572
      %p574 = scmp.eq.s32.totalorder %s82, 0
      %p575 = por %p573, %p574
      %s577 = sadd.s32 %s576, 1
      %p580 = scmp.eq.s32.totalorder %s76, 1
      %p581 = scmp.ne.s32.totalorder %s576, %s578
      %p582 = scmp.eq.s32.totalorder %s76, 0
      %p583 = por %p581, %p582
      %p584 = scmp.ne.s32.totalorder %s576, %s578
      %p585 = scmp.eq.s32.totalorder %s81, 1
      %p586 = por %p584, %p585
      %p587 = scmp.ne.s32.totalorder %s578, %s579
      %p588 = scmp.eq.s32.totalorder %s81, 0
      %p589 = por %p587, %p588
      %p590 = scmp.ne.s32.totalorder %s578, %s579
      %p591 = scmp.eq.s32.totalorder %s82, 1
      %p592 = por %p590, %p591
      %p594 = scmp.ne.s32.totalorder %s579, %s593
      %p595 = scmp.eq.s32.totalorder %s82, 0
      %p596 = por %p594, %p595
      %s598 = sadd.s32 %s597, 1
      %p601 = scmp.eq.s32.totalorder %s76, 1
      %p602 = scmp.ne.s32.totalorder %s597, %s599
      %p603 = scmp.eq.s32.totalorder %s76, 0
      %p604 = por %p602, %p603
      %p605 = scmp.ne.s32.totalorder %s597, %s599
      %p606 = scmp.eq.s32.totalorder %s81, 1
      %p607 = por %p605, %p606
      %p608 = scmp.ne.s32.totalorder %s599, %s600
      %p609 = scmp.eq.s32.totalorder %s81, 0
      %p610 = por %p608, %p609
      %p611 = scmp.ne.s32.totalorder %s599, %s600
      %p612 = scmp.eq.s32.totalorder %s82, 1
      %p613 = por %p611, %p612
      %p615 = scmp.ne.s32.totalorder %s600, %s614
      %p616 = scmp.eq.s32.totalorder %s82, 0
      %p617 = por %p615, %p616
      %s619 = sadd.s32 %s618, 1
      %p622 = scmp.eq.s32.totalorder %s76, 1
      %p623 = scmp.ne.s32.totalorder %s618, %s620
      %p624 = scmp.eq.s32.totalorder %s76, 0
      %p625 = por %p623, %p624
      %p626 = scmp.ne.s32.totalorder %s618, %s620
      %p627 = scmp.eq.s32.totalorder %s81, 1
      %p628 = por %p626, %p627
      %p629 = scmp.ne.s32.totalorder %s620, %s621
      %p630 = scmp.eq.s32.totalorder %s81, 0
      %p631 = por %p629, %p630
      %p632 = scmp.ne.s32.totalorder %s620, %s621
      %p633 = scmp.eq.s32.totalorder %s82, 1
      %p634 = por %p632, %p633
      %p636 = scmp.ne.s32.totalorder %s621, %s635
      %p637 = scmp.eq.s32.totalorder %s82, 0
      %p638 = por %p636, %p637
      %s640 = sadd.s32 %s639, 1
      %p643 = scmp.eq.s32.totalorder %s76, 1
      %p644 = scmp.ne.s32.totalorder %s639, %s641
      %p645 = scmp.eq.s32.totalorder %s76, 0
      %p646 = por %p644, %p645
      %p647 = scmp.ne.s32.totalorder %s639, %s641
      %p648 = scmp.eq.s32.totalorder %s81, 1
      %p649 = por %p647, %p648
      %p650 = scmp.ne.s32.totalorder %s641, %s642
      %p651 = scmp.eq.s32.totalorder %s81, 0
      %p652 = por %p650, %p651
      %p653 = scmp.ne.s32.totalorder %s641, %s642
      %p654 = scmp.eq.s32.totalorder %s82, 1
      %p655 = por %p653, %p654
      %p657 = scmp.ne.s32.totalorder %s642, %s656
      %p658 = scmp.eq.s32.totalorder %s82, 0
      %p659 = por %p657, %p658
      %s661 = sadd.s32 %s660, 1
      %p664 = scmp.eq.s32.totalorder %s76, 1
      %p665 = scmp.ne.s32.totalorder %s660, %s662
      %p666 = scmp.eq.s32.totalorder %s76, 0
      %p667 = por %p665, %p666
      %p668 = scmp.ne.s32.totalorder %s660, %s662
      %p669 = scmp.eq.s32.totalorder %s81, 1
      %p670 = por %p668, %p669
      %p671 = scmp.ne.s32.totalorder %s662, %s663
      %p672 = scmp.eq.s32.totalorder %s81, 0
      %p673 = por %p671, %p672
      %p674 = scmp.ne.s32.totalorder %s662, %s663
      %p675 = scmp.eq.s32.totalorder %s82, 1
      %p676 = por %p674, %p675
      %p678 = scmp.ne.s32.totalorder %s663, %s677
      %p679 = scmp.eq.s32.totalorder %s82, 0
      %p680 = por %p678, %p679
      %s682 = sadd.s32 %s681, 1
      %p685 = scmp.eq.s32.totalorder %s76, 1
      %p686 = scmp.ne.s32.totalorder %s681, %s683
      %p687 = scmp.eq.s32.totalorder %s76, 0
      %p688 = por %p686, %p687
      %p689 = scmp.ne.s32.totalorder %s681, %s683
      %p690 = scmp.eq.s32.totalorder %s81, 1
      %p691 = por %p689, %p690
      %p692 = scmp.ne.s32.totalorder %s683, %s684
      %p693 = scmp.eq.s32.totalorder %s81, 0
      %p694 = por %p692, %p693
      %p695 = scmp.ne.s32.totalorder %s683, %s684
      %p696 = scmp.eq.s32.totalorder %s82, 1
      %p697 = por %p695, %p696
      %p699 = scmp.ne.s32.totalorder %s684, %s698
      %p700 = scmp.eq.s32.totalorder %s82, 0
      %p701 = por %p699, %p700
      %s703 = sadd.s32 %s702, 1
      %p706 = scmp.eq.s32.totalorder %s76, 1
      %p707 = scmp.ne.s32.totalorder %s702, %s704
      %p708 = scmp.eq.s32.totalorder %s76, 0
      %p709 = por %p707, %p708
      %p710 = scmp.ne.s32.totalorder %s702, %s704
      %p711 = scmp.eq.s32.totalorder %s81, 1
      %p712 = por %p710, %p711
      %p713 = scmp.ne.s32.totalorder %s704, %s705
      %p714 = scmp.eq.s32.totalorder %s81, 0
      %p715 = por %p713, %p714
      %p716 = scmp.ne.s32.totalorder %s704, %s705
      %p717 = scmp.eq.s32.totalorder %s82, 1
      %p718 = por %p716, %p717
      %p720 = scmp.ne.s32.totalorder %s705, %s719
      %p721 = scmp.eq.s32.totalorder %s82, 0
      %p722 = por %p720, %p721
      %s724 = sadd.s32 %s723, 1
      %p727 = scmp.eq.s32.totalorder %s76, 1
      %p728 = scmp.ne.s32.totalorder %s723, %s725
      %p729 = scmp.eq.s32.totalorder %s76, 0
      %p730 = por %p728, %p729
      %p731 = scmp.ne.s32.totalorder %s723, %s725
      %p732 = scmp.eq.s32.totalorder %s81, 1
      %p733 = por %p731, %p732
      %p734 = scmp.ne.s32.totalorder %s725, %s726
      %p735 = scmp.eq.s32.totalorder %s81, 0
      %p736 = por %p734, %p735
      %p737 = scmp.ne.s32.totalorder %s725, %s726
      %p738 = scmp.eq.s32.totalorder %s82, 1
      %p739 = por %p737, %p738
      %p741 = scmp.ne.s32.totalorder %s726, %s740
      %p742 = scmp.eq.s32.totalorder %s82, 0
      %p743 = por %p741, %p742
      %s744 = ssub.s32 %s76, %s83
      %p745 = scmp.eq.s32.totalorder %s744, 0
      %s747 = sadd.s32 %s746, 1
      %s748 = scalar_select %p745, %s746, %s747
      %p751 = pneg %p745
      %p752 = scmp.eq.s32.totalorder %s76, 1
      %p753 = por %p751, %p752
      %p754 = scmp.ne.s32.totalorder %s746, %s749
      %p755 = scmp.eq.s32.totalorder %s76, 0
      %p756 = por %p754, %p755
      %p757 = scmp.ne.s32.totalorder %s746, %s749
      %p758 = scmp.eq.s32.totalorder %s81, 1
      %p759 = por %p757, %p758
      %p760 = scmp.ne.s32.totalorder %s749, %s750
      %p761 = scmp.eq.s32.totalorder %s81, 0
      %p762 = por %p760, %p761
      %p763 = scmp.ne.s32.totalorder %s749, %s750
      %p764 = scmp.eq.s32.totalorder %s82, 1
      %p765 = por %p763, %p764
      %p767 = scmp.ne.s32.totalorder %s750, %s766
      %p768 = scmp.eq.s32.totalorder %s82, 0
      %p769 = por %p767, %p768
      %s770 = ssub.s32 %s76, %s83
      %p771 = scmp.eq.s32.totalorder %s770, 0
      %s773 = sadd.s32 %s772, 1
      %s774 = scalar_select %p771, %s772, %s773
      %p777 = pneg %p771
      %p778 = scmp.eq.s32.totalorder %s76, 1
      %p779 = por %p777, %p778
      %p780 = scmp.ne.s32.totalorder %s772, %s775
      %p781 = scmp.eq.s32.totalorder %s76, 0
      %p782 = por %p780, %p781
      %p783 = scmp.ne.s32.totalorder %s772, %s775
      %p784 = scmp.eq.s32.totalorder %s81, 1
      %p785 = por %p783, %p784
      %p786 = scmp.ne.s32.totalorder %s775, %s776
      %p787 = scmp.eq.s32.totalorder %s81, 0
      %p788 = por %p786, %p787
      %p789 = scmp.ne.s32.totalorder %s775, %s776
      %p790 = scmp.eq.s32.totalorder %s82, 1
      %p791 = por %p789, %p790
      %p793 = scmp.ne.s32.totalorder %s776, %s792
      %p794 = scmp.eq.s32.totalorder %s82, 0
      %p795 = por %p793, %p794
      %p796 = scmp.le.s32.totalorder 1, %s76
      %p797 = scmp.lt.s32.totalorder %s76, 3
      %p798 = pnand %p796, %p797
      %p799 = pneg %p798
      // Predicated region
      $region9: #{tpu_custom_call.1} parent=5 // pred_check
        _
      $region10: #{tpu_custom_call.1} parent=5 // pred_check_branch
        %801 = sbr.rel (%p798) target = $region12
      $region11: #{tpu_custom_call.1} parent=5 // pred_region
        %s802 = ssub.s32 %s76, 1
        // Predicated region
        $region13: #{tpu_custom_call.1} parent=11 // pred_check
          %p803 = pneg %p253
        $region14: #{tpu_custom_call.1} parent=11 // pred_check_branch
          %805 = sbr.rel (%p803) target = $region16
        $region15: #{tpu_custom_call.1} parent=11 // pred_region
          _
        $region16: #{tpu_custom_call.1} parent=11 // pred_fallthru
          _
        // Predicated region
        $region17: #{tpu_custom_call.1} parent=11 // pred_check
          %p806 = pneg %p274
        $region18: #{tpu_custom_call.1} parent=11 // pred_check_branch
          %808 = sbr.rel (%p806) target = $region20
        $region19: #{tpu_custom_call.1} parent=11 // pred_region
          _
        $region20: #{tpu_custom_call.1} parent=11 // pred_fallthru
          _
        // Predicated region
        $region21: #{tpu_custom_call.1} parent=11 // pred_check
          %p809 = pneg %p295
        $region22: #{tpu_custom_call.1} parent=11 // pred_check_branch
          %811 = sbr.rel (%p809) target = $region24
        $region23: #{tpu_custom_call.1} parent=11 // pred_region
          _
        $region24: #{tpu_custom_call.1} parent=11 // pred_fallthru
          _
        // Predicated region
        $region25: #{tpu_custom_call.1} parent=11 // pred_check
          %p812 = pneg %p316
        $region26: #{tpu_custom_call.1} parent=11 // pred_check_branch
          %814 = sbr.rel (%p812) target = $region28
        $region27: #{tpu_custom_call.1} parent=11 // pred_region
          _
        $region28: #{tpu_custom_call.1} parent=11 // pred_fallthru
          _
        // Predicated region
        $region29: #{tpu_custom_call.1} parent=11 // pred_check
          %p815 = pneg %p337
        $region30: #{tpu_custom_call.1} parent=11 // pred_check_branch
          %817 = sbr.rel (%p815) target = $region32
        $region31: #{tpu_custom_call.1} parent=11 // pred_region
          _
        $region32: #{tpu_custom_call.1} parent=11 // pred_fallthru
          _
        // Predicated region
        $region33: #{tpu_custom_call.1} parent=11 // pred_check
          %p818 = pneg %p358
        $region34: #{tpu_custom_call.1} parent=11 // pred_check_branch
          %820 = sbr.rel (%p818) target = $region36
        $region35: #{tpu_custom_call.1} parent=11 // pred_region
          _
        $region36: #{tpu_custom_call.1} parent=11 // pred_fallthru
          _
        // Predicated region
        $region37: #{tpu_custom_call.1} parent=11 // pred_check
          %p821 = pneg %p379
        $region38: #{tpu_custom_call.1} parent=11 // pred_check_branch
          %823 = sbr.rel (%p821) target = $region40
        $region39: #{tpu_custom_call.1} parent=11 // pred_region
          _
        $region40: #{tpu_custom_call.1} parent=11 // pred_fallthru
          _
        // Predicated region
        $region41: #{tpu_custom_call.1} parent=11 // pred_check
          %p824 = pneg %p400
        $region42: #{tpu_custom_call.1} parent=11 // pred_check_branch
          %826 = sbr.rel (%p824) target = $region44
        $region43: #{tpu_custom_call.1} parent=11 // pred_region
          _
        $region44: #{tpu_custom_call.1} parent=11 // pred_fallthru
          _
        // Predicated region
        $region45: #{tpu_custom_call.1} parent=11 // pred_check
          %p827 = pneg %p421
        $region46: #{tpu_custom_call.1} parent=11 // pred_check_branch
          %829 = sbr.rel (%p827) target = $region48
        $region47: #{tpu_custom_call.1} parent=11 // pred_region
          _
        $region48: #{tpu_custom_call.1} parent=11 // pred_fallthru
          _
        // Predicated region
        $region49: #{tpu_custom_call.1} parent=11 // pred_check
          %p830 = pneg %p442
        $region50: #{tpu_custom_call.1} parent=11 // pred_check_branch
          %832 = sbr.rel (%p830) target = $region52
        $region51: #{tpu_custom_call.1} parent=11 // pred_region
          _
        $region52: #{tpu_custom_call.1} parent=11 // pred_fallthru
          _
        // Predicated region
        $region53: #{tpu_custom_call.1} parent=11 // pred_check
          %p833 = pneg %p463
        $region54: #{tpu_custom_call.1} parent=11 // pred_check_branch
          %835 = sbr.rel (%p833) target = $region56
        $region55: #{tpu_custom_call.1} parent=11 // pred_region
          _
        $region56: #{tpu_custom_call.1} parent=11 // pred_fallthru
          _
        // Predicated region
        $region57: #{tpu_custom_call.1} parent=11 // pred_check
          %p836 = pneg %p484
        $region58: #{tpu_custom_call.1} parent=11 // pred_check_branch
          %838 = sbr.rel (%p836) target = $region60
        $region59: #{tpu_custom_call.1} parent=11 // pred_region
          _
        $region60: #{tpu_custom_call.1} parent=11 // pred_fallthru
          _
        // Predicated region
        $region61: #{tpu_custom_call.1} parent=11 // pred_check
          %p839 = pneg %p505
        $region62: #{tpu_custom_call.1} parent=11 // pred_check_branch
          %841 = sbr.rel (%p839) target = $region64
        $region63: #{tpu_custom_call.1} parent=11 // pred_region
          _
        $region64: #{tpu_custom_call.1} parent=11 // pred_fallthru
          _
        // Predicated region
        $region65: #{tpu_custom_call.1} parent=11 // pred_check
          %p842 = pneg %p526
        $region66: #{tpu_custom_call.1} parent=11 // pred_check_branch
          %844 = sbr.rel (%p842) target = $region68
        $region67: #{tpu_custom_call.1} parent=11 // pred_region
          _
        $region68: #{tpu_custom_call.1} parent=11 // pred_fallthru
          _
        // Predicated region
        $region69: #{tpu_custom_call.1} parent=11 // pred_check
          %p845 = pneg %p547
        $region70: #{tpu_custom_call.1} parent=11 // pred_check_branch
          %847 = sbr.rel (%p845) target = $region72
        $region71: #{tpu_custom_call.1} parent=11 // pred_region
          _
        $region72: #{tpu_custom_call.1} parent=11 // pred_fallthru
          _
        // Predicated region
        $region73: #{tpu_custom_call.1} parent=11 // pred_check
          %p848 = pneg %p568
        $region74: #{tpu_custom_call.1} parent=11 // pred_check_branch
          %850 = sbr.rel (%p848) target = $region76
        $region75: #{tpu_custom_call.1} parent=11 // pred_region
          _
        $region76: #{tpu_custom_call.1} parent=11 // pred_fallthru
          _
        // Predicated region
        $region77: #{tpu_custom_call.1} parent=11 // pred_check
          %p851 = pneg %p589
        $region78: #{tpu_custom_call.1} parent=11 // pred_check_branch
          %853 = sbr.rel (%p851) target = $region80
        $region79: #{tpu_custom_call.1} parent=11 // pred_region
          _
        $region80: #{tpu_custom_call.1} parent=11 // pred_fallthru
          _
        // Predicated region
        $region81: #{tpu_custom_call.1} parent=11 // pred_check
          %p854 = pneg %p610
        $region82: #{tpu_custom_call.1} parent=11 // pred_check_branch
          %856 = sbr.rel (%p854) target = $region84
        $region83: #{tpu_custom_call.1} parent=11 // pred_region
          _
        $region84: #{tpu_custom_call.1} parent=11 // pred_fallthru
          _
        // Predicated region
        $region85: #{tpu_custom_call.1} parent=11 // pred_check
          %p857 = pneg %p631
        $region86: #{tpu_custom_call.1} parent=11 // pred_check_branch
          %859 = sbr.rel (%p857) target = $region88
        $region87: #{tpu_custom_call.1} parent=11 // pred_region
          _
        $region88: #{tpu_custom_call.1} parent=11 // pred_fallthru
          _
        // Predicated region
        $region89: #{tpu_custom_call.1} parent=11 // pred_check
          %p860 = pneg %p652
        $region90: #{tpu_custom_call.1} parent=11 // pred_check_branch
          %862 = sbr.rel (%p860) target = $region92
        $region91: #{tpu_custom_call.1} parent=11 // pred_region
          _
        $region92: #{tpu_custom_call.1} parent=11 // pred_fallthru
          _
        // Predicated region
        $region93: #{tpu_custom_call.1} parent=11 // pred_check
          %p863 = pneg %p673
        $region94: #{tpu_custom_call.1} parent=11 // pred_check_branch
          %865 = sbr.rel (%p863) target = $region96
        $region95: #{tpu_custom_call.1} parent=11 // pred_region
          _
        $region96: #{tpu_custom_call.1} parent=11 // pred_fallthru
          _
        // Predicated region
        $region97: #{tpu_custom_call.1} parent=11 // pred_check
          %p866 = pneg %p694
        $region98: #{tpu_custom_call.1} parent=11 // pred_check_branch
          %868 = sbr.rel (%p866) target = $region100
        $region99: #{tpu_custom_call.1} parent=11 // pred_region
          _
        $region100: #{tpu_custom_call.1} parent=11 // pred_fallthru
          _
        // Predicated region
        $region101: #{tpu_custom_call.1} parent=11 // pred_check
          %p869 = pneg %p715
        $region102: #{tpu_custom_call.1} parent=11 // pred_check_branch
          %871 = sbr.rel (%p869) target = $region104
        $region103: #{tpu_custom_call.1} parent=11 // pred_region
          _
        $region104: #{tpu_custom_call.1} parent=11 // pred_fallthru
          _
        // Predicated region
        $region105: #{tpu_custom_call.1} parent=11 // pred_check
          %p872 = pneg %p736
        $region106: #{tpu_custom_call.1} parent=11 // pred_check_branch
          %874 = sbr.rel (%p872) target = $region108
        $region107: #{tpu_custom_call.1} parent=11 // pred_region
          _
        $region108: #{tpu_custom_call.1} parent=11 // pred_fallthru
          _
      $region12: #{tpu_custom_call.1} parent=5 // pred_fallthru
        _
      %p875 = scmp.lt.s32.totalorder %s76, 2
      // Predicated region
      $region109: #{tpu_custom_call.1} parent=5 // pred_check
        %p876 = pneg %p875
      $region110: #{tpu_custom_call.1} parent=5 // pred_check_branch
        %878 = sbr.rel (%p876) target = $region112
      $region111: #{tpu_custom_call.1} parent=5 // pred_region
        // Predicated region
        $region113: #{tpu_custom_call.1} parent=111 // pred_check
          %p879 = pneg %p96
        $region114: #{tpu_custom_call.1} parent=111 // pred_check_branch
          %881 = sbr.rel (%p879) target = $region116
        $region115: #{tpu_custom_call.1} parent=111 // pred_region
          %p882 = scmp.lt.s32.totalorder %s76, 1
          %s883 = scalar_select %p882, %s76, 1
          %s884 = smul.addr %s883, 8
          %s885 = scalar_lea.vmem %s1, %s884
        $region116: #{tpu_custom_call.1} parent=111 // pred_fallthru
          _
        // Predicated region
        $region117: #{tpu_custom_call.1} parent=111 // pred_check
          %p886 = pneg %p122
        $region118: #{tpu_custom_call.1} parent=111 // pred_check_branch
          %888 = sbr.rel (%p886) target = $region120
        $region119: #{tpu_custom_call.1} parent=111 // pred_region
          %p889 = scmp.lt.s32.totalorder %s76, 1
          %s890 = scalar_select %p889, %s76, 1
          %s891 = smul.addr %s890, 2
          %s892 = smul.addr %s891, 8
          %s893 = scalar_lea.vmem %s3, %s892
        $region120: #{tpu_custom_call.1} parent=111 // pred_fallthru
          _
        // Predicated region
        $region121: #{tpu_custom_call.1} parent=111 // pred_check
          %p894 = pneg %p148
        $region122: #{tpu_custom_call.1} parent=111 // pred_check_branch
          %896 = sbr.rel (%p894) target = $region124
        $region123: #{tpu_custom_call.1} parent=111 // pred_region
          %p897 = scmp.lt.s32.totalorder %s76, 1
          %s898 = scalar_select %p897, %s76, 1
          %s899 = smul.addr %s898, 8
          %s900 = scalar_lea.vmem %s5, %s899
        $region124: #{tpu_custom_call.1} parent=111 // pred_fallthru
          _
        // Predicated region
        $region125: #{tpu_custom_call.1} parent=111 // pred_check
          %p901 = pneg %p174
        $region126: #{tpu_custom_call.1} parent=111 // pred_check_branch
          %903 = sbr.rel (%p901) target = $region128
        $region127: #{tpu_custom_call.1} parent=111 // pred_region
          %p904 = scmp.lt.s32.totalorder %s76, 1
          %s905 = scalar_select %p904, %s76, 1
          %s906 = scalar_lea.vmem %s7, %s905
        $region128: #{tpu_custom_call.1} parent=111 // pred_fallthru
          _
        // Predicated region
        $region129: #{tpu_custom_call.1} parent=111 // pred_check
          %p907 = pneg %p200
        $region130: #{tpu_custom_call.1} parent=111 // pred_check_branch
          %909 = sbr.rel (%p907) target = $region132
        $region131: #{tpu_custom_call.1} parent=111 // pred_region
          %p910 = scmp.lt.s32.totalorder %s76, 1
          %s911 = scalar_select %p910, %s76, 1
          %s912 = smul.addr %s911, 2
          %s913 = smul.addr %s912, 8
          %s914 = scalar_lea.vmem %s9, %s913
        $region132: #{tpu_custom_call.1} parent=111 // pred_fallthru
          _
        // Predicated region
        $region133: #{tpu_custom_call.1} parent=111 // pred_check
          %p915 = pneg %p226
        $region134: #{tpu_custom_call.1} parent=111 // pred_check_branch
          %917 = sbr.rel (%p915) target = $region136
        $region135: #{tpu_custom_call.1} parent=111 // pred_region
          %p918 = scmp.lt.s32.totalorder %s76, 1
          %s919 = scalar_select %p918, %s76, 1
          %s920 = scalar_lea.vmem %s11, %s919
        $region136: #{tpu_custom_call.1} parent=111 // pred_fallthru
          _
      $region112: #{tpu_custom_call.1} parent=5 // pred_fallthru
        _
      %p921 = scmp.le.s32.totalorder 1, %s76
      %p922 = scmp.lt.s32.totalorder %s76, 3
      %p923 = pnand %p921, %p922
      %p924 = pneg %p923
      // Predicated region
      $region137: #{tpu_custom_call.1} parent=5 // pred_check
        _
      $region138: #{tpu_custom_call.1} parent=5 // pred_check_branch
        %926 = sbr.rel (%p923) target = $region140
      $region139: #{tpu_custom_call.1} parent=5 // pred_region
        %s927 = ssub.s32 %s76, 1
        %p928 = scmp.lt.s32.totalorder %s81, 1
        %s929 = scalar_select %p928, %s81, 1
        %s930 = smul.addr %s929, 8
        %s931 = scalar_lea.vmem %s1, %s930
        %p932 = pneg %p102
        %p933 = pneg %p99
        %p934 = scmp.lt.s32.totalorder %s81, 1
        %s935 = scalar_select %p934, %s81, 1
        %s936 = smul.addr %s935, 2
        %s937 = smul.addr %s936, 8
        %s938 = scalar_lea.vmem %s3, %s937
        %p939 = pneg %p128
        %p940 = pneg %p125
        %p941 = scmp.lt.s32.totalorder %s81, 1
        %s942 = scalar_select %p941, %s81, 1
        %s943 = smul.addr %s942, 8
        %s944 = scalar_lea.vmem %s5, %s943
        %p945 = pneg %p154
        %p946 = pneg %p151
        %p947 = scmp.lt.s32.totalorder %s81, 1
        %s948 = scalar_select %p947, %s81, 1
        %s949 = scalar_lea.vmem %s7, %s948
        %p950 = pneg %p180
        %p951 = pneg %p177
        %p952 = scmp.lt.s32.totalorder %s81, 1
        %s953 = scalar_select %p952, %s81, 1
        %s954 = smul.addr %s953, 2
        %s955 = smul.addr %s954, 8
        %s956 = scalar_lea.vmem %s9, %s955
        %p957 = pneg %p206
        %p958 = pneg %p203
        %p959 = scmp.lt.s32.totalorder %s81, 1
        %s960 = scalar_select %p959, %s81, 1
        %s961 = scalar_lea.vmem %s11, %s960
        %p962 = pneg %p232
        %p963 = pneg %p229
        %p964 = pneg %p253
        %p965 = pneg %p250
        %p966 = pneg %p274
        %p967 = pneg %p271
        %p968 = pneg %p295
        %p969 = pneg %p292
        %p970 = pneg %p316
        %p971 = pneg %p313
        %p972 = pneg %p337
        %p973 = pneg %p334
        %p974 = pneg %p358
        %p975 = pneg %p355
        %p976 = pneg %p379
        %p977 = pneg %p376
        %p978 = pneg %p400
        %p979 = pneg %p397
        %p980 = pneg %p421
        %p981 = pneg %p418
        %p982 = pneg %p442
        %p983 = pneg %p439
        %p984 = pneg %p463
        %p985 = pneg %p460
        %p986 = pneg %p484
        %p987 = pneg %p481
        %p988 = pneg %p505
        %p989 = pneg %p502
        %p990 = pneg %p526
        %p991 = pneg %p523
        %p992 = pneg %p547
        %p993 = pneg %p544
        %p994 = pneg %p568
        %p995 = pneg %p565
        %p996 = pneg %p589
        %p997 = pneg %p586
        %p998 = pneg %p610
        %p999 = pneg %p607
        %p1000 = pneg %p631
        %p1001 = pneg %p628
        %p1002 = pneg %p652
        %p1003 = pneg %p649
        %p1004 = pneg %p673
        %p1005 = pneg %p670
        %p1006 = pneg %p694
        %p1007 = pneg %p691
        %p1008 = pneg %p715
        %p1009 = pneg %p712
        %p1010 = pneg %p736
        %p1011 = pneg %p733
        %p1012 = pneg %p762
        %p1013 = pneg %p759
        %s1014 = sand.u32 %s749, 1
        %s1015 = scalar_lea.sflag [#allocation5], %s1014
        %s1016 = sand.u32 %s749, 1
        %s1017 = smul.addr %s1016, 8
        %s1018 = scalar_lea.vmem [#allocation4], %s1017
        %p1019 = pneg %p788
        %p1020 = pneg %p785
        %s1021 = sand.u32 %s775, 1
        %s1022 = scalar_lea.sflag [#allocation7], %s1021
        %s1023 = sand.u32 %s775, 1
        %s1024 = smul.addr %s1023, 16
        %s1025 = scalar_lea.vmem [#allocation6], %s1024
        %p1026 = scmp.lt.s32.totalorder %s81, 1
        %s1027 = scalar_select %p1026, %s81, 1
        %s1028 = smul.addr %s1027, 8
        %s1029 = scalar_lea.vmem %s1, %s1028
        %p1030 = scmp.lt.s32.totalorder %s81, 1
        %s1031 = scalar_select %p1030, %s81, 1
        %s1032 = smul.addr %s1031, 2
        %s1033 = smul.addr %s1032, 8
        %s1034 = scalar_lea.vmem %s3, %s1033
        %p1035 = scmp.lt.s32.totalorder %s81, 1
        %s1036 = scalar_select %p1035, %s81, 1
        %s1037 = smul.addr %s1036, 8
        %s1038 = scalar_lea.vmem %s5, %s1037
        %p1039 = scmp.lt.s32.totalorder %s81, 1
        %s1040 = scalar_select %p1039, %s81, 1
        %s1041 = scalar_lea.vmem %s7, %s1040
        %p1042 = scmp.lt.s32.totalorder %s81, 1
        %s1043 = scalar_select %p1042, %s81, 1
        %s1044 = smul.addr %s1043, 2
        %s1045 = smul.addr %s1044, 8
        %s1046 = scalar_lea.vmem %s9, %s1045
        %p1047 = scmp.lt.s32.totalorder %s81, 1
        %s1048 = scalar_select %p1047, %s81, 1
        %s1049 = scalar_lea.vmem %s11, %s1048
        %v1051 = vld [vmem:[%s1029] sm:$0xff]
        %v1052 = vld [vmem:[%s1034] sm:$0xff]
        %v1053 = vld [vmem:[%s1034 + $0x8] sm:$0xff]
        %v1054 = vld [vmem:[%s13] sm:$0x1]
        %v1055 = vld [vmem:[%s15] sm:$0x1]
        %vm1056 = vcmask 261120
        %v1057 = vsel %vm1056, %v1051, 0.0
        %1058 = vadd.xlane.f32.xlu0 %v1057
        %v1059 = vpop.xlane.xlu0 %1058
        %v1060 = vrcp.pop 32.0
        %v1061 = vmul.f32 32.0, %v1060
        %v1062 = vsub.f32 1.0, %v1061
        %v1063 = vmul.f32 %v1060, %v1062
        %v1064 = vadd.f32 %v1060, %v1063
        %vm1065 = vweird.f32 %v1060
        %v1066 = vsel %vm1065, %v1060, %v1064
        %v1067 = vmul.f32 %v1059, %v1066
        %v1068 = vsub.f32 %v1051, %v1067
        %v1069 = vmul.f32 %v1068, %v1068
        %v1070 = vsel %vm1056, %v1069, 0.0
        %1071 = vadd.xlane.f32.xlu0 %v1070
        %v1072 = vpop.xlane.xlu0 %1071
        %v1073 = vmul.f32 %v1072, %v1066
        %v1074 = vadd.f32 %v1073, 1e-05
        %v1075 = vrsqrt.pop %v1074
        %v1076 = vmul.f32 %v1075, %v1074
        %v1077 = vmul.f32 %v1076, %v1075
        %v1078 = vmul.f32 0.5, %v1077
        %v1079 = vsub.f32 1.5, %v1078
        %v1080 = vmul.f32 %v1075, %v1079
        %vm1081 = vweird.f32 %v1074
        %vm1082 = vweird.f32 %v1075
        %vm1083 = vmor %vm1081, %vm1082
        %v1084 = vsel %vm1083, %v1075, %v1080
        %v1085 = vmul.f32 %v1068, %v1084
        %v1087 = vperm.slane %v1054, 0
        %v1089 = vmul.f32 %v1085, %v1087
        %v1091 = vperm.slane %v1055, 0
        %v1093 = vadd.f32 %v1089, %v1091
        %v1094 = vpack.c.bf16 %v1093, %v1093
        %v1095 = vld [vmem:[%s17] sm:$0x1]
        %v1096 = vld [vmem:[%s19] sm:$0x1]
        %vm1097 = vcmask 392192
        %v1098 = vsel %vm1097, %v1052, 0.0
        %1099 = vadd.xlane.f32.xlu0 %v1098
        %v1100 = vpop.xlane.xlu0 %1099
        %v1101 = vsel %vm1097, %v1053, 0.0
        %1102 = vadd.xlane.f32.xlu0 %v1101
        %v1103 = vpop.xlane.xlu0 %1102
        %v1104 = vrcp.pop 48.0
        %v1105 = vmul.f32 48.0, %v1104
        %v1106 = vsub.f32 1.0, %v1105
        %v1107 = vmul.f32 %v1104, %v1106
        %v1108 = vadd.f32 %v1104, %v1107
        %vm1109 = vweird.f32 %v1104
        %v1110 = vsel %vm1109, %v1104, %v1108
        %v1111 = vmul.f32 %v1100, %v1110
        %v1112 = vmul.f32 %v1103, %v1110
        %v1113 = vsub.f32 %v1052, %v1111
        %v1114 = vsub.f32 %v1053, %v1112
        %v1115 = vmul.f32 %v1113, %v1113
        %v1116 = vmul.f32 %v1114, %v1114
        %v1117 = vsel %vm1097, %v1115, 0.0
        %1118 = vadd.xlane.f32.xlu0 %v1117
        %v1119 = vpop.xlane.xlu0 %1118
        %v1120 = vsel %vm1097, %v1116, 0.0
        %1121 = vadd.xlane.f32.xlu0 %v1120
        %v1122 = vpop.xlane.xlu0 %1121
        %v1123 = vmul.f32 %v1119, %v1110
        %v1124 = vmul.f32 %v1122, %v1110
        %v1125 = vadd.f32 %v1123, 1e-05
        %v1126 = vadd.f32 %v1124, 1e-05
        %v1127 = vrsqrt.pop %v1125
        %v1128 = vmul.f32 %v1127, %v1125
        %v1129 = vmul.f32 %v1128, %v1127
        %v1130 = vmul.f32 0.5, %v1129
        %v1131 = vsub.f32 1.5, %v1130
        %v1132 = vmul.f32 %v1127, %v1131
        %vm1133 = vweird.f32 %v1125
        %vm1134 = vweird.f32 %v1127
        %vm1135 = vmor %vm1133, %vm1134
        %v1136 = vsel %vm1135, %v1127, %v1132
        %v1137 = vrsqrt.pop %v1126
        %v1138 = vmul.f32 %v1137, %v1126
        %v1139 = vmul.f32 %v1138, %v1137
        %v1140 = vmul.f32 0.5, %v1139
        %v1141 = vsub.f32 1.5, %v1140
        %v1142 = vmul.f32 %v1137, %v1141
        %vm1143 = vweird.f32 %v1126
        %vm1144 = vweird.f32 %v1137
        %vm1145 = vmor %vm1143, %vm1144
        %v1146 = vsel %vm1145, %v1137, %v1142
        %v1147 = vmul.f32 %v1113, %v1136
        %v1148 = vmul.f32 %v1114, %v1146
        %v1150 = vperm.slane %v1095, 0
        %v1152 = vmul.f32 %v1147, %v1150
        %v1153 = vmul.f32 %v1148, %v1150
        %v1155 = vperm.slane %v1096, 0
        %v1157 = vadd.f32 %v1152, %v1155
        %v1158 = vadd.f32 %v1153, %v1155
        %v1159 = vpack.c.bf16 %v1158, %v1157
        %v1160 = vld [vmem:[%s21] sm:$0xf]
        %v1161 = vld [vmem:[%s21 + $0x4] sm:$0xf]
        %v1162 = vld [vmem:[%s21 + $0x8] sm:$0xf]
        %v1163 = vld [vmem:[%s21 + $0xc] sm:$0xf]
        %v1168 = vunpack.c.l.b16 %v1160
        %v1169 = vunpack.c.l.b16 %v1161
        %v1170 = vunpack.c.l.b16 %v1162
        %v1171 = vunpack.c.l.b16 %v1163
        %v1172 = vpack.c.b16 %v1169, %v1168
        %v1173 = vpack.c.b16 %v1171, %v1170
        %v1177 = vsel %vm1056, %v1094, 0
        %1179 = vmatpush.bf16.msra.mxu0 0
        %1180 = vmatpush.bf16.msra.mxu0 0
        %1181 = vmatpush.bf16.msra.mxu0 0
        %1182 = vmatpush.bf16.msra.mxu0 0
        %1183 = vmatpush.bf16.msra.mxu0 0
        %1184 = vmatpush.bf16.msra.mxu0 0
        %1185 = vmatpush.bf16.msra.mxu0 %v1173
        %1186 = vmatpush.bf16.msra.mxu0 %v1172
        %1187 = vmatmul.bf16.gmra.mxu0 %v1177
        %v1188 = vpop.f32.mrf.mxu0
        %v1189 = vadd.f32 0.0, %v1188
        %v1190 = vpop.f32.mrf.mxu0
        %1191 = vdwg.mxu0
        %v1192 = vpack.c.bf16 %v1189, %v1189
        %v1193 = vld [vmem:[%s23] sm:$0xf]
        %v1194 = vld [vmem:[%s23 + $0x4] sm:$0xf]
        %v1195 = vld [vmem:[%s23 + $0x8] sm:$0xf]
        %v1196 = vld [vmem:[%s23 + $0xc] sm:$0xf]
        %v1201 = vunpack.c.l.b16 %v1193
        %v1202 = vunpack.c.l.b16 %v1194
        %v1203 = vunpack.c.l.b16 %v1195
        %v1204 = vunpack.c.l.b16 %v1196
        %v1205 = vpack.c.b16 %v1202, %v1201
        %v1206 = vpack.c.b16 %v1204, %v1203
        %1209 = vmatpush.bf16.msra.mxu0 0
        %1210 = vmatpush.bf16.msra.mxu0 0
        %1211 = vmatpush.bf16.msra.mxu0 0
        %1212 = vmatpush.bf16.msra.mxu0 0
        %1213 = vmatpush.bf16.msra.mxu0 0
        %1214 = vmatpush.bf16.msra.mxu0 0
        %1215 = vmatpush.bf16.msra.mxu0 %v1206
        %1216 = vmatpush.bf16.msra.mxu0 %v1205
        %1217 = vmatmul.bf16.gmra.mxu0 %v1177
        %v1218 = vpop.f32.mrf.mxu0
        %v1219 = vadd.f32 0.0, %v1218
        %v1220 = vpop.f32.mrf.mxu0
        %1221 = vdwg.mxu0
        %v1222 = vpack.c.bf16 %v1219, %v1219
        %v1223 = vld [vmem:[%s25] sm:$0xf]
        %v1224 = vld [vmem:[%s25 + $0x4] sm:$0xf]
        %v1225 = vld [vmem:[%s25 + $0x8] sm:$0xf]
        %v1226 = vld [vmem:[%s25 + $0xc] sm:$0xf]
        %v1227 = vld [vmem:[%s25 + $0x10] sm:$0xf]
        %v1228 = vld [vmem:[%s25 + $0x14] sm:$0xf]
        %v1235 = vunpack.c.l.b16 %v1223
        %v1236 = vunpack.c.l.b16 %v1224
        %v1237 = vunpack.c.l.b16 %v1225
        %v1238 = vunpack.c.l.b16 %v1226
        %v1239 = vunpack.c.l.b16 %v1227
        %v1240 = vunpack.c.l.b16 %v1228
        %v1241 = vpack.c.b16 %v1236, %v1235
        %v1242 = vpack.c.b16 %v1238, %v1237
        %v1243 = vpack.c.b16 %v1240, %v1239
        %v1248 = vsel %vm1097, %v1159, 0
        %1250 = vmatpush.bf16.msra.mxu0 0
        %1251 = vmatpush.bf16.msra.mxu0 0
        %1252 = vmatpush.bf16.msra.mxu0 0
        %1253 = vmatpush.bf16.msra.mxu0 0
        %1254 = vmatpush.bf16.msra.mxu0 0
        %1255 = vmatpush.bf16.msra.mxu0 %v1243
        %1256 = vmatpush.bf16.msra.mxu0 %v1242
        %1257 = vmatpush.bf16.msra.mxu0 %v1241
        %1258 = vmatmul.bf16.gmra.mxu0 %v1248
        %v1259 = vpop.f32.mrf.mxu0
        %v1260 = vadd.f32 0.0, %v1259
        %v1261 = vpop.f32.mrf.mxu0
        %v1262 = vadd.f32 0.0, %v1261
        %1263 = vdwg.mxu0
        %v1264 = vpack.c.bf16 %v1260, %v1260
        %v1265 = vpack.c.bf16 %v1262, %v1262
        %v1266 = vld [vmem:[%s27] sm:$0xf]
        %v1267 = vld [vmem:[%s27 + $0x4] sm:$0xf]
        %v1268 = vld [vmem:[%s27 + $0x8] sm:$0xf]
        %v1269 = vld [vmem:[%s27 + $0xc] sm:$0xf]
        %v1270 = vld [vmem:[%s27 + $0x10] sm:$0xf]
        %v1271 = vld [vmem:[%s27 + $0x14] sm:$0xf]
        %v1278 = vunpack.c.l.b16 %v1266
        %v1279 = vunpack.c.l.b16 %v1267
        %v1280 = vunpack.c.l.b16 %v1268
        %v1281 = vunpack.c.l.b16 %v1269
        %v1282 = vunpack.c.l.b16 %v1270
        %v1283 = vunpack.c.l.b16 %v1271
        %v1284 = vpack.c.b16 %v1279, %v1278
        %v1285 = vpack.c.b16 %v1281, %v1280
        %v1286 = vpack.c.b16 %v1283, %v1282
        %1290 = vmatpush.bf16.msra.mxu0 0
        %1291 = vmatpush.bf16.msra.mxu0 0
        %1292 = vmatpush.bf16.msra.mxu0 0
        %1293 = vmatpush.bf16.msra.mxu0 0
        %1294 = vmatpush.bf16.msra.mxu0 0
        %1295 = vmatpush.bf16.msra.mxu0 %v1286
        %1296 = vmatpush.bf16.msra.mxu0 %v1285
        %1297 = vmatpush.bf16.msra.mxu0 %v1284
        %1298 = vmatmul.bf16.gmra.mxu0 %v1248
        %v1299 = vpop.f32.mrf.mxu0
        %v1300 = vadd.f32 0.0, %v1299
        %v1301 = vpop.f32.mrf.mxu0
        %v1302 = vadd.f32 0.0, %v1301
        %1303 = vdwg.mxu0
        %v1304 = vpack.c.bf16 %v1300, %v1300
        %v1305 = vpack.c.bf16 %v1302, %v1302
        %v1306 = vld [vmem:[%s1038] sm:$0xff]
        %v1307 = vld [vmem:[%s1041] sm:$0x1]
        %1309 = vset.pattern.permute.xlu0 0
        %1310 = vperm.xlu0 %1309, %v1306
        %v1311 = vpop.permute.xlu0 %1310
        %v1314 = vperm.slane %v1307, 0
        %v1316 = vmul.f32 %v1311, %v1314
        %vm1317 = vcmp.gt.f32.partialorder %v1316, 0.0
        %v1318 = vld [vmem:[%s1046] sm:$0xff]
        %v1319 = vld [vmem:[%s1046 + $0x8] sm:$0xff]
        %v1320 = vld [vmem:[%s1049] sm:$0x1]
        %1322 = vset.pattern.permute.xlu0 0
        %1323 = vperm.xlu0 %1322, %v1318
        %v1324 = vpop.permute.xlu0 %1323
        %1327 = vset.pattern.permute.xlu0 0
        %1328 = vperm.xlu0 %1327, %v1319
        %v1329 = vpop.permute.xlu0 %1328
        %v1332 = vperm.slane %v1320, 0
        %v1334 = vmul.f32 %v1324, %v1332
        %v1335 = vmul.f32 %v1329, %v1332
        %vm1336 = vcmp.gt.f32.partialorder %v1334, 0.0
        %vm1337 = vcmp.gt.f32.partialorder %v1335, 0.0
        %v1340 = vunpack.c.l.b16 %v1264
        %v1341 = vunpack.c.l.b16 %v1265
        %v1342 = vpack.c.b16 %v1341, %v1340
        %vm1343 = vcmask 130048
        %v1345 = vsel %vm1343, %v1192, 0
        %v1348 = vsel %vm1343, %v1342, 0
        %1350 = vmatpush.bf16.xpose.msra.mxu0 0
        %1351 = vmatpush.bf16.xpose.msra.mxu0 0
        %1352 = vmatpush.bf16.xpose.msra.mxu0 0
        %1353 = vmatpush.bf16.xpose.msra.mxu0 0
        %1354 = vmatpush.bf16.xpose.msra.mxu0 0
        %1355 = vmatpush.bf16.xpose.msra.mxu0 0
        %1356 = vmatpush.bf16.xpose.msra.mxu0 0
        %1357 = vmatpush.bf16.xpose.msra.mxu0 %v1348
        %1358 = vmatmul.bf16.gmra.mxu0 %v1345
        %v1359 = vpop.f32.mrf.mxu0
        %v1360 = vadd.f32 0.0, %v1359
        %v1361 = vpop.f32.mrf.mxu0
        %1362 = vdwg.mxu0
        %v1363 = vmul.f32 %v1360, 0.25
        %v1364 = vsel %vm1317, %v1363, -3.4028235e+38
        %v1365 = vsel %vm1343, %v1364, -inf
        %1366 = vmax.xlane.f32.xlu0 %v1365
        %v1367 = vpop.xlane.xlu0 %1366
        %v1368 = vsub.f32 %v1364, %v1367
        %v1369 = vmul.f32 %v1368, 1.442695
        %v1370 = vpow.pop %v1369
        %v1371 = vsel %vm1343, %v1370, 0.0
        %1372 = vadd.xlane.f32.xlu0 %v1371
        %v1373 = vpop.xlane.xlu0 %1372
        %v1374 = vrcp.pop %v1373
        %v1375 = vmul.f32 %v1370, %v1374
        %1376 = vmatpush.bf16.xpose.msra.mxu0 0
        %1377 = vmatpush.bf16.xpose.msra.mxu0 0
        %1378 = vmatpush.bf16.xpose.msra.mxu0 0
        %1379 = vmatpush.bf16.xpose.msra.mxu0 0
        %1380 = vmatpush.bf16.xpose.msra.mxu0 0
        %1381 = vmatpush.bf16.xpose.msra.mxu0 0
        %1382 = vmatpush.bf16.xpose.msra.mxu0 0
        %1383 = vmatpush.bf16.xpose.msra.mxu0 %v1345
        %1384 = vmatmul.bf16.gmra.mxu0 %v1348
        %v1385 = vpop.f32.mrf.mxu0
        %v1386 = vadd.f32 0.0, %v1385
        %v1387 = vpop.f32.mrf.mxu0
        %v1388 = vadd.f32 0.0, %v1387
        %1389 = vdwg.mxu0
        %v1390 = vmul.f32 %v1386, 0.25
        %v1391 = vmul.f32 %v1388, 0.25
        %v1392 = vsel %vm1336, %v1390, -3.4028235e+38
        %v1393 = vsel %vm1337, %v1391, -3.4028235e+38
        %vm1394 = vcmask 64512
        %v1395 = vsel %vm1394, %v1392, -inf
        %1396 = vmax.xlane.f32.xlu0 %v1395
        %v1397 = vpop.xlane.xlu0 %1396
        %v1398 = vsel %vm1394, %v1393, -inf
        %1399 = vmax.xlane.f32.xlu0 %v1398
        %v1400 = vpop.xlane.xlu0 %1399
        %v1401 = vsub.f32 %v1392, %v1397
        %v1402 = vsub.f32 %v1393, %v1400
        %v1403 = vmul.f32 %v1401, 1.442695
        %v1404 = vpow.pop %v1403
        %v1405 = vmul.f32 %v1402, 1.442695
        %v1406 = vpow.pop %v1405
        %v1407 = vsel %vm1394, %v1404, 0.0
        %1408 = vadd.xlane.f32.xlu0 %v1407
        %v1409 = vpop.xlane.xlu0 %1408
        %v1410 = vsel %vm1394, %v1406, 0.0
        %1411 = vadd.xlane.f32.xlu0 %v1410
        %v1412 = vpop.xlane.xlu0 %1411
        %v1413 = vrcp.pop %v1409
        %v1414 = vrcp.pop %v1412
        %v1415 = vmul.f32 %v1404, %v1413
        %v1416 = vmul.f32 %v1406, %v1414
        %v1417 = vpack.c.bf16 %v1375, %v1375
        %v1420 = vunpack.c.l.b16 %v1304
        %v1421 = vunpack.c.l.b16 %v1305
        %v1422 = vpack.c.b16 %v1421, %v1420
        %v1425 = vsel %vm1343, %v1417, 0
        %1427 = vmatpush.bf16.msra.mxu0 0
        %1428 = vmatpush.bf16.msra.mxu0 0
        %1429 = vmatpush.bf16.msra.mxu0 0
        %1430 = vmatpush.bf16.msra.mxu0 0
        %1431 = vmatpush.bf16.msra.mxu0 0
        %1432 = vmatpush.bf16.msra.mxu0 0
        %1433 = vmatpush.bf16.msra.mxu0 0
        %1434 = vmatpush.bf16.msra.mxu0 %v1422
        %1435 = vmatmul.bf16.gmra.mxu0 %v1425
        %v1436 = vpop.f32.mrf.mxu0
        %v1437 = vadd.f32 0.0, %v1436
        %v1438 = vpop.f32.mrf.mxu0
        %1439 = vdwg.mxu0
        %v1440 = vpack.c.bf16 %v1415, %v1415
        %v1441 = vpack.c.bf16 %v1416, %v1416
        %v1444 = vunpack.c.l.b16 %v1440
        %v1445 = vunpack.c.l.b16 %v1441
        %v1446 = vpack.c.b16 %v1445, %v1444
        %v1448 = vsel %vm1394, %v1446, 0
        %vm1450 = vcmask 1043456
        %v1452 = vsel %vm1450, %v1222, 0
        %1454 = vmatpush.bf16.msra.mxu0 0
        %1455 = vmatpush.bf16.msra.mxu0 0
        %1456 = vmatpush.bf16.msra.mxu0 0
        %1457 = vmatpush.bf16.msra.mxu0 0
        %1458 = vmatpush.bf16.msra.mxu0 0
        %1459 = vmatpush.bf16.msra.mxu0 0
        %1460 = vmatpush.bf16.msra.mxu0 0
        %1461 = vmatpush.bf16.msra.mxu0 %v1452
        %1462 = vmatmul.bf16.gmra.mxu0 %v1448
        %v1463 = vpop.f32.mrf.mxu0
        %v1464 = vadd.f32 0.0, %v1463
        %v1465 = vpop.f32.mrf.mxu0
        %v1466 = vadd.f32 0.0, %v1465
        %1467 = vdwg.mxu0
        %1468 = vst.msk [vmem:[#allocation2] sm:$0xff] %vm1343, %v1437
        %1469 = vst.msk [vmem:[#allocation3] sm:$0xff] %vm1343, %v1464
        %1470 = vst.msk [vmem:[#allocation3 + $0x8] sm:$0xff] %vm1343, %v1466
        %v1472 = vunpack.c.l.b16 %v1192
        %v1473 = vpack.c.b16 %v1472, %v1472
        %1474 = vrot.lane.b32.xlu0 %v1473, 112
        %v1475 = vpop.permute.xlu0 %1474
        %1476 = vrot.lane.b32.xlu0 %v1342, 112
        %v1477 = vpop.permute.xlu0 %1476
        %v1479 = vsel %vm1343, %v1475, 0
        %v1482 = vsel %vm1343, %v1477, 0
        %1484 = vmatpush.bf16.xpose.msra.mxu0 0
        %1485 = vmatpush.bf16.xpose.msra.mxu0 0
        %1486 = vmatpush.bf16.xpose.msra.mxu0 0
        %1487 = vmatpush.bf16.xpose.msra.mxu0 0
        %1488 = vmatpush.bf16.xpose.msra.mxu0 0
        %1489 = vmatpush.bf16.xpose.msra.mxu0 0
        %1490 = vmatpush.bf16.xpose.msra.mxu0 0
        %1491 = vmatpush.bf16.xpose.msra.mxu0 %v1482
        %1492 = vmatmul.bf16.gmra.mxu0 %v1479
        %v1493 = vpop.f32.mrf.mxu0
        %v1494 = vadd.f32 0.0, %v1493
        %v1495 = vpop.f32.mrf.mxu0
        %1496 = vdwg.mxu0
        %v1497 = vmul.f32 %v1494, 0.25
        %v1498 = vsel %vm1317, %v1497, -3.4028235e+38
        %v1499 = vsel %vm1343, %v1498, -inf
        %1500 = vmax.xlane.f32.xlu0 %v1499
        %v1501 = vpop.xlane.xlu0 %1500
        %v1502 = vsub.f32 %v1498, %v1501
        %v1503 = vmul.f32 %v1502, 1.442695
        %v1504 = vpow.pop %v1503
        %v1505 = vsel %vm1343, %v1504, 0.0
        %1506 = vadd.xlane.f32.xlu0 %v1505
        %v1507 = vpop.xlane.xlu0 %1506
        %v1508 = vrcp.pop %v1507
        %v1509 = vmul.f32 %v1504, %v1508
        %1510 = vmatpush.bf16.xpose.msra.mxu0 0
        %1511 = vmatpush.bf16.xpose.msra.mxu0 0
        %1512 = vmatpush.bf16.xpose.msra.mxu0 0
        %1513 = vmatpush.bf16.xpose.msra.mxu0 0
        %1514 = vmatpush.bf16.xpose.msra.mxu0 0
        %1515 = vmatpush.bf16.xpose.msra.mxu0 0
        %1516 = vmatpush.bf16.xpose.msra.mxu0 0
        %1517 = vmatpush.bf16.xpose.msra.mxu0 %v1479
        %1518 = vmatmul.bf16.gmra.mxu0 %v1482
        %v1519 = vpop.f32.mrf.mxu0
        %v1520 = vadd.f32 0.0, %v1519
        %v1521 = vpop.f32.mrf.mxu0
        %v1522 = vadd.f32 0.0, %v1521
        %1523 = vdwg.mxu0
        %v1524 = vmul.f32 %v1520, 0.25
        %v1525 = vmul.f32 %v1522, 0.25
        %v1526 = vsel %vm1336, %v1524, -3.4028235e+38
        %v1527 = vsel %vm1337, %v1525, -3.4028235e+38
        %v1528 = vsel %vm1394, %v1526, -inf
        %1529 = vmax.xlane.f32.xlu0 %v1528
        %v1530 = vpop.xlane.xlu0 %1529
        %v1531 = vsel %vm1394, %v1527, -inf
        %1532 = vmax.xlane.f32.xlu0 %v1531
        %v1533 = vpop.xlane.xlu0 %1532
        %v1534 = vsub.f32 %v1526, %v1530
        %v1535 = vsub.f32 %v1527, %v1533
        %v1536 = vmul.f32 %v1534, 1.442695
        %v1537 = vpow.pop %v1536
        %v1538 = vmul.f32 %v1535, 1.442695
        %v1539 = vpow.pop %v1538
        %v1540 = vsel %vm1394, %v1537, 0.0
        %1541 = vadd.xlane.f32.xlu0 %v1540
        %v1542 = vpop.xlane.xlu0 %1541
        %v1543 = vsel %vm1394, %v1539, 0.0
        %1544 = vadd.xlane.f32.xlu0 %v1543
        %v1545 = vpop.xlane.xlu0 %1544
        %v1546 = vrcp.pop %v1542
        %v1547 = vrcp.pop %v1545
        %v1548 = vmul.f32 %v1537, %v1546
        %v1549 = vmul.f32 %v1539, %v1547
        %v1550 = vpack.c.bf16 %v1509, %v1509
        %1551 = vrot.lane.b32.xlu0 %v1422, 112
        %v1552 = vpop.permute.xlu0 %1551
        %v1555 = vsel %vm1343, %v1550, 0
        %1557 = vmatpush.bf16.msra.mxu0 0
        %1558 = vmatpush.bf16.msra.mxu0 0
        %1559 = vmatpush.bf16.msra.mxu0 0
        %1560 = vmatpush.bf16.msra.mxu0 0
        %1561 = vmatpush.bf16.msra.mxu0 0
        %1562 = vmatpush.bf16.msra.mxu0 0
        %1563 = vmatpush.bf16.msra.mxu0 0
        %1564 = vmatpush.bf16.msra.mxu0 %v1552
        %1565 = vmatmul.bf16.gmra.mxu0 %v1555
        %v1566 = vpop.f32.mrf.mxu0
        %v1567 = vadd.f32 0.0, %v1566
        %v1568 = vpop.f32.mrf.mxu0
        %1569 = vdwg.mxu0
        %v1570 = vpack.c.bf16 %v1548, %v1548
        %v1571 = vpack.c.bf16 %v1549, %v1549
        %v1574 = vunpack.c.l.b16 %v1570
        %v1575 = vunpack.c.l.b16 %v1571
        %v1576 = vpack.c.b16 %v1575, %v1574
        %v1578 = vunpack.c.l.b16 %v1222
        %v1579 = vpack.c.b16 %v1578, %v1578
        %1580 = vrot.lane.b32.xlu0 %v1579, 112
        %v1581 = vpop.permute.xlu0 %1580
        %v1583 = vsel %vm1394, %v1576, 0
        %v1586 = vsel %vm1450, %v1581, 0
        %1588 = vmatpush.bf16.msra.mxu0 0
        %1589 = vmatpush.bf16.msra.mxu0 0
        %1590 = vmatpush.bf16.msra.mxu0 0
        %1591 = vmatpush.bf16.msra.mxu0 0
        %1592 = vmatpush.bf16.msra.mxu0 0
        %1593 = vmatpush.bf16.msra.mxu0 0
        %1594 = vmatpush.bf16.msra.mxu0 0
        %1595 = vmatpush.bf16.msra.mxu0 %v1586
        %1596 = vmatmul.bf16.gmra.mxu0 %v1583
        %v1597 = vpop.f32.mrf.mxu0
        %v1598 = vadd.f32 0.0, %v1597
        %v1599 = vpop.f32.mrf.mxu0
        %v1600 = vadd.f32 0.0, %v1599
        %1601 = vdwg.mxu0
        %1603 = vrot.lane.b32.xlu0 %v1567, 16
        %v1604 = vpop.permute.xlu0 %1603
        %vm1606 = vcmask 261248
        %1607 = vst.msk [vmem:[#allocation2] sm:$0xff] %vm1606, %v1604
        %1610 = vrot.lane.b32.xlu0 %v1598, 16
        %v1611 = vpop.permute.xlu0 %1610
        %1612 = vrot.lane.b32.xlu0 %v1600, 16
        %v1613 = vpop.permute.xlu0 %1612
        %1616 = vst.msk [vmem:[#allocation3] sm:$0xff] %vm1606, %v1611
        %1617 = vst.msk [vmem:[#allocation3 + $0x8] sm:$0xff] %vm1606, %v1613
        %v1618 = vld [vmem:[#allocation2] sm:$0xff]
        %v1619 = vpack.c.bf16 %v1618, %v1618
        %v1620 = vld [vmem:[%s29] sm:$0xf]
        %v1621 = vld [vmem:[%s29 + $0x4] sm:$0xf]
        %v1622 = vld [vmem:[%s29 + $0x8] sm:$0xf]
        %v1623 = vld [vmem:[%s29 + $0xc] sm:$0xf]
        %v1628 = vunpack.c.l.b16 %v1620
        %v1629 = vunpack.c.l.b16 %v1621
        %v1630 = vunpack.c.l.b16 %v1622
        %v1631 = vunpack.c.l.b16 %v1623
        %v1632 = vpack.c.b16 %v1629, %v1628
        %v1633 = vpack.c.b16 %v1631, %v1630
        %v1637 = vsel %vm1056, %v1619, 0
        %1639 = vmatpush.bf16.msra.mxu0 0
        %1640 = vmatpush.bf16.msra.mxu0 0
        %1641 = vmatpush.bf16.msra.mxu0 0
        %1642 = vmatpush.bf16.msra.mxu0 0
        %1643 = vmatpush.bf16.msra.mxu0 0
        %1644 = vmatpush.bf16.msra.mxu0 0
        %1645 = vmatpush.bf16.msra.mxu0 %v1633
        %1646 = vmatpush.bf16.msra.mxu0 %v1632
        %1647 = vmatmul.bf16.gmra.mxu0 %v1637
        %v1648 = vpop.f32.mrf.mxu0
        %v1649 = vadd.f32 0.0, %v1648
        %v1650 = vpop.f32.mrf.mxu0
        %1651 = vdwg.mxu0
        %v1652 = vld [vmem:[#allocation3] sm:$0xff]
        %v1653 = vld [vmem:[#allocation3 + $0x8] sm:$0xff]
        %v1654 = vpack.c.bf16 %v1653, %v1652
        %v1655 = vld [vmem:[%s33] sm:$0xf]
        %v1656 = vld [vmem:[%s33 + $0x4] sm:$0xf]
        %v1657 = vld [vmem:[%s33 + $0x8] sm:$0xf]
        %v1658 = vld [vmem:[%s33 + $0xc] sm:$0xf]
        %v1663 = vunpack.c.l.b16 %v1655
        %v1664 = vunpack.c.l.b16 %v1656
        %v1665 = vunpack.c.l.b16 %v1657
        %v1666 = vunpack.c.l.b16 %v1658
        %v1667 = vpack.c.b16 %v1664, %v1663
        %v1668 = vpack.c.b16 %v1666, %v1665
        %v1672 = vsel %vm1056, %v1654, 0
        %1674 = vmatpush.bf16.msra.mxu0 0
        %1675 = vmatpush.bf16.msra.mxu0 0
        %1676 = vmatpush.bf16.msra.mxu0 0
        %1677 = vmatpush.bf16.msra.mxu0 0
        %1678 = vmatpush.bf16.msra.mxu0 0
        %1679 = vmatpush.bf16.msra.mxu0 0
        %1680 = vmatpush.bf16.msra.mxu0 %v1668
        %1681 = vmatpush.bf16.msra.mxu0 %v1667
        %1682 = vmatmul.bf16.gmra.mxu0 %v1672
        %v1683 = vpop.f32.mrf.mxu0
        %v1684 = vadd.f32 0.0, %v1683
        %v1685 = vpop.f32.mrf.mxu0
        %v1686 = vadd.f32 0.0, %v1685
        %1687 = vdwg.mxu0
        %v1688 = vadd.f32 %v1051, %v1649
        %v1689 = vld [vmem:[%s31] sm:$0x1]
        %v1691 = vperm.slane %v1689, 0
        %v1693 = vadd.f32 %v1688, %v1691
        %v1694 = vadd.f32 %v1052, %v1684
        %v1695 = vadd.f32 %v1053, %v1686
        %v1696 = vld [vmem:[%s35] sm:$0x1]
        %v1698 = vperm.slane %v1696, 0
        %v1700 = vadd.f32 %v1694, %v1698
        %v1701 = vadd.f32 %v1695, %v1698
        %v1702 = vld [vmem:[%s37] sm:$0x1]
        %v1703 = vld [vmem:[%s39] sm:$0x1]
        %v1704 = vsel %vm1056, %v1693, 0.0
        %1705 = vadd.xlane.f32.xlu0 %v1704
        %v1706 = vpop.xlane.xlu0 %1705
        %v1707 = vmul.f32 %v1706, %v1066
        %v1708 = vsub.f32 %v1693, %v1707
        %v1709 = vmul.f32 %v1708, %v1708
        %v1710 = vsel %vm1056, %v1709, 0.0
        %1711 = vadd.xlane.f32.xlu0 %v1710
        %v1712 = vpop.xlane.xlu0 %1711
        %v1713 = vmul.f32 %v1712, %v1066
        %v1714 = vadd.f32 %v1713, 1e-05
        %v1715 = vrsqrt.pop %v1714
        %v1716 = vmul.f32 %v1715, %v1714
        %v1717 = vmul.f32 %v1716, %v1715
        %v1718 = vmul.f32 0.5, %v1717
        %v1719 = vsub.f32 1.5, %v1718
        %v1720 = vmul.f32 %v1715, %v1719
        %vm1721 = vweird.f32 %v1714
        %vm1722 = vweird.f32 %v1715
        %vm1723 = vmor %vm1721, %vm1722
        %v1724 = vsel %vm1723, %v1715, %v1720
        %v1725 = vmul.f32 %v1708, %v1724
        %v1727 = vperm.slane %v1702, 0
        %v1729 = vmul.f32 %v1725, %v1727
        %v1731 = vperm.slane %v1703, 0
        %v1733 = vadd.f32 %v1729, %v1731
        %v1734 = vpack.c.bf16 %v1733, %v1733
        %v1735 = vld [vmem:[%s41] sm:$0xf]
        %v1736 = vld [vmem:[%s41 + $0x4] sm:$0xf]
        %v1737 = vld [vmem:[%s41 + $0x8] sm:$0xf]
        %v1738 = vld [vmem:[%s41 + $0xc] sm:$0xf]
        %v1739 = vld [vmem:[%s43] sm:$0x1]
        %v1741 = vperm.slane %v1739, 0
        %v1747 = vunpack.c.l.b16 %v1735
        %v1748 = vunpack.c.l.b16 %v1736
        %v1749 = vunpack.c.l.b16 %v1737
        %v1750 = vunpack.c.l.b16 %v1738
        %v1751 = vpack.c.b16 %v1748, %v1747
        %v1752 = vpack.c.b16 %v1750, %v1749
        %v1756 = vsel %vm1056, %v1734, 0
        %1758 = vmatpush.bf16.msra.mxu0 0
        %1759 = vmatpush.bf16.msra.mxu0 0
        %1760 = vmatpush.bf16.msra.mxu0 0
        %1761 = vmatpush.bf16.msra.mxu0 0
        %1762 = vmatpush.bf16.msra.mxu0 0
        %1763 = vmatpush.bf16.msra.mxu0 0
        %1764 = vmatpush.bf16.msra.mxu0 %v1752
        %1765 = vmatpush.bf16.msra.mxu0 %v1751
        %1766 = vmatmul.bf16.gmra.mxu0 %v1756
        %v1767 = vpop.f32.mrf.mxu0
        %v1768 = vadd.f32 %v1741, %v1767
        %v1769 = vpop.f32.mrf.mxu0
        %1770 = vdwg.mxu0
        %v1771 = vmul.f32 %v1768, 0.5
        %v1772 = vmul.f32 %v1768, 0.044715
        %v1773 = vmul.f32 %v1772, %v1768
        %v1774 = vmul.f32 %v1773, %v1768
        %v1775 = vadd.f32 %v1768, %v1774
        %v1776 = vmul.f32 %v1775, 0.7978846
        %v1777 = vtanh.pop %v1776
        %v1778 = vadd.f32 %v1777, 1.0
        %v1779 = vmul.f32 %v1771, %v1778
        %v1780 = vpack.c.bf16 %v1779, %v1779
        %v1781 = vld [vmem:[%s45] sm:$0xf]
        %v1782 = vld [vmem:[%s45 + $0x4] sm:$0xf]
        %v1783 = vld [vmem:[%s45 + $0x8] sm:$0xf]
        %v1784 = vld [vmem:[%s45 + $0xc] sm:$0xf]
        %v1785 = vld [vmem:[%s45 + $0x10] sm:$0xf]
        %v1786 = vld [vmem:[%s45 + $0x14] sm:$0xf]
        %v1787 = vld [vmem:[%s45 + $0x18] sm:$0xf]
        %v1788 = vld [vmem:[%s45 + $0x1c] sm:$0xf]
        %v1789 = vld [vmem:[%s45 + $0x20] sm:$0xf]
        %v1790 = vld [vmem:[%s45 + $0x24] sm:$0xf]
        %v1791 = vld [vmem:[%s45 + $0x28] sm:$0xf]
        %v1792 = vld [vmem:[%s45 + $0x2c] sm:$0xf]
        %v1793 = vld [vmem:[%s45 + $0x30] sm:$0xf]
        %v1794 = vld [vmem:[%s45 + $0x34] sm:$0xf]
        %v1795 = vld [vmem:[%s45 + $0x38] sm:$0xf]
        %v1796 = vld [vmem:[%s45 + $0x3c] sm:$0xf]
        %v1797 = vld [vmem:[%s47] sm:$0x1]
        %v1799 = vperm.slane %v1797, 0
        %v1817 = vunpack.c.l.b16 %v1781
        %v1818 = vunpack.c.l.b16 %v1782
        %v1819 = vunpack.c.l.b16 %v1783
        %v1820 = vunpack.c.l.b16 %v1784
        %v1821 = vunpack.c.l.b16 %v1785
        %v1822 = vunpack.c.l.b16 %v1786
        %v1823 = vunpack.c.l.b16 %v1787
        %v1824 = vunpack.c.l.b16 %v1788
        %v1825 = vunpack.c.l.b16 %v1789
        %v1826 = vunpack.c.l.b16 %v1790
        %v1827 = vunpack.c.l.b16 %v1791
        %v1828 = vunpack.c.l.b16 %v1792
        %v1829 = vunpack.c.l.b16 %v1793
        %v1830 = vunpack.c.l.b16 %v1794
        %v1831 = vunpack.c.l.b16 %v1795
        %v1832 = vunpack.c.l.b16 %v1796
        %v1833 = vpack.c.b16 %v1818, %v1817
        %v1834 = vpack.c.b16 %v1820, %v1819
        %v1835 = vpack.c.b16 %v1822, %v1821
        %v1836 = vpack.c.b16 %v1824, %v1823
        %v1837 = vpack.c.b16 %v1826, %v1825
        %v1838 = vpack.c.b16 %v1828, %v1827
        %v1839 = vpack.c.b16 %v1830, %v1829
        %v1840 = vpack.c.b16 %v1832, %v1831
        %1849 = vmatpush.bf16.msra.mxu0 %v1840
        %1850 = vmatpush.bf16.msra.mxu0 %v1839
        %1851 = vmatpush.bf16.msra.mxu0 %v1838
        %1852 = vmatpush.bf16.msra.mxu0 %v1837
        %1853 = vmatpush.bf16.msra.mxu0 %v1836
        %1854 = vmatpush.bf16.msra.mxu0 %v1835
        %1855 = vmatpush.bf16.msra.mxu0 %v1834
        %1856 = vmatpush.bf16.msra.mxu0 %v1833
        %1857 = vmatmul.bf16.gmra.mxu0 %v1780
        %v1858 = vpop.f32.mrf.mxu0
        %v1859 = vadd.f32 %v1799, %v1858
        %v1860 = vpop.f32.mrf.mxu0
        %1861 = vdwg.mxu0
        %v1862 = vadd.f32 %v1859, %v1693
        %v1863 = vld [vmem:[%s49] sm:$0x1]
        %v1864 = vld [vmem:[%s51] sm:$0x1]
        %v1865 = vsel %vm1097, %v1700, 0.0
        %1866 = vadd.xlane.f32.xlu0 %v1865
        %v1867 = vpop.xlane.xlu0 %1866
        %v1868 = vsel %vm1097, %v1701, 0.0
        %1869 = vadd.xlane.f32.xlu0 %v1868
        %v1870 = vpop.xlane.xlu0 %1869
        %v1871 = vmul.f32 %v1867, %v1110
        %v1872 = vmul.f32 %v1870, %v1110
        %v1873 = vsub.f32 %v1700, %v1871
        %v1874 = vsub.f32 %v1701, %v1872
        %v1875 = vmul.f32 %v1873, %v1873
        %v1876 = vmul.f32 %v1874, %v1874
        %v1877 = vsel %vm1097, %v1875, 0.0
        %1878 = vadd.xlane.f32.xlu0 %v1877
        %v1879 = vpop.xlane.xlu0 %1878
        %v1880 = vsel %vm1097, %v1876, 0.0
        %1881 = vadd.xlane.f32.xlu0 %v1880
        %v1882 = vpop.xlane.xlu0 %1881
        %v1883 = vmul.f32 %v1879, %v1110
        %v1884 = vmul.f32 %v1882, %v1110
        %v1885 = vadd.f32 %v1883, 1e-05
        %v1886 = vadd.f32 %v1884, 1e-05
        %v1887 = vrsqrt.pop %v1885
        %v1888 = vmul.f32 %v1887, %v1885
        %v1889 = vmul.f32 %v1888, %v1887
        %v1890 = vmul.f32 0.5, %v1889
        %v1891 = vsub.f32 1.5, %v1890
        %v1892 = vmul.f32 %v1887, %v1891
        %vm1893 = vweird.f32 %v1885
        %vm1894 = vweird.f32 %v1887
        %vm1895 = vmor %vm1893, %vm1894
        %v1896 = vsel %vm1895, %v1887, %v1892
        %v1897 = vrsqrt.pop %v1886
        %v1898 = vmul.f32 %v1897, %v1886
        %v1899 = vmul.f32 %v1898, %v1897
        %v1900 = vmul.f32 0.5, %v1899
        %v1901 = vsub.f32 1.5, %v1900
        %v1902 = vmul.f32 %v1897, %v1901
        %vm1903 = vweird.f32 %v1886
        %vm1904 = vweird.f32 %v1897
        %vm1905 = vmor %vm1903, %vm1904
        %v1906 = vsel %vm1905, %v1897, %v1902
        %v1907 = vmul.f32 %v1873, %v1896
        %v1908 = vmul.f32 %v1874, %v1906
        %v1910 = vperm.slane %v1863, 0
        %v1912 = vmul.f32 %v1907, %v1910
        %v1913 = vmul.f32 %v1908, %v1910
        %v1915 = vperm.slane %v1864, 0
        %v1917 = vadd.f32 %v1912, %v1915
        %v1918 = vadd.f32 %v1913, %v1915
        %v1919 = vpack.c.bf16 %v1918, %v1917
        %v1920 = vld [vmem:[%s53] sm:$0xff]
        %v1921 = vld [vmem:[%s53 + $0x8] sm:$0xff]
        %v1922 = vld [vmem:[%s53 + $0x10] sm:$0xff]
        %v1923 = vld [vmem:[%s53 + $0x18] sm:$0xff]
        %v1924 = vld [vmem:[%s53 + $0x20] sm:$0xff]
        %v1925 = vld [vmem:[%s53 + $0x28] sm:$0xff]
        %v1926 = vld [vmem:[%s55] sm:$0x3]
        %v1928 = vperm.slane %v1926, 0
        %v1929 = vperm.slane %v1926, 1
        %v1938 = vunpack.c.l.b16 %v1920
        %v1939 = vunpack.c.h.b16 %v1920
        %v1940 = vunpack.c.l.b16 %v1921
        %v1941 = vunpack.c.h.b16 %v1921
        %v1942 = vunpack.c.l.b16 %v1922
        %v1943 = vunpack.c.h.b16 %v1922
        %v1944 = vunpack.c.l.b16 %v1923
        %v1945 = vunpack.c.h.b16 %v1923
        %v1946 = vunpack.c.l.b16 %v1924
        %v1947 = vunpack.c.h.b16 %v1924
        %v1948 = vunpack.c.l.b16 %v1925
        %v1949 = vunpack.c.h.b16 %v1925
        %v1950 = vpack.c.b16 %v1940, %v1938
        %v1951 = vpack.c.b16 %v1941, %v1939
        %v1952 = vpack.c.b16 %v1944, %v1942
        %v1953 = vpack.c.b16 %v1945, %v1943
        %v1954 = vpack.c.b16 %v1948, %v1946
        %v1955 = vpack.c.b16 %v1949, %v1947
        %v1963 = vsel %vm1097, %v1919, 0
        %1965 = vmatpush.bf16.msra.mxu0 0
        %1966 = vmatpush.bf16.msra.mxu0 0
        %1967 = vmatpush.bf16.msra.mxu0 0
        %1968 = vmatpush.bf16.msra.mxu0 0
        %1969 = vmatpush.bf16.msra.mxu0 0
        %1970 = vmatpush.bf16.msra.mxu0 %v1954
        %1971 = vmatpush.bf16.msra.mxu0 %v1952
        %1972 = vmatpush.bf16.msra.mxu0 %v1950
        %1973 = vmatmul.bf16.gmra.mxu0 %v1963
        %v1974 = vpop.f32.mrf.mxu0
        %v1975 = vadd.f32 %v1928, %v1974
        %v1976 = vpop.f32.mrf.mxu0
        %v1977 = vadd.f32 %v1928, %v1976
        %1978 = vdwg.mxu0
        %1979 = vmatpush.bf16.msra.mxu0 0
        %1980 = vmatpush.bf16.msra.mxu0 0
        %1981 = vmatpush.bf16.msra.mxu0 0
        %1982 = vmatpush.bf16.msra.mxu0 0
        %1983 = vmatpush.bf16.msra.mxu0 0
        %1984 = vmatpush.bf16.msra.mxu0 %v1955
        %1985 = vmatpush.bf16.msra.mxu0 %v1953
        %1986 = vmatpush.bf16.msra.mxu0 %v1951
        %1987 = vmatmul.bf16.gmra.mxu0 %v1963
        %v1988 = vpop.f32.mrf.mxu0
        %v1989 = vadd.f32 %v1929, %v1988
        %v1990 = vpop.f32.mrf.mxu0
        %v1991 = vadd.f32 %v1929, %v1990
        %1992 = vdwg.mxu0
        %v1993 = vmul.f32 %v1975, 0.5
        %v1994 = vmul.f32 %v1989, 0.5
        %v1995 = vmul.f32 %v1977, 0.5
        %v1996 = vmul.f32 %v1991, 0.5
        %v1997 = vmul.f32 %v1975, 0.044715
        %v1998 = vmul.f32 %v1989, 0.044715
        %v1999 = vmul.f32 %v1977, 0.044715
        %v2000 = vmul.f32 %v1991, 0.044715
        %v2001 = vmul.f32 %v1997, %v1975
        %v2002 = vmul.f32 %v1998, %v1989
        %v2003 = vmul.f32 %v1999, %v1977
        %v2004 = vmul.f32 %v2000, %v1991
        %v2005 = vmul.f32 %v2001, %v1975
        %v2006 = vmul.f32 %v2002, %v1989
        %v2007 = vmul.f32 %v2003, %v1977
        %v2008 = vmul.f32 %v2004, %v1991
        %v2009 = vadd.f32 %v1975, %v2005
        %v2010 = vadd.f32 %v1989, %v2006
        %v2011 = vadd.f32 %v1977, %v2007
        %v2012 = vadd.f32 %v1991, %v2008
        %v2013 = vmul.f32 %v2009, 0.7978846
        %v2014 = vmul.f32 %v2010, 0.7978846
        %v2015 = vmul.f32 %v2011, 0.7978846
        %v2016 = vmul.f32 %v2012, 0.7978846
        %v2017 = vtanh.pop %v2013
        %v2018 = vtanh.pop %v2014
        %v2019 = vtanh.pop %v2015
        %v2020 = vtanh.pop %v2016
        %v2021 = vadd.f32 %v2017, 1.0
        %v2022 = vadd.f32 %v2018, 1.0
        %v2023 = vadd.f32 %v2019, 1.0
        %v2024 = vadd.f32 %v2020, 1.0
        %v2025 = vmul.f32 %v1993, %v2021
        %v2026 = vmul.f32 %v1994, %v2022
        %v2027 = vmul.f32 %v1995, %v2023
        %v2028 = vmul.f32 %v1996, %v2024
        %v2029 = vpack.c.bf16 %v2027, %v2025
        %v2030 = vpack.c.bf16 %v2028, %v2026
        %v2031 = vld [vmem:[%s57] sm:$0xf]
        %v2032 = vld [vmem:[%s57 + $0x4] sm:$0xf]
        %v2033 = vld [vmem:[%s57 + $0x8] sm:$0xf]
        %v2034 = vld [vmem:[%s57 + $0xc] sm:$0xf]
        %v2035 = vld [vmem:[%s57 + $0x10] sm:$0xf]
        %v2036 = vld [vmem:[%s57 + $0x14] sm:$0xf]
        %v2037 = vld [vmem:[%s57 + $0x18] sm:$0xf]
        %v2038 = vld [vmem:[%s57 + $0x1c] sm:$0xf]
        %v2039 = vld [vmem:[%s57 + $0x20] sm:$0xf]
        %v2040 = vld [vmem:[%s57 + $0x24] sm:$0xf]
        %v2041 = vld [vmem:[%s57 + $0x28] sm:$0xf]
        %v2042 = vld [vmem:[%s57 + $0x2c] sm:$0xf]
        %v2043 = vld [vmem:[%s57 + $0x30] sm:$0xf]
        %v2044 = vld [vmem:[%s57 + $0x34] sm:$0xf]
        %v2045 = vld [vmem:[%s57 + $0x38] sm:$0xf]
        %v2046 = vld [vmem:[%s57 + $0x3c] sm:$0xf]
        %v2047 = vld [vmem:[%s57 + $0x40] sm:$0xf]
        %v2048 = vld [vmem:[%s57 + $0x44] sm:$0xf]
        %v2049 = vld [vmem:[%s57 + $0x48] sm:$0xf]
        %v2050 = vld [vmem:[%s57 + $0x4c] sm:$0xf]
        %v2051 = vld [vmem:[%s57 + $0x50] sm:$0xf]
        %v2052 = vld [vmem:[%s57 + $0x54] sm:$0xf]
        %v2053 = vld [vmem:[%s57 + $0x58] sm:$0xf]
        %v2054 = vld [vmem:[%s57 + $0x5c] sm:$0xf]
        %v2055 = vld [vmem:[%s59] sm:$0x1]
        %v2057 = vperm.slane %v2055, 0
        %v2083 = vunpack.c.l.b16 %v2031
        %v2084 = vunpack.c.l.b16 %v2032
        %v2085 = vunpack.c.l.b16 %v2033
        %v2086 = vunpack.c.l.b16 %v2034
        %v2087 = vunpack.c.l.b16 %v2035
        %v2088 = vunpack.c.l.b16 %v2036
        %v2089 = vunpack.c.l.b16 %v2037
        %v2090 = vunpack.c.l.b16 %v2038
        %v2091 = vunpack.c.l.b16 %v2039
        %v2092 = vunpack.c.l.b16 %v2040
        %v2093 = vunpack.c.l.b16 %v2041
        %v2094 = vunpack.c.l.b16 %v2042
        %v2095 = vunpack.c.l.b16 %v2043
        %v2096 = vunpack.c.l.b16 %v2044
        %v2097 = vunpack.c.l.b16 %v2045
        %v2098 = vunpack.c.l.b16 %v2046
        %v2099 = vunpack.c.l.b16 %v2047
        %v2100 = vunpack.c.l.b16 %v2048
        %v2101 = vunpack.c.l.b16 %v2049
        %v2102 = vunpack.c.l.b16 %v2050
        %v2103 = vunpack.c.l.b16 %v2051
        %v2104 = vunpack.c.l.b16 %v2052
        %v2105 = vunpack.c.l.b16 %v2053
        %v2106 = vunpack.c.l.b16 %v2054
        %v2107 = vpack.c.b16 %v2084, %v2083
        %v2108 = vpack.c.b16 %v2086, %v2085
        %v2109 = vpack.c.b16 %v2088, %v2087
        %v2110 = vpack.c.b16 %v2090, %v2089
        %v2111 = vpack.c.b16 %v2092, %v2091
        %v2112 = vpack.c.b16 %v2094, %v2093
        %v2113 = vpack.c.b16 %v2096, %v2095
        %v2114 = vpack.c.b16 %v2098, %v2097
        %v2115 = vpack.c.b16 %v2100, %v2099
        %v2116 = vpack.c.b16 %v2102, %v2101
        %v2117 = vpack.c.b16 %v2104, %v2103
        %v2118 = vpack.c.b16 %v2106, %v2105
        %vm2131 = vcmask 523264
        %v2133 = vsel %vm2131, %v2030, 0
        %2135 = vmatpush.bf16.msra.mxu0 %v2114
        %2136 = vmatpush.bf16.msra.mxu0 %v2113
        %2137 = vmatpush.bf16.msra.mxu0 %v2112
        %2138 = vmatpush.bf16.msra.mxu0 %v2111
        %2139 = vmatpush.bf16.msra.mxu0 %v2110
        %2140 = vmatpush.bf16.msra.mxu0 %v2109
        %2141 = vmatpush.bf16.msra.mxu0 %v2108
        %2142 = vmatpush.bf16.msra.mxu0 %v2107
        %2143 = vmatmul.bf16.gmra.mxu0 %v2029
        %v2144 = vpop.f32.mrf.mxu0
        %v2145 = vadd.f32 %v2057, %v2144
        %v2146 = vpop.f32.mrf.mxu0
        %v2147 = vadd.f32 %v2057, %v2146
        %2148 = vdwg.mxu0
        %2149 = vmatpush.bf16.msra.mxu0 0
        %2150 = vmatpush.bf16.msra.mxu0 0
        %2151 = vmatpush.bf16.msra.mxu0 0
        %2152 = vmatpush.bf16.msra.mxu0 0
        %2153 = vmatpush.bf16.msra.mxu0 %v2118
        %2154 = vmatpush.bf16.msra.mxu0 %v2117
        %2155 = vmatpush.bf16.msra.mxu0 %v2116
        %2156 = vmatpush.bf16.msra.mxu0 %v2115
        %2157 = vmatmul.bf16.gmra.mxu0 %v2133
        %v2158 = vpop.f32.mrf.mxu0
        %v2159 = vadd.f32 %v2145, %v2158
        %v2160 = vpop.f32.mrf.mxu0
        %v2161 = vadd.f32 %v2147, %v2160
        %2162 = vdwg.mxu0
        %v2163 = vadd.f32 %v2159, %v1700
        %v2164 = vadd.f32 %v2161, %v1701
        %2165 = vst.msk [vmem:[%s1018] sm:$0xff] %vm1056, %v1862
        %2166 = vst.msk [vmem:[%s1025] sm:$0xff] %vm1097, %v2163
        %2167 = vst.msk [vmem:[%s1025 + $0x8] sm:$0xff] %vm1097, %v2164
        %s2168 = sand.u32 %s749, 1
        %s2169 = scalar_lea.sflag [#allocation5], %s2168
        %s2170 = sand.u32 %s749, 1
        %s2171 = smul.addr %s2170, 8
        %s2172 = scalar_lea.vmem [#allocation4], %s2171
        %s2173 = sand.u32 %s775, 1
        %s2174 = scalar_lea.sflag [#allocation7], %s2173
        %s2175 = sand.u32 %s775, 1
        %s2176 = smul.addr %s2175, 16
        %s2177 = scalar_lea.vmem [#allocation6], %s2176
        // Predicated region
        $region141: #{tpu_custom_call.1} parent=139 // pred_check
          %p2178 = pneg %p759
        $region142: #{tpu_custom_call.1} parent=139 // pred_check_branch
          %2180 = sbr.rel (%p2178) target = $region144
        $region143: #{tpu_custom_call.1} parent=139 // pred_region
          %2182 = vsyncadd %s2169, 0
          %s2183 = smul.addr %s81, 8
          %s2184 = scalar_lea.hbm %s61, %s2183
          %s2186 = sshll.u32 %s2172, 4
          %s2187 = int_to_ptr.vmem [resolvable:$true] %s2186
          %s2188 = sshll.u32 %s2184, 4
          %s2189 = int_to_ptr.hbm [resolvable:$true] %s2188
          %2191 = dma.vmem_to_hbm [thread:$0]  %s2187, 128, %s2189, %s2169
        $region144: #{tpu_custom_call.1} parent=139 // pred_fallthru
          _
        // Predicated region
        $region145: #{tpu_custom_call.1} parent=139 // pred_check
          %p2192 = pneg %p785
        $region146: #{tpu_custom_call.1} parent=139 // pred_check_branch
          %2194 = sbr.rel (%p2192) target = $region148
        $region147: #{tpu_custom_call.1} parent=139 // pred_region
          %2196 = vsyncadd %s2174, 0
          %s2197 = smul.addr %s81, 2
          %s2198 = smul.addr %s2197, 8
          %s2199 = scalar_lea.hbm %s63, %s2198
          %s2200 = sshll.u32 %s2177, 4
          %s2201 = int_to_ptr.vmem [resolvable:$true] %s2200
          %s2202 = sshll.u32 %s2199, 4
          %s2203 = int_to_ptr.hbm [resolvable:$true] %s2202
          %2208 = dma.vmem_to_hbm [thread:$0]  %s2201, 256, %s2203, %s2174, 128, 128, 8
        $region148: #{tpu_custom_call.1} parent=139 // pred_fallthru
          _
      $region140: #{tpu_custom_call.1} parent=5 // pred_fallthru
        _
      %p2209 = scmp.le.s32.totalorder 2, %s76
      // Predicated region
      $region149: #{tpu_custom_call.1} parent=5 // pred_check
        %p2210 = pneg %p2209
      $region150: #{tpu_custom_call.1} parent=5 // pred_check_branch
        %2212 = sbr.rel (%p2210) target = $region152
      $region151: #{tpu_custom_call.1} parent=5 // pred_region
        %s2213 = ssub.s32 %s76, 2
        // Predicated region
        $region153: #{tpu_custom_call.1} parent=151 // pred_check
          %p2214 = pneg %p765
        $region154: #{tpu_custom_call.1} parent=151 // pred_check_branch
          %2216 = sbr.rel (%p2214) target = $region156
        $region155: #{tpu_custom_call.1} parent=151 // pred_region
          %s2217 = sand.u32 %s750, 1
          %s2218 = scalar_lea.sflag [#allocation5], %s2217
          %s2219 = sand.u32 %s750, 1
          %s2220 = smul.addr %s2219, 8
          %s2221 = scalar_lea.vmem [#allocation4], %s2220
          %2223 = dma.done %s2218, 128
        $region156: #{tpu_custom_call.1} parent=151 // pred_fallthru
          _
        // Predicated region
        $region157: #{tpu_custom_call.1} parent=151 // pred_check
          %p2224 = pneg %p791
        $region158: #{tpu_custom_call.1} parent=151 // pred_check_branch
          %2226 = sbr.rel (%p2224) target = $region160
        $region159: #{tpu_custom_call.1} parent=151 // pred_region
          %s2227 = sand.u32 %s776, 1
          %s2228 = scalar_lea.sflag [#allocation7], %s2227
          %s2229 = sand.u32 %s776, 1
          %s2230 = smul.addr %s2229, 16
          %s2231 = scalar_lea.vmem [#allocation6], %s2230
          %2233 = dma.done %s2228, 256
        $region160: #{tpu_custom_call.1} parent=151 // pred_fallthru
          _
      $region152: #{tpu_custom_call.1} parent=5 // pred_fallthru
        _
    $region6: #{tpu_custom_call.1} parent=1 // loop_footer
      %s80 = sadd.s32 1, %s76
    $region7: #{tpu_custom_call.1} parent=1 // loop_footer_branch
      %75 = sbr.rel target = $region3
    $region8: #{tpu_custom_call.1} parent=1 // loop_exit
      _
    %2234 = vsyncpa [#allocation5], 1
    %s2235 = scalar_lea.sflag [#allocation5], 1
    %2236 = vsyncpa %s2235, 1
    %2237 = vsyncpa [#allocation7], 1
    %s2238 = scalar_lea.sflag [#allocation7], 1
    %2239 = vsyncpa %s2238, 1

</llo_original>
